<compile_context>
chip_gen: v7x
topology: tpu7x:2x2x1
jax: 0.10.0
libtpu: 0.0.40
codegen_flags: <defaults>
</compile_context>

<pallas_src>
import jax
import jax.numpy as jnp
from jax import lax
from jax.experimental import pallas as pl
from jax.experimental.pallas import tpu as pltpu

EPS = 1e-5
C_IN = 256   # content/style channels
C_MID = 128  # hidden channels of self.net
C_CMP = 32   # compressed channels
LANE = 128


def _vmem_capacity_bytes():
    try:
        return int(pltpu.get_tpu_info().vmem_capacity_bytes)
    except Exception:
        return 64 << 20   # conservative (v7x-sized) fallback


def _plan(hw_pad):
    """Pick the spatial tile + slab-caching policy from the per-core VMEM budget."""
    vmem_cap = _vmem_capacity_bytes()
    # Leave headroom for double buffers / compiler internal scratch
    # (v7x: 64 MiB physical -> ~48 MiB budget; v5e/v6e: 128 MiB -> ~112 MiB).
    budget = max(vmem_cap - (16 << 20), 24 << 20)

    tile = LANE
    for cand in (2048, 1024, 512, 256, 128):
        # content/style/out tiles are double-buffered f32 blocks.
        if hw_pad % cand == 0 and 6 * C_IN * cand * 4 <= budget // 3:
            tile = cand
            break

    pipe = 6 * C_IN * tile * 4 + (2 << 20)        # pipeline buffers + weights + slack
    content_slab = C_IN * hw_pad * 4              # f32 (exact residual add)
    style_slab = C_IN * hw_pad * 2                # bf16 (matmul operand anyway)
    cache_content = pipe + content_slab + style_slab <= budget
    cache_style = cache_content or (pipe + style_slab <= budget)

    used = pipe
    used += content_slab if cache_content else 0
    used += style_slab if cache_style else 0
    vmem_limit = int(min(max(used + (4 << 20), 32 << 20), vmem_cap - (8 << 20)))
    return tile, cache_content, cache_style, vmem_limit


def utm_forward(content_nchw, style_nchw, params):
    """content/style: (B, 256, H, W) float32 (NCHW, as in the PyTorch module)."""
    B, C, H, W = content_nchw.shape
    assert C == C_IN
    HW = H * W
    assert HW >= 2, "unbiased variance needs at least 2 spatial positions"

    # NCHW -> (B, C, HW): pure reshape.  Pad HW up to a lane multiple so the
    # kernel's loads/stores are lane-dense; padded columns are masked out of the
    # covariance and sliced off the output.
    hw_pad = ((HW + LANE - 1) // LANE) * LANE
    content = content_nchw.reshape(B, C, HW)
    style = style_nchw.reshape(B, C, HW)
    if hw_pad != HW:
        pad_cfg = ((0, 0), (0, 0), (0, hw_pad - HW))
        content = jnp.pad(content, pad_cfg)
        style = jnp.pad(style, pad_cfg)

    w1, b1, w2, b2, wu, bu = params
    w1_b = w1.astype(jnp.bfloat16)                # bf16 MXU operands, f32 acc
    w2_b = w2.astype(jnp.bfloat16)
    b2_row = b2.reshape(1, C_CMP)                 # row layout for the bias fold

    tile, cache_content, cache_style, vmem_limit = _plan(hw_pad)
    nt = hw_pad // tile
    t_last = nt - 1
    need_mask = hw_pad != HW
    inv_hw = 1.0 / HW
    inv_hwm1 = 1.0 / (HW - 1)
    scale = float(C_CMP) ** -0.5

    def kernel(content_ref, style_ref, w1_ref, b1_ref, w2_ref, b2_ref, b2r_ref,
               wu_ref, bu_ref, out_ref, *scratch):
        csum, cssq, ssum, cov, w2f, bias = scratch[:6]
        idx = 6
        ccache = scache = None
        if cache_content:
            ccache = scratch[idx]; idx += 1
        if cache_style:
            scache = scratch[idx]; idx += 1

        phase = pl.program_id(1)
        t = pl.program_id(2)
        off = pl.multiple_of(t * tile, tile)

        # ----- phase 0: streaming per-channel stats (+ VMEM slab caching) -----
        @pl.when(phase == 0)
        def _stats():
            @pl.when(t == 0)
            def _():
                csum[...] = jnp.zeros_like(csum)
                cssq[...] = jnp.zeros_like(cssq)
                ssum[...] = jnp.zeros_like(ssum)
            c = content_ref[0]                                   # (256, tile) f32
            s = style_ref[0]                                     # (256, tile) f32
            csum[...] += jnp.sum(c, axis=1, keepdims=True)       # zero pad is inert
            cssq[...] += jnp.sum(c * c, axis=1, keepdims=True)
            ssum[...] += jnp.sum(s, axis=1, keepdims=True)
            if cache_content:
                ccache[:, pl.ds(off, tile)] = c
            if cache_style:
                scache[:, pl.ds(off, tile)] = s.astype(jnp.bfloat16)

        # ----- phase 1: style branch + (32,32) covariance accumulation --------
        @pl.when(phase == 1)
        def _cov():
            @pl.when(t == 0)
            def _():
                # Finalize stats in place: csum -> c_mean, cssq -> c_inv_std,
                # ssum -> s_mean.  NOTE: one-pass E[x^2]-mean^2 variance (f32
                # acc); can lose precision vs the reference's two-pass formula
                # for large-mean activations.
                c_mean = csum[...] * inv_hw
                var = (cssq[...] - float(HW) * c_mean * c_mean) * inv_hwm1
                csum[...] = c_mean
                cssq[...] = lax.rsqrt(var + EPS)
                ssum[...] = ssum[...] * inv_hw
                cov[...] = jnp.zeros_like(cov)
            if cache_style:
                s = scache[:, pl.ds(off, tile)].astype(jnp.float32)
            else:
                s = style_ref[0]
            s_nor = (s - ssum[...]).astype(jnp.bfloat16)         # nor_mean(style)
            h = jnp.maximum(
                jnp.dot(w1_ref[...], s_nor, preferred_element_type=jnp.float32)
                + b1_ref[...], 0.0)
            sF = (jnp.dot(w2_ref[...], h.astype(jnp.bfloat16),
                          preferred_element_type=jnp.float32)
                  + b2_ref[...]).astype(jnp.bfloat16)            # (32, tile)
            if need_mask:
                col = off + lax.broadcasted_iota(jnp.int32, (1, tile), 1)
                sF = jnp.where(col < HW, sF, jnp.zeros_like(sF))
            cov[...] += lax.dot_general(sF, sF, (((1,), (1,)), ((), ())),
                                        preferred_element_type=jnp.float32)

        # ----- phase 2: fold softmax(cov) + uncompress into net's 2nd matmul ---
        @pl.when(phase == 2)
        def _apply():
            @pl.when(t == 0)
            def _():
                sc = cov[...] * inv_hw                           # (32, 32)
                sc = sc - jnp.max(sc, axis=-1, keepdims=True)
                e = jnp.exp(sc)
                p = e * pl.reciprocal(jnp.sum(e, axis=-1, keepdims=True),
                                      approx=True)
                p = p * scale                                    # softmax * c^-0.5
                wp = jnp.dot(wu_ref[...], p,
                             preferred_element_type=jnp.float32)  # (256, 32)
                # up = (Wu P w2) @ h + (Wu P b2 + bu + s_mean):
                w2f[...] = jnp.dot(wp.astype(jnp.bfloat16), w2_ref[...],
                                   preferred_element_type=jnp.float32
                                   ).astype(jnp.bfloat16)         # (256, 128)
                bias[...] = (jnp.sum(wp * b2r_ref[...], axis=1, keepdims=True)
                             + bu_ref[...] + ssum[...])           # (256, 1)
            if cache_content:
                c = ccache[:, pl.ds(off, tile)]
            else:
                c = content_ref[0]                                # (256, tile)
            c_nor = ((c - csum[...]) * cssq[...]).astype(jnp.bfloat16)
            h = jnp.maximum(
                jnp.dot(w1_ref[...], c_nor, preferred_element_type=jnp.float32)
                + b1_ref[...], 0.0)
            up = jnp.dot(w2f[...], h.astype(jnp.bfloat16),
                         preferred_element_type=jnp.float32)      # (256, tile)
            out_ref[0] = up + bias[...] + c                       # single fused bias

    feat_block = (1, C_IN, tile)

    # Park inputs on already-resident tiles in phases where they are not needed
    # so no redundant DMA is issued; cached inputs are only read during phase 0.
    if cache_content:
        content_map = lambda b, p, t: (b, 0, jnp.where(p == 0, t, t_last))
    else:
        content_map = lambda b, p, t: (b, 0, jnp.where(p == 1, t_last, t))
    if cache_style:
        style_map = lambda b, p, t: (b, 0, jnp.where(p == 0, t, t_last))
    else:
        style_map = lambda b, p, t: (b, 0, jnp.where(p == 2, t_last, t))

    # Output tiles are only produced in phase 2; parking during phases 0/1 means
    # each output tile is written back to HBM exactly once.  NOTE: correctness
    # relies on Pallas writing an output block back only when its block index
    # changes — re-verify if this map or revisit semantics are ever touched.
    out_map = lambda b, p, t: (b, 0, jnp.where(p == 2, t, 0))

    const = lambda shape: pl.BlockSpec(shape, lambda b, p, t: (0, 0))

    scratch = [
        pltpu.VMEM((C_IN, 1), jnp.float32),        # c_sum   -> c_mean
        pltpu.VMEM((C_IN, 1), jnp.float32),        # c_sumsq -> c_inv_std
        pltpu.VMEM((C_IN, 1), jnp.float32),        # s_sum   -> s_mean
        pltpu.VMEM((C_CMP, C_CMP), jnp.float32),   # style covariance acc
        pltpu.VMEM((C_IN, C_MID), jnp.bfloat16),   # W2f = Wu P w2
        pltpu.VMEM((C_IN, 1), jnp.float32),        # fused bias = Wu P b2 + bu + smean
    ]
    if cache_content:
        scratch.append(pltpu.VMEM((C_IN, hw_pad), jnp.float32))   # content slab
    if cache_style:
        scratch.append(pltpu.VMEM((C_IN, hw_pad), jnp.bfloat16))  # style slab

    out = pl.pallas_call(
        kernel,
        out_shape=jax.ShapeDtypeStruct((B, C_IN, hw_pad), jnp.float32),
        grid_spec=pltpu.PrefetchScalarGridSpec(
            num_scalar_prefetch=0,
            grid=(B, 3, nt),
            in_specs=[
                pl.BlockSpec(feat_block, content_map),   # content (B,256,HWp)
                pl.BlockSpec(feat_block, style_map),     # style   (B,256,HWp)
                const((C_MID, C_IN)),                    # w1  (bf16, 128x256)
                const((C_MID, 1)),                       # b1
                const((C_CMP, C_MID)),                   # w2  (bf16, 32x128)
                const((C_CMP, 1)),                       # b2 (column)
                const((1, C_CMP)),                       # b2 (row, for bias fold)
                const((C_IN, C_CMP)),                    # wu  (f32, 256x32)
                const((C_IN, 1)),                        # bu
            ],
            out_specs=pl.BlockSpec(feat_block, out_map),
            scratch_shapes=scratch,
        ),
        compiler_params=pltpu.CompilerParams(
            dimension_semantics=("parallel", "arbitrary", "arbitrary"),
            vmem_limit_bytes=vmem_limit,
        ),
    )(content, style, w1_b, b1, w2_b, b2, b2_row, wu, bu)

    if hw_pad != HW:
        out = out[:, :, :HW]
    # TODO(synk): input_output_aliases={0: 0} (donate content into the output) is a
    # further small HBM-footprint win; omitted to keep the phased output parking
    # trivially safe.
    # TODO(synk): on v7x with B=1 only one TensorCore is used; splitting the HW-tile
    # axis across cores (per-core partial stats/cov combined via CMEM) is not wired up.
    # TODO(synk): the `init=True` branch (net -> uncompress -> + content, no style)
    # is a strict subset of this path and is not wired up here.
    return out.reshape(B, C_IN, H, W)


def _reference(content_nchw, style_nchw, params):
    """Pure-JAX f32 reference matching the PyTorch forward (init=False)."""
    w1, b1, w2, b2, wu, bu = params
    B, C, H, W = content_nchw.shape
    HW = H * W
    c = content_nchw.reshape(B, C, HW)
    s = style_nchw.reshape(B, C, HW)

    c_mean = jnp.mean(c, axis=2, keepdims=True)
    c_var = jnp.sum((c - c_mean) ** 2, axis=2, keepdims=True) / (HW - 1)
    cF_nor = (c - c_mean) / jnp.sqrt(c_var + EPS)
    s_mean = jnp.mean(s, axis=2, keepdims=True)
    sF_nor = s - s_mean

    def net(x):
        h = jnp.maximum(jnp.einsum('oc,bcn->bon', w1, x) + b1, 0.0)
        return jnp.einsum('oc,bcn->bon', w2, h) + b2

    cF = net(cF_nor)                                   # (B, 32, HW)
    sF = net(sF_nor)                                   # (B, 32, HW)
    s_cov = jnp.einsum('bcn,bdn->bcd', sF, sF) / HW    # (B, 32, 32)
    s_cov = jax.nn.softmax(s_cov, axis=-1) * (float(C_CMP) ** -0.5)
    gF = jnp.einsum('bcd,bdn->bcn', s_cov, cF)         # (B, 32, HW)
    up = jnp.einsum('oc,bcn->bon', wu, gF) + bu        # (B, 256, HW)
    out = up + s_mean + c
    return out.reshape(B, C, H, W)


def init_params(key):
    """1x1-conv weights stored as (Cout, Cin) matrices (NCHW column layout)."""
    ks = jax.random.split(key, 6)

    def u(k, shape, fan_in):
        bound = 1.0 / jnp.sqrt(float(fan_in))
        return jax.random.uniform(k, shape, jnp.float32, -bound, bound)

    w1 = u(ks[0], (C_MID, C_IN), C_IN)
    b1 = u(ks[1], (C_MID, 1), C_IN)
    w2 = u(ks[2], (C_CMP, C_MID), C_MID)
    b2 = u(ks[3], (C_CMP, 1), C_MID)
    wu = u(ks[4], (C_IN, C_CMP), C_CMP)
    bu = u(ks[5], (C_IN, 1), C_CMP)
    return (w1, b1, w2, b2, wu, bu)


if __name__ == "__main__":
    key = jax.random.PRNGKey(0)
    k_params, k_content, k_style = jax.random.split(key, 3)

    B, H, W = 2, 8, 8          # small spatial size; channels fixed at 256 by module
    params = init_params(k_params)
    content = jax.random.normal(k_content, (B, C_IN, H, W), jnp.float32)
    style = jax.random.normal(k_style, (B, C_IN, H, W), jnp.float32)

    ref = jax.block_until_ready(_reference(content, style, params))

    out = utm_forward(content, style, params)
    out = jax.block_until_ready(out)

    assert out.shape == (B, C_IN, H, W)
    # bf16 matmul operands / bf16 style cache (f32 accumulation) => looser tolerance.
    max_err = float(jnp.max(jnp.abs(out - ref)))
    assert jnp.allclose(out, ref, rtol=2e-2, atol=2e-2), max_err
    print("KERNEL_OK")
</pallas_src>

<mosaic_0001>
module attributes {stable_mosaic.version = 11 : i64} {
  func.func @kernel(%arg0: i32, %arg1: i32, %arg2: i32, %arg3: memref<1x256x128xf32, #tpu.memory_space<vmem>>, %arg4: memref<1x256x128xf32, #tpu.memory_space<vmem>>, %arg5: memref<128x256xbf16, #tpu.memory_space<vmem>>, %arg6: memref<128x1xf32, #tpu.memory_space<vmem>>, %arg7: memref<32x128xbf16, #tpu.memory_space<vmem>>, %arg8: memref<32x1xf32, #tpu.memory_space<vmem>>, %arg9: memref<1x32xf32, #tpu.memory_space<vmem>>, %arg10: memref<256x32xf32, #tpu.memory_space<vmem>>, %arg11: memref<256x1xf32, #tpu.memory_space<vmem>>, %arg12: memref<1x256x128xf32, #tpu.memory_space<vmem>>, %arg13: memref<256x1xf32, #tpu.memory_space<vmem>>, %arg14: memref<256x1xf32, #tpu.memory_space<vmem>>, %arg15: memref<256x1xf32, #tpu.memory_space<vmem>>, %arg16: memref<32x32xf32, #tpu.memory_space<vmem>>, %arg17: memref<256x128xbf16, #tpu.memory_space<vmem>>, %arg18: memref<256x1xf32, #tpu.memory_space<vmem>>, %arg19: memref<256x128xf32, #tpu.memory_space<vmem>>, %arg20: memref<256x128xbf16, #tpu.memory_space<vmem>>) attributes {dimension_semantics = [#tpu.dimension_semantics<parallel>, #tpu.dimension_semantics<arbitrary>, #tpu.dimension_semantics<arbitrary>], iteration_bounds = array<i64: 2, 3, 1>, scalar_prefetch = 0 : i64, scratch_operands = 8 : i64, tpu.core_type = #tpu.core_type<tc>, window_params = [{transform_indices = @transform_0, window_bounds = array<i64: 1, 256, 128>}, {transform_indices = @transform_1, window_bounds = array<i64: 1, 256, 128>}, {pipeline_mode = #tpu.pipeline_mode<synchronous>, transform_indices = @transform_2, window_bounds = array<i64: 128, 256>}, {pipeline_mode = #tpu.pipeline_mode<synchronous>, transform_indices = @transform_3, window_bounds = array<i64: 128, 1>}, {pipeline_mode = #tpu.pipeline_mode<synchronous>, transform_indices = @transform_4, window_bounds = array<i64: 32, 128>}, {pipeline_mode = #tpu.pipeline_mode<synchronous>, transform_indices = @transform_5, window_bounds = array<i64: 32, 1>}, {pipeline_mode = #tpu.pipeline_mode<synchronous>, transform_indices = @transform_6, window_bounds = array<i64: 1, 32>}, {pipeline_mode = #tpu.pipeline_mode<synchronous>, transform_indices = @transform_7, window_bounds = array<i64: 256, 32>}, {pipeline_mode = #tpu.pipeline_mode<synchronous>, transform_indices = @transform_8, window_bounds = array<i64: 256, 1>}, {transform_indices = @transform_9, window_bounds = array<i64: 1, 256, 128>}]} {
    %c128_i32 = arith.constant 128 : i32
    %0 = arith.muli %arg2, %c128_i32 : i32
    %1 = tpu.assume_multiple %0, 128 : i32
    %c0_i32 = arith.constant 0 : i32
    %2 = arith.cmpi eq, %arg1, %c0_i32 : i32
    %3 = arith.extui %2 : i1 to i32
    %c0_i32_0 = arith.constant 0 : i32
    %4 = arith.cmpi ne, %3, %c0_i32_0 : i32
    scf.if %4 {
      %c0_i32_3 = arith.constant 0 : i32
      %11 = arith.cmpi eq, %arg2, %c0_i32_3 : i32
      %12 = arith.extui %11 : i1 to i32
      %c0_i32_4 = arith.constant 0 : i32
      %13 = arith.cmpi ne, %12, %c0_i32_4 : i32
      scf.if %13 {
        %cst_26 = arith.constant 0.000000e+00 : f32
        %39 = vector.broadcast %cst_26 : f32 to vector<256x1xf32>
        %c0_27 = arith.constant 0 : index
        %c0_28 = arith.constant 0 : index
        %40 = vector.load %arg13[%c0_27, %c0_28] : memref<256x1xf32, #tpu.memory_space<vmem>>, vector<256x1xf32>
        tpu.vector_store %arg13[%c0_27, %c0_28], %39 {strides = array<i32>} : memref<256x1xf32, #tpu.memory_space<vmem>>, vector<256x1xf32>,
        %cst_29 = arith.constant 0.000000e+00 : f32
        %41 = vector.broadcast %cst_29 : f32 to vector<256x1xf32>
        %c0_30 = arith.constant 0 : index
        %c0_31 = arith.constant 0 : index
        %42 = vector.load %arg14[%c0_30, %c0_31] : memref<256x1xf32, #tpu.memory_space<vmem>>, vector<256x1xf32>
        tpu.vector_store %arg14[%c0_30, %c0_31], %41 {strides = array<i32>} : memref<256x1xf32, #tpu.memory_space<vmem>>, vector<256x1xf32>,
        %cst_32 = arith.constant 0.000000e+00 : f32
        %43 = vector.broadcast %cst_32 : f32 to vector<256x1xf32>
        %c0_33 = arith.constant 0 : index
        %c0_34 = arith.constant 0 : index
        %44 = vector.load %arg15[%c0_33, %c0_34] : memref<256x1xf32, #tpu.memory_space<vmem>>, vector<256x1xf32>
        tpu.vector_store %arg15[%c0_33, %c0_34], %43 {strides = array<i32>} : memref<256x1xf32, #tpu.memory_space<vmem>>, vector<256x1xf32>,
      } else {
      }
      %c0 = arith.constant 0 : index
      %c0_5 = arith.constant 0 : index
      %c0_6 = arith.constant 0 : index
      %14 = vector.load %arg3[%c0, %c0_5, %c0_6] : memref<1x256x128xf32, #tpu.memory_space<vmem>>, vector<1x256x128xf32>
      %15 = vector.shape_cast %14 : vector<1x256x128xf32> to vector<256x128xf32>
      %c0_7 = arith.constant 0 : index
      %c0_8 = arith.constant 0 : index
      %c0_9 = arith.constant 0 : index
      %16 = vector.load %arg4[%c0_7, %c0_8, %c0_9] : memref<1x256x128xf32, #tpu.memory_space<vmem>>, vector<1x256x128xf32>
      %17 = vector.shape_cast %16 : vector<1x256x128xf32> to vector<256x128xf32>
      %c0_10 = arith.constant 0 : index
      %c0_11 = arith.constant 0 : index
      %18 = vector.load %arg13[%c0_10, %c0_11] : memref<256x1xf32, #tpu.memory_space<vmem>>, vector<256x1xf32>
      %cst = arith.constant dense<0.000000e+00> : vector<256xf32>
      %19 = vector.multi_reduction <add>, %15, %cst [1] : vector<256x128xf32> to vector<256xf32>
      %20 = vector.shape_cast %19 : vector<256xf32> to vector<256x1xf32>
      %21 = arith.addf %18, %20 : vector<256x1xf32>
      %c0_12 = arith.constant 0 : index
      %c0_13 = arith.constant 0 : index
      %22 = vector.load %arg13[%c0_12, %c0_13] : memref<256x1xf32, #tpu.memory_space<vmem>>, vector<256x1xf32>
      tpu.vector_store %arg13[%c0_12, %c0_13], %21 {strides = array<i32>} : memref<256x1xf32, #tpu.memory_space<vmem>>, vector<256x1xf32>,
      %c0_14 = arith.constant 0 : index
      %c0_15 = arith.constant 0 : index
      %23 = vector.load %arg14[%c0_14, %c0_15] : memref<256x1xf32, #tpu.memory_space<vmem>>, vector<256x1xf32>
      %24 = arith.mulf %15, %15 : vector<256x128xf32>
      %cst_16 = arith.constant dense<0.000000e+00> : vector<256xf32>
      %25 = vector.multi_reduction <add>, %24, %cst_16 [1] : vector<256x128xf32> to vector<256xf32>
      %26 = vector.shape_cast %25 : vector<256xf32> to vector<256x1xf32>
      %27 = arith.addf %23, %26 : vector<256x1xf32>
      %c0_17 = arith.constant 0 : index
      %c0_18 = arith.constant 0 : index
      %28 = vector.load %arg14[%c0_17, %c0_18] : memref<256x1xf32, #tpu.memory_space<vmem>>, vector<256x1xf32>
      tpu.vector_store %arg14[%c0_17, %c0_18], %27 {strides = array<i32>} : memref<256x1xf32, #tpu.memory_space<vmem>>, vector<256x1xf32>,
      %c0_19 = arith.constant 0 : index
      %c0_20 = arith.constant 0 : index
      %29 = vector.load %arg15[%c0_19, %c0_20] : memref<256x1xf32, #tpu.memory_space<vmem>>, vector<256x1xf32>
      %cst_21 = arith.constant dense<0.000000e+00> : vector<256xf32>
      %30 = vector.multi_reduction <add>, %17, %cst_21 [1] : vector<256x128xf32> to vector<256xf32>
      %31 = vector.shape_cast %30 : vector<256xf32> to vector<256x1xf32>
      %32 = arith.addf %29, %31 : vector<256x1xf32>
      %c0_22 = arith.constant 0 : index
      %c0_23 = arith.constant 0 : index
      %33 = vector.load %arg15[%c0_22, %c0_23] : memref<256x1xf32, #tpu.memory_space<vmem>>, vector<256x1xf32>
      tpu.vector_store %arg15[%c0_22, %c0_23], %32 {strides = array<i32>} : memref<256x1xf32, #tpu.memory_space<vmem>>, vector<256x1xf32>,
      %c0_24 = arith.constant 0 : index
      %34 = arith.index_cast %1 : i32 to index
      %35 = vector.load %arg19[%c0_24, %34] : memref<256x128xf32, #tpu.memory_space<vmem>>, vector<256x128xf32>
      tpu.vector_store %arg19[%c0_24, %34], %15 {strides = array<i32>} : memref<256x128xf32, #tpu.memory_space<vmem>>, vector<256x128xf32>,
      %36 = arith.truncf %17 : vector<256x128xf32> to vector<256x128xbf16>
      %c0_25 = arith.constant 0 : index
      %37 = arith.index_cast %1 : i32 to index
      %38 = vector.load %arg20[%c0_25, %37] : memref<256x128xbf16, #tpu.memory_space<vmem>>, vector<256x128xbf16>
      tpu.vector_store %arg20[%c0_25, %37], %36 {strides = array<i32>} : memref<256x128xbf16, #tpu.memory_space<vmem>>, vector<256x128xbf16>,
    } else {
    }
    %c1_i32 = arith.constant 1 : i32
    %5 = arith.cmpi eq, %arg1, %c1_i32 : i32
    %6 = arith.extui %5 : i1 to i32
    %c0_i32_1 = arith.constant 0 : i32
    %7 = arith.cmpi ne, %6, %c0_i32_1 : i32
    scf.if %7 {
      %c0_i32_3 = arith.constant 0 : i32
      %11 = arith.cmpi eq, %arg2, %c0_i32_3 : i32
      %12 = arith.extui %11 : i1 to i32
      %c0_i32_4 = arith.constant 0 : i32
      %13 = arith.cmpi ne, %12, %c0_i32_4 : i32
      scf.if %13 {
        %c0_23 = arith.constant 0 : index
        %c0_24 = arith.constant 0 : index
        %48 = vector.load %arg13[%c0_23, %c0_24] : memref<256x1xf32, #tpu.memory_space<vmem>>, vector<256x1xf32>
        %cst_25 = arith.constant 1.562500e-02 : f32
        %49 = vector.broadcast %cst_25 : f32 to vector<256x1xf32>
        %50 = arith.mulf %48, %49 : vector<256x1xf32>
        %c0_26 = arith.constant 0 : index
        %c0_27 = arith.constant 0 : index
        %51 = vector.load %arg14[%c0_26, %c0_27] : memref<256x1xf32, #tpu.memory_space<vmem>>, vector<256x1xf32>
        %cst_28 = arith.constant 6.400000e+01 : f32
        %52 = vector.broadcast %cst_28 : f32 to vector<256x1xf32>
        %53 = arith.mulf %52, %50 : vector<256x1xf32>
        %54 = arith.mulf %53, %50 : vector<256x1xf32>
        %55 = arith.subf %51, %54 : vector<256x1xf32>
        %cst_29 = arith.constant 0.0158730168 : f32
        %56 = vector.broadcast %cst_29 : f32 to vector<256x1xf32>
        %57 = arith.mulf %55, %56 : vector<256x1xf32>
        %c0_30 = arith.constant 0 : index
        %c0_31 = arith.constant 0 : index
        %58 = vector.load %arg13[%c0_30, %c0_31] : memref<256x1xf32, #tpu.memory_space<vmem>>, vector<256x1xf32>
        tpu.vector_store %arg13[%c0_30, %c0_31], %50 {strides = array<i32>} : memref<256x1xf32, #tpu.memory_space<vmem>>, vector<256x1xf32>,
        %cst_32 = arith.constant 9.99999974E-6 : f32
        %59 = vector.broadcast %cst_32 : f32 to vector<256x1xf32>
        %60 = arith.addf %57, %59 : vector<256x1xf32>
        %61 = math.rsqrt %60 : vector<256x1xf32>
        %c0_33 = arith.constant 0 : index
        %c0_34 = arith.constant 0 : index
        %62 = vector.load %arg14[%c0_33, %c0_34] : memref<256x1xf32, #tpu.memory_space<vmem>>, vector<256x1xf32>
        tpu.vector_store %arg14[%c0_33, %c0_34], %61 {strides = array<i32>} : memref<256x1xf32, #tpu.memory_space<vmem>>, vector<256x1xf32>,
        %c0_35 = arith.constant 0 : index
        %c0_36 = arith.constant 0 : index
        %63 = vector.load %arg15[%c0_35, %c0_36] : memref<256x1xf32, #tpu.memory_space<vmem>>, vector<256x1xf32>
        %cst_37 = arith.constant 1.562500e-02 : f32
        %64 = vector.broadcast %cst_37 : f32 to vector<256x1xf32>
        %65 = arith.mulf %63, %64 : vector<256x1xf32>
        %c0_38 = arith.constant 0 : index
        %c0_39 = arith.constant 0 : index
        %66 = vector.load %arg15[%c0_38, %c0_39] : memref<256x1xf32, #tpu.memory_space<vmem>>, vector<256x1xf32>
        tpu.vector_store %arg15[%c0_38, %c0_39], %65 {strides = array<i32>} : memref<256x1xf32, #tpu.memory_space<vmem>>, vector<256x1xf32>,
        %cst_40 = arith.constant 0.000000e+00 : f32
        %67 = vector.broadcast %cst_40 : f32 to vector<32x32xf32>
        %c0_41 = arith.constant 0 : index
        %c0_42 = arith.constant 0 : index
        %68 = vector.load %arg16[%c0_41, %c0_42] : memref<32x32xf32, #tpu.memory_space<vmem>>, vector<32x32xf32>
        tpu.vector_store %arg16[%c0_41, %c0_42], %67 {strides = array<i32>} : memref<32x32xf32, #tpu.memory_space<vmem>>, vector<32x32xf32>,
      } else {
      }
      %c0 = arith.constant 0 : index
      %14 = arith.index_cast %1 : i32 to index
      %15 = vector.load %arg20[%c0, %14] : memref<256x128xbf16, #tpu.memory_space<vmem>>, vector<256x128xbf16>
      %16 = arith.extf %15 : vector<256x128xbf16> to vector<256x128xf32>
      %c0_5 = arith.constant 0 : index
      %c0_6 = arith.constant 0 : index
      %17 = vector.load %arg15[%c0_5, %c0_6] : memref<256x1xf32, #tpu.memory_space<vmem>>, vector<256x1xf32>
      %18 = vector.broadcast %17 : vector<256x1xf32> to vector<256x128xf32>
      %19 = arith.subf %16, %18 : vector<256x128xf32>
      %20 = arith.truncf %19 : vector<256x128xf32> to vector<256x128xbf16>
      %c0_7 = arith.constant 0 : index
      %c0_8 = arith.constant 0 : index
      %21 = vector.load %arg5[%c0_7, %c0_8] : memref<128x256xbf16, #tpu.memory_space<vmem>>, vector<128x256xbf16>
      %cst = arith.constant dense<0.000000e+00> : vector<128x128xf32>
      %22 = tpu.matmul %21, %20, %cst {dimension_numbers = #tpu.dot_dimension_numbers<[1], [0], [0], [1], [0, 0, 1, 1], [], []>} : vector<128x256xbf16>, vector<256x128xbf16>, vector<128x128xf32> -> vector<128x128xf32>
      %c0_9 = arith.constant 0 : index
      %c0_10 = arith.constant 0 : index
      %23 = vector.load %arg6[%c0_9, %c0_10] : memref<128x1xf32, #tpu.memory_space<vmem>>, vector<128x1xf32>
      %24 = vector.broadcast %23 : vector<128x1xf32> to vector<128x128xf32>
      %25 = arith.addf %22, %24 : vector<128x128xf32>
      %cst_11 = arith.constant 0.000000e+00 : f32
      %26 = vector.broadcast %cst_11 : f32 to vector<128x128xf32>
      %27 = arith.maximumf %25, %26 : vector<128x128xf32>
      %c0_12 = arith.constant 0 : index
      %c0_13 = arith.constant 0 : index
      %28 = vector.load %arg7[%c0_12, %c0_13] : memref<32x128xbf16, #tpu.memory_space<vmem>>, vector<32x128xbf16>
      %29 = arith.truncf %27 : vector<128x128xf32> to vector<128x128xbf16>
      %cst_14 = arith.constant dense<0.000000e+00> : vector<32x128xf32>
      %30 = tpu.matmul %28, %29, %cst_14 {dimension_numbers = #tpu.dot_dimension_numbers<[1], [0], [0], [1], [0, 0, 1, 1], [], []>} : vector<32x128xbf16>, vector<128x128xbf16>, vector<32x128xf32> -> vector<32x128xf32>
      %c0_15 = arith.constant 0 : index
      %c0_16 = arith.constant 0 : index
      %31 = vector.load %arg8[%c0_15, %c0_16] : memref<32x1xf32, #tpu.memory_space<vmem>>, vector<32x1xf32>
      %32 = vector.broadcast %31 : vector<32x1xf32> to vector<32x128xf32>
      %33 = arith.addf %30, %32 : vector<32x128xf32>
      %34 = arith.truncf %33 : vector<32x128xf32> to vector<32x128xbf16>
      %35 = tpu.iota {dimensions = array<i32: 1>} : vector<1x128xi32>
      %36 = vector.broadcast %1 : i32 to vector<1x128xi32>
      %37 = arith.addi %36, %35 : vector<1x128xi32>
      %c64_i32 = arith.constant 64 : i32
      %38 = vector.broadcast %c64_i32 : i32 to vector<1x128xi32>
      %39 = arith.cmpi slt, %37, %38 : vector<1x128xi32>
      %cst_17 = arith.constant 0.000000e+00 : bf16
      %40 = vector.broadcast %cst_17 : bf16 to vector<32x128xbf16>
      %41 = vector.shape_cast %39 : vector<1x128xi1> to vector<1x128xi1>
      %42 = vector.broadcast %41 : vector<1x128xi1> to vector<32x128xi1>
      %43 = arith.select %42, %34, %40 : vector<32x128xi1>, vector<32x128xbf16>
      %c0_18 = arith.constant 0 : index
      %c0_19 = arith.constant 0 : index
      %44 = vector.load %arg16[%c0_18, %c0_19] : memref<32x32xf32, #tpu.memory_space<vmem>>, vector<32x32xf32>
      %cst_20 = arith.constant dense<0.000000e+00> : vector<32x32xf32>
      %45 = tpu.matmul %43, %43, %cst_20 {dimension_numbers = #tpu.dot_dimension_numbers<[1], [1], [0], [0], [0, 0, 1, 0], [], []>} : vector<32x128xbf16>, vector<32x128xbf16>, vector<32x32xf32> -> vector<32x32xf32>
      %46 = arith.addf %44, %45 : vector<32x32xf32>
      %c0_21 = arith.constant 0 : index
      %c0_22 = arith.constant 0 : index
      %47 = vector.load %arg16[%c0_21, %c0_22] : memref<32x32xf32, #tpu.memory_space<vmem>>, vector<32x32xf32>
      tpu.vector_store %arg16[%c0_21, %c0_22], %46 {strides = array<i32>} : memref<32x32xf32, #tpu.memory_space<vmem>>, vector<32x32xf32>,
    } else {
    }
    %c2_i32 = arith.constant 2 : i32
    %8 = arith.cmpi eq, %arg1, %c2_i32 : i32
    %9 = arith.extui %8 : i1 to i32
    %c0_i32_2 = arith.constant 0 : i32
    %10 = arith.cmpi ne, %9, %c0_i32_2 : i32
    scf.if %10 {
      %c0_i32_3 = arith.constant 0 : i32
      %11 = arith.cmpi eq, %arg2, %c0_i32_3 : i32
      %12 = arith.extui %11 : i1 to i32
      %c0_i32_4 = arith.constant 0 : i32
      %13 = arith.cmpi ne, %12, %c0_i32_4 : i32
      scf.if %13 {
        %c0_22 = arith.constant 0 : index
        %c0_23 = arith.constant 0 : index
        %40 = vector.load %arg16[%c0_22, %c0_23] : memref<32x32xf32, #tpu.memory_space<vmem>>, vector<32x32xf32>
        %cst_24 = arith.constant 1.562500e-02 : f32
        %41 = vector.broadcast %cst_24 : f32 to vector<32x32xf32>
        %42 = arith.mulf %40, %41 : vector<32x32xf32>
        %cst_25 = arith.constant dense<0xFF800000> : vector<32xf32>
        %43 = vector.multi_reduction <maximumf>, %42, %cst_25 [1] : vector<32x32xf32> to vector<32xf32>
        %44 = vector.shape_cast %43 : vector<32xf32> to vector<32x1xf32>
        %45 = vector.broadcast %44 : vector<32x1xf32> to vector<32x32xf32>
        %46 = arith.subf %42, %45 : vector<32x32xf32>
        %47 = math.exp %46 : vector<32x32xf32>
        %cst_26 = arith.constant dense<0.000000e+00> : vector<32xf32>
        %48 = vector.multi_reduction <add>, %47, %cst_26 [1] : vector<32x32xf32> to vector<32xf32>
        %49 = vector.shape_cast %48 : vector<32xf32> to vector<32x1xf32>
        %50 = tpu.reciprocal %49 {approx = true} : vector<32x1xf32> -> vector<32x1xf32>
        %51 = vector.broadcast %50 : vector<32x1xf32> to vector<32x32xf32>
        %52 = arith.mulf %47, %51 : vector<32x32xf32>
        %cst_27 = arith.constant 0.176776692 : f32
        %53 = vector.broadcast %cst_27 : f32 to vector<32x32xf32>
        %54 = arith.mulf %52, %53 : vector<32x32xf32>
        %c0_28 = arith.constant 0 : index
        %c0_29 = arith.constant 0 : index
        %55 = vector.load %arg10[%c0_28, %c0_29] : memref<256x32xf32, #tpu.memory_space<vmem>>, vector<256x32xf32>
        %cst_30 = arith.constant dense<0.000000e+00> : vector<256x32xf32>
        %56 = tpu.matmul %55, %54, %cst_30 {dimension_numbers = #tpu.dot_dimension_numbers<[1], [0], [0], [1], [0, 0, 1, 1], [], []>} : vector<256x32xf32>, vector<32x32xf32>, vector<256x32xf32> -> vector<256x32xf32>
        %57 = arith.truncf %56 : vector<256x32xf32> to vector<256x32xbf16>
        %c0_31 = arith.constant 0 : index
        %c0_32 = arith.constant 0 : index
        %58 = vector.load %arg7[%c0_31, %c0_32] : memref<32x128xbf16, #tpu.memory_space<vmem>>, vector<32x128xbf16>
        %cst_33 = arith.constant dense<0.000000e+00> : vector<256x128xf32>
        %59 = tpu.matmul %57, %58, %cst_33 {dimension_numbers = #tpu.dot_dimension_numbers<[1], [0], [0], [1], [0, 0, 1, 1], [], []>} : vector<256x32xbf16>, vector<32x128xbf16>, vector<256x128xf32> -> vector<256x128xf32>
        %60 = arith.truncf %59 : vector<256x128xf32> to vector<256x128xbf16>
        %c0_34 = arith.constant 0 : index
        %c0_35 = arith.constant 0 : index
        %61 = vector.load %arg17[%c0_34, %c0_35] : memref<256x128xbf16, #tpu.memory_space<vmem>>, vector<256x128xbf16>
        tpu.vector_store %arg17[%c0_34, %c0_35], %60 {strides = array<i32>} : memref<256x128xbf16, #tpu.memory_space<vmem>>, vector<256x128xbf16>,
        %c0_36 = arith.constant 0 : index
        %c0_37 = arith.constant 0 : index
        %62 = vector.load %arg9[%c0_36, %c0_37] : memref<1x32xf32, #tpu.memory_space<vmem>>, vector<1x32xf32>
        %63 = vector.broadcast %62 : vector<1x32xf32> to vector<256x32xf32>
        %64 = arith.mulf %56, %63 : vector<256x32xf32>
        %cst_38 = arith.constant dense<0.000000e+00> : vector<256xf32>
        %65 = vector.multi_reduction <add>, %64, %cst_38 [1] : vector<256x32xf32> to vector<256xf32>
        %66 = vector.shape_cast %65 : vector<256xf32> to vector<256x1xf32>
        %c0_39 = arith.constant 0 : index
        %c0_40 = arith.constant 0 : index
        %67 = vector.load %arg11[%c0_39, %c0_40] : memref<256x1xf32, #tpu.memory_space<vmem>>, vector<256x1xf32>
        %68 = arith.addf %66, %67 : vector<256x1xf32>
        %c0_41 = arith.constant 0 : index
        %c0_42 = arith.constant 0 : index
        %69 = vector.load %arg15[%c0_41, %c0_42] : memref<256x1xf32, #tpu.memory_space<vmem>>, vector<256x1xf32>
        %70 = arith.addf %68, %69 : vector<256x1xf32>
        %c0_43 = arith.constant 0 : index
        %c0_44 = arith.constant 0 : index
        %71 = vector.load %arg18[%c0_43, %c0_44] : memref<256x1xf32, #tpu.memory_space<vmem>>, vector<256x1xf32>
        tpu.vector_store %arg18[%c0_43, %c0_44], %70 {strides = array<i32>} : memref<256x1xf32, #tpu.memory_space<vmem>>, vector<256x1xf32>,
      } else {
      }
      %c0 = arith.constant 0 : index
      %14 = arith.index_cast %1 : i32 to index
      %15 = vector.load %arg19[%c0, %14] : memref<256x128xf32, #tpu.memory_space<vmem>>, vector<256x128xf32>
      %c0_5 = arith.constant 0 : index
      %c0_6 = arith.constant 0 : index
      %16 = vector.load %arg13[%c0_5, %c0_6] : memref<256x1xf32, #tpu.memory_space<vmem>>, vector<256x1xf32>
      %17 = vector.broadcast %16 : vector<256x1xf32> to vector<256x128xf32>
      %18 = arith.subf %15, %17 : vector<256x128xf32>
      %c0_7 = arith.constant 0 : index
      %c0_8 = arith.constant 0 : index
      %19 = vector.load %arg14[%c0_7, %c0_8] : memref<256x1xf32, #tpu.memory_space<vmem>>, vector<256x1xf32>
      %20 = vector.broadcast %19 : vector<256x1xf32> to vector<256x128xf32>
      %21 = arith.mulf %18, %20 : vector<256x128xf32>
      %22 = arith.truncf %21 : vector<256x128xf32> to vector<256x128xbf16>
      %c0_9 = arith.constant 0 : index
      %c0_10 = arith.constant 0 : index
      %23 = vector.load %arg5[%c0_9, %c0_10] : memref<128x256xbf16, #tpu.memory_space<vmem>>, vector<128x256xbf16>
      %cst = arith.constant dense<0.000000e+00> : vector<128x128xf32>
      %24 = tpu.matmul %23, %22, %cst {dimension_numbers = #tpu.dot_dimension_numbers<[1], [0], [0], [1], [0, 0, 1, 1], [], []>} : vector<128x256xbf16>, vector<256x128xbf16>, vector<128x128xf32> -> vector<128x128xf32>
      %c0_11 = arith.constant 0 : index
      %c0_12 = arith.constant 0 : index
      %25 = vector.load %arg6[%c0_11, %c0_12] : memref<128x1xf32, #tpu.memory_space<vmem>>, vector<128x1xf32>
      %26 = vector.broadcast %25 : vector<128x1xf32> to vector<128x128xf32>
      %27 = arith.addf %24, %26 : vector<128x128xf32>
      %cst_13 = arith.constant 0.000000e+00 : f32
      %28 = vector.broadcast %cst_13 : f32 to vector<128x128xf32>
      %29 = arith.maximumf %27, %28 : vector<128x128xf32>
      %c0_14 = arith.constant 0 : index
      %c0_15 = arith.constant 0 : index
      %30 = vector.load %arg17[%c0_14, %c0_15] : memref<256x128xbf16, #tpu.memory_space<vmem>>, vector<256x128xbf16>
      %31 = arith.truncf %29 : vector<128x128xf32> to vector<128x128xbf16>
      %cst_16 = arith.constant dense<0.000000e+00> : vector<256x128xf32>
      %32 = tpu.matmul %30, %31, %cst_16 {dimension_numbers = #tpu.dot_dimension_numbers<[1], [0], [0], [1], [0, 0, 1, 1], [], []>} : vector<256x128xbf16>, vector<128x128xbf16>, vector<256x128xf32> -> vector<256x128xf32>
      %c0_17 = arith.constant 0 : index
      %c0_18 = arith.constant 0 : index
      %33 = vector.load %arg18[%c0_17, %c0_18] : memref<256x1xf32, #tpu.memory_space<vmem>>, vector<256x1xf32>
      %34 = vector.broadcast %33 : vector<256x1xf32> to vector<256x128xf32>
      %35 = arith.addf %32, %34 : vector<256x128xf32>
      %36 = arith.addf %35, %15 : vector<256x128xf32>
      %c0_19 = arith.constant 0 : index
      %c0_20 = arith.constant 0 : index
      %c0_21 = arith.constant 0 : index
      %37 = vector.load %arg12[%c0_19, %c0_20, %c0_21] : memref<1x256x128xf32, #tpu.memory_space<vmem>>, vector<1x256x128xf32>
      %38 = vector.shape_cast %37 : vector<1x256x128xf32> to vector<256x128xf32>
      %39 = vector.shape_cast %36 : vector<256x128xf32> to vector<1x256x128xf32>
      tpu.vector_store %arg12[%c0_19, %c0_20, %c0_21], %39 {strides = array<i32>} : memref<1x256x128xf32, #tpu.memory_space<vmem>>, vector<1x256x128xf32>,
    } else {
    }
    return
  }
  func.func @transform_0(%arg0: i32, %arg1: i32, %arg2: i32) -> (i32, i32, i32) {
    %c0_i32 = arith.constant 0 : i32
    %0 = arith.cmpi eq, %arg1, %c0_i32 : i32
    %c0_i32_0 = arith.constant 0 : i32
    %1 = arith.select %0, %arg2, %c0_i32_0 : i32
    %c0_i32_1 = arith.constant 0 : i32
    %c0_i32_2 = arith.constant 0 : i32
    return %arg0, %c0_i32_1, %1 : i32, i32, i32
  }
  func.func @transform_1(%arg0: i32, %arg1: i32, %arg2: i32) -> (i32, i32, i32) {
    %c0_i32 = arith.constant 0 : i32
    %0 = arith.cmpi eq, %arg1, %c0_i32 : i32
    %c0_i32_0 = arith.constant 0 : i32
    %1 = arith.select %0, %arg2, %c0_i32_0 : i32
    %c0_i32_1 = arith.constant 0 : i32
    %c0_i32_2 = arith.constant 0 : i32
    return %arg0, %c0_i32_1, %1 : i32, i32, i32
  }
  func.func @transform_2(%arg0: i32, %arg1: i32, %arg2: i32) -> (i32, i32) {
    %c0_i32 = arith.constant 0 : i32
    %c0_i32_0 = arith.constant 0 : i32
    %c0_i32_1 = arith.constant 0 : i32
    return %c0_i32, %c0_i32_0 : i32, i32
  }
  func.func @transform_3(%arg0: i32, %arg1: i32, %arg2: i32) -> (i32, i32) {
    %c0_i32 = arith.constant 0 : i32
    %c0_i32_0 = arith.constant 0 : i32
    %c0_i32_1 = arith.constant 0 : i32
    return %c0_i32, %c0_i32_0 : i32, i32
  }
  func.func @transform_4(%arg0: i32, %arg1: i32, %arg2: i32) -> (i32, i32) {
    %c0_i32 = arith.constant 0 : i32
    %c0_i32_0 = arith.constant 0 : i32
    %c0_i32_1 = arith.constant 0 : i32
    return %c0_i32, %c0_i32_0 : i32, i32
  }
  func.func @transform_5(%arg0: i32, %arg1: i32, %arg2: i32) -> (i32, i32) {
    %c0_i32 = arith.constant 0 : i32
    %c0_i32_0 = arith.constant 0 : i32
    %c0_i32_1 = arith.constant 0 : i32
    return %c0_i32, %c0_i32_0 : i32, i32
  }
  func.func @transform_6(%arg0: i32, %arg1: i32, %arg2: i32) -> (i32, i32) {
    %c0_i32 = arith.constant 0 : i32
    %c0_i32_0 = arith.constant 0 : i32
    %c0_i32_1 = arith.constant 0 : i32
    return %c0_i32, %c0_i32_0 : i32, i32
  }
  func.func @transform_7(%arg0: i32, %arg1: i32, %arg2: i32) -> (i32, i32) {
    %c0_i32 = arith.constant 0 : i32
    %c0_i32_0 = arith.constant 0 : i32
    %c0_i32_1 = arith.constant 0 : i32
    return %c0_i32, %c0_i32_0 : i32, i32
  }
  func.func @transform_8(%arg0: i32, %arg1: i32, %arg2: i32) -> (i32, i32) {
    %c0_i32 = arith.constant 0 : i32
    %c0_i32_0 = arith.constant 0 : i32
    %c0_i32_1 = arith.constant 0 : i32
    return %c0_i32, %c0_i32_0 : i32, i32
  }
  func.func @transform_9(%arg0: i32, %arg1: i32, %arg2: i32) -> (i32, i32, i32) {
    %c2_i32 = arith.constant 2 : i32
    %0 = arith.cmpi eq, %arg1, %c2_i32 : i32
    %c0_i32 = arith.constant 0 : i32
    %1 = arith.select %0, %arg2, %c0_i32 : i32
    %c0_i32_0 = arith.constant 0 : i32
    %c0_i32_1 = arith.constant 0 : i32
    return %arg0, %c0_i32_0, %1 : i32, i32, i32
  }
}

</mosaic_0001>

<llo_original>
// kernel: tpu_custom_call.1
$region0: #{tpu_custom_call.1}
  #allocation0 [shape = 'u32[]', space=smem, size = 0x4, offset = 0x4, fixed_abs, tag = 'smem constant byte address 0x4 - core index']
  #allocation1 [shape = 'u32[144,128]{1,0:T(1,128)}', space=vmem, size = 0x12000, scoped, tag = 'internal scratch']
  #allocation2 [shape = 'f32[256,1]{1,0:T(8,128)}', space=vmem, size = 0x20000, scoped, tag = 'scratch operand']
  #allocation3 [shape = 'f32[256,1]{1,0:T(8,128)}', space=vmem, size = 0x20000, scoped, tag = 'scratch operand']
  #allocation4 [shape = 'f32[256,1]{1,0:T(8,128)}', space=vmem, size = 0x20000, scoped, tag = 'scratch operand']
  #allocation5 [shape = 'f32[32,32]{1,0:T(8,128)}', space=vmem, size = 0x4000, scoped, tag = 'scratch operand']
  #allocation6 [shape = 'bf16[256,128]{1,0:T(16,128)(2,1)}', space=vmem, size = 0x10000, scoped, tag = 'scratch operand']
  #allocation7 [shape = 'f32[256,1]{1,0:T(8,128)}', space=vmem, size = 0x20000, scoped, tag = 'scratch operand']
  #allocation8 [shape = 'f32[256,128]{1,0:T(8,128)}', space=vmem, size = 0x20000, scoped, tag = 'scratch operand']
  #allocation9 [shape = 'bf16[256,128]{1,0:T(16,128)(2,1)}', space=vmem, size = 0x10000, scoped, tag = 'scratch operand']
  %s0 = inlined_call_operand.vmem [shape: f32[2,256,128], index: 0, kind: input, shape index: {}]
  %s1 = inlined_call_operand.hbm [shape: f32[2,256,128], index: 1, kind: input, shape index: {}]
  %s2 = inlined_call_operand.vmem [shape: bf16[128,256], index: 2, kind: input, shape index: {}]
  %s3 = inlined_call_operand.vmem [shape: f32[128,1], index: 3, kind: input, shape index: {}]
  %s4 = inlined_call_operand.vmem [shape: bf16[32,128], index: 4, kind: input, shape index: {}]
  %s5 = inlined_call_operand.vmem [shape: f32[32,1], index: 5, kind: input, shape index: {}]
  %s6 = inlined_call_operand.vmem [shape: f32[1,32], index: 6, kind: input, shape index: {}]
  %s7 = inlined_call_operand.vmem [shape: f32[256,32], index: 7, kind: input, shape index: {}]
  %s8 = inlined_call_operand.vmem [shape: f32[256,1], index: 8, kind: input, shape index: {}]
  %s9 = inlined_call_operand.hbm [shape: f32[2,256,128], index: 9, kind: output, shape index: {}]
  %s10 = sld [smem:[#allocation0]]
  $region97: #{tpu_custom_call.1} parent=0
    _
  %s12 = ssub.s32 1, %s10
  %s13 = scalar_select 0, %s12, %s10
  $region1: #{tpu_custom_call.1} parent=0
    #allocation10 [shape = 'u8[262144]{0}', space=vmem, size = 0x40000, scoped, tag = 'input window, operand 1']
    #allocation11 [shape = 's32[2]{0}', space=sflag, size = 0x8, scoped, tag = 'scoped memory for tpu_custom_call.1']
    #allocation12 [shape = 's32[2]{0}', space=sflag, size = 0x8, scoped, tag = 'scoped memory for tpu_custom_call.1']
    #allocation13 [shape = 'u8[262144]{0}', space=vmem, size = 0x40000, scoped, tag = 'output window, operand 0']
    %14 = vsyncpa [#allocation11], 0
    %s15 = scalar_lea.sflag [#allocation11], 1
    %16 = vsyncpa %s15, 0
    %17 = vsyncpa [#allocation12], 0
    %s18 = scalar_lea.sflag [#allocation12], 1
    %19 = vsyncpa %s18, 0
    loop: start=0, step=1, limit=8
    $region2: #{tpu_custom_call.1} parent=1 // loop_pre_header
      _
    $region3: #{tpu_custom_call.1} parent=1 // loop_header
      %s21 = sphi 0, %s25
      %p22 = scmp.ge.s32.totalorder %s21, 8
      %s28 = sphi 0, %s47
      %s29 = sphi 0, %s43
      %s30 = sphi 0, %s39
      %s31 = sphi 0, %s28
      %s32 = sphi 0, %s29
      %s33 = sphi 0, %s30
      %s34 = sphi 0, %s31
      %s35 = sphi 0, %s32
      %s36 = sphi 0, %s33
      %s56 = sphi 0, %s58
      %s59 = sphi 0, %s56
      %s60 = sphi 0, %s59
      %s76 = sphi 0, %s60
      %s88 = sphi 0, %s90
      %s91 = sphi 0, %s88
      %s92 = sphi 0, %s91
      %s108 = sphi 0, %s92
      %s112 = sphi 0, %s112
      %s114 = sphi 0, %s112
      %s115 = sphi 0, %s114
      %s129 = sphi 0, %s115
      %s133 = sphi 0, %s133
      %s135 = sphi 0, %s133
      %s136 = sphi 0, %s135
      %s150 = sphi 0, %s136
      %s154 = sphi 0, %s154
      %s156 = sphi 0, %s154
      %s157 = sphi 0, %s156
      %s171 = sphi 0, %s157
      %s175 = sphi 0, %s175
      %s177 = sphi 0, %s175
      %s178 = sphi 0, %s177
      %s192 = sphi 0, %s178
      %s196 = sphi 0, %s196
      %s198 = sphi 0, %s196
      %s199 = sphi 0, %s198
      %s213 = sphi 0, %s199
      %s217 = sphi 0, %s217
      %s219 = sphi 0, %s217
      %s220 = sphi 0, %s219
      %s234 = sphi 0, %s220
      %s238 = sphi 0, %s238
      %s240 = sphi 0, %s238
      %s241 = sphi 0, %s240
      %s255 = sphi 0, %s241
      %s267 = sphi 0, %s269
      %s270 = sphi 0, %s267
      %s271 = sphi 0, %s270
      %s287 = sphi 0, %s271
    $region4: #{tpu_custom_call.1} parent=1 // loop_header_branch
      %24 = sbr.rel (%p22) target = $region8
    $region5: #{tpu_custom_call.1} parent=1 // loop_body
      %s26 = ssub.s32 %s21, 1
      %s27 = ssub.s32 %s21, 2
      %s37 = sadd.s32 1, %s30
      %p38 = scmp.ge.s32.totalorder %s37, 1
      %s39 = scalar_select %p38, 0, %s37
      %s40 = sadd.s32 1, %s29
      %s41 = scalar_select %p38, %s40, %s29
      %p42 = scmp.ge.s32.totalorder %s41, 3
      %s43 = scalar_select %p42, 0, %s41
      %s44 = sadd.s32 1, %s28
      %s45 = scalar_select %p42, %s44, %s28
      %p46 = scmp.ge.s32.totalorder %s45, 2
      %s47 = scalar_select %p46, 0, %s45
      %p48 = scmp.eq.s32.totalorder %s29, 0
      %s49 = scalar_select %p48, %s30, 0
      %p50 = scmp.eq.s32.totalorder %s43, 0
      %s51 = scalar_select %p50, %s39, 0
      %s52 = ssub.s32 %s28, %s47
      %s53 = ssub.s32 %s49, %s51
      %s54 = sor.u32 %s52, %s53
      %p55 = scmp.eq.s32.totalorder %s54, 0
      %s57 = sadd.s32 %s56, 1
      %s58 = scalar_select %p55, %s56, %s57
      %p61 = pneg %p55
      %p62 = scmp.eq.s32.totalorder %s21, 5
      %p63 = por %p61, %p62
      %p64 = scmp.ne.s32.totalorder %s56, %s59
      %p65 = scmp.eq.s32.totalorder %s21, 0
      %p66 = por %p64, %p65
      %p67 = scmp.ne.s32.totalorder %s56, %s59
      %p68 = scmp.eq.s32.totalorder %s26, 5
      %p69 = por %p67, %p68
      %p70 = scmp.ne.s32.totalorder %s59, %s60
      %p71 = scmp.eq.s32.totalorder %s26, 0
      %p72 = por %p70, %p71
      %p73 = scmp.ne.s32.totalorder %s59, %s60
      %p74 = scmp.eq.s32.totalorder %s27, 5
      %p75 = por %p73, %p74
      %p77 = scmp.ne.s32.totalorder %s60, %s76
      %p78 = scmp.eq.s32.totalorder %s27, 0
      %p79 = por %p77, %p78
      %p80 = scmp.eq.s32.totalorder %s29, 0
      %s81 = scalar_select %p80, %s30, 0
      %p82 = scmp.eq.s32.totalorder %s43, 0
      %s83 = scalar_select %p82, %s39, 0
      %s84 = ssub.s32 %s28, %s47
      %s85 = ssub.s32 %s81, %s83
      %s86 = sor.u32 %s84, %s85
      %p87 = scmp.eq.s32.totalorder %s86, 0
      %s89 = sadd.s32 %s88, 1
      %s90 = scalar_select %p87, %s88, %s89
      %p93 = pneg %p87
      %p94 = scmp.eq.s32.totalorder %s21, 5
      %p95 = por %p93, %p94
      %p96 = scmp.ne.s32.totalorder %s88, %s91
      %p97 = scmp.eq.s32.totalorder %s21, 0
      %p98 = por %p96, %p97
      %p99 = scmp.ne.s32.totalorder %s88, %s91
      %p100 = scmp.eq.s32.totalorder %s26, 5
      %p101 = por %p99, %p100
      %p102 = scmp.ne.s32.totalorder %s91, %s92
      %p103 = scmp.eq.s32.totalorder %s26, 0
      %p104 = por %p102, %p103
      %p105 = scmp.ne.s32.totalorder %s91, %s92
      %p106 = scmp.eq.s32.totalorder %s27, 5
      %p107 = por %p105, %p106
      %p109 = scmp.ne.s32.totalorder %s92, %s108
      %p110 = scmp.eq.s32.totalorder %s27, 0
      %p111 = por %p109, %p110
      %s113 = sadd.s32 %s112, 1
      %p116 = scmp.eq.s32.totalorder %s21, 5
      %p117 = scmp.ne.s32.totalorder %s112, %s114
      %p118 = scmp.eq.s32.totalorder %s21, 0
      %p119 = por %p117, %p118
      %p120 = scmp.ne.s32.totalorder %s112, %s114
      %p121 = scmp.eq.s32.totalorder %s26, 5
      %p122 = por %p120, %p121
      %p123 = scmp.ne.s32.totalorder %s114, %s115
      %p124 = scmp.eq.s32.totalorder %s26, 0
      %p125 = por %p123, %p124
      %p126 = scmp.ne.s32.totalorder %s114, %s115
      %p127 = scmp.eq.s32.totalorder %s27, 5
      %p128 = por %p126, %p127
      %p130 = scmp.ne.s32.totalorder %s115, %s129
      %p131 = scmp.eq.s32.totalorder %s27, 0
      %p132 = por %p130, %p131
      %s134 = sadd.s32 %s133, 1
      %p137 = scmp.eq.s32.totalorder %s21, 5
      %p138 = scmp.ne.s32.totalorder %s133, %s135
      %p139 = scmp.eq.s32.totalorder %s21, 0
      %p140 = por %p138, %p139
      %p141 = scmp.ne.s32.totalorder %s133, %s135
      %p142 = scmp.eq.s32.totalorder %s26, 5
      %p143 = por %p141, %p142
      %p144 = scmp.ne.s32.totalorder %s135, %s136
      %p145 = scmp.eq.s32.totalorder %s26, 0
      %p146 = por %p144, %p145
      %p147 = scmp.ne.s32.totalorder %s135, %s136
      %p148 = scmp.eq.s32.totalorder %s27, 5
      %p149 = por %p147, %p148
      %p151 = scmp.ne.s32.totalorder %s136, %s150
      %p152 = scmp.eq.s32.totalorder %s27, 0
      %p153 = por %p151, %p152
      %s155 = sadd.s32 %s154, 1
      %p158 = scmp.eq.s32.totalorder %s21, 5
      %p159 = scmp.ne.s32.totalorder %s154, %s156
      %p160 = scmp.eq.s32.totalorder %s21, 0
      %p161 = por %p159, %p160
      %p162 = scmp.ne.s32.totalorder %s154, %s156
      %p163 = scmp.eq.s32.totalorder %s26, 5
      %p164 = por %p162, %p163
      %p165 = scmp.ne.s32.totalorder %s156, %s157
      %p166 = scmp.eq.s32.totalorder %s26, 0
      %p167 = por %p165, %p166
      %p168 = scmp.ne.s32.totalorder %s156, %s157
      %p169 = scmp.eq.s32.totalorder %s27, 5
      %p170 = por %p168, %p169
      %p172 = scmp.ne.s32.totalorder %s157, %s171
      %p173 = scmp.eq.s32.totalorder %s27, 0
      %p174 = por %p172, %p173
      %s176 = sadd.s32 %s175, 1
      %p179 = scmp.eq.s32.totalorder %s21, 5
      %p180 = scmp.ne.s32.totalorder %s175, %s177
      %p181 = scmp.eq.s32.totalorder %s21, 0
      %p182 = por %p180, %p181
      %p183 = scmp.ne.s32.totalorder %s175, %s177
      %p184 = scmp.eq.s32.totalorder %s26, 5
      %p185 = por %p183, %p184
      %p186 = scmp.ne.s32.totalorder %s177, %s178
      %p187 = scmp.eq.s32.totalorder %s26, 0
      %p188 = por %p186, %p187
      %p189 = scmp.ne.s32.totalorder %s177, %s178
      %p190 = scmp.eq.s32.totalorder %s27, 5
      %p191 = por %p189, %p190
      %p193 = scmp.ne.s32.totalorder %s178, %s192
      %p194 = scmp.eq.s32.totalorder %s27, 0
      %p195 = por %p193, %p194
      %s197 = sadd.s32 %s196, 1
      %p200 = scmp.eq.s32.totalorder %s21, 5
      %p201 = scmp.ne.s32.totalorder %s196, %s198
      %p202 = scmp.eq.s32.totalorder %s21, 0
      %p203 = por %p201, %p202
      %p204 = scmp.ne.s32.totalorder %s196, %s198
      %p205 = scmp.eq.s32.totalorder %s26, 5
      %p206 = por %p204, %p205
      %p207 = scmp.ne.s32.totalorder %s198, %s199
      %p208 = scmp.eq.s32.totalorder %s26, 0
      %p209 = por %p207, %p208
      %p210 = scmp.ne.s32.totalorder %s198, %s199
      %p211 = scmp.eq.s32.totalorder %s27, 5
      %p212 = por %p210, %p211
      %p214 = scmp.ne.s32.totalorder %s199, %s213
      %p215 = scmp.eq.s32.totalorder %s27, 0
      %p216 = por %p214, %p215
      %s218 = sadd.s32 %s217, 1
      %p221 = scmp.eq.s32.totalorder %s21, 5
      %p222 = scmp.ne.s32.totalorder %s217, %s219
      %p223 = scmp.eq.s32.totalorder %s21, 0
      %p224 = por %p222, %p223
      %p225 = scmp.ne.s32.totalorder %s217, %s219
      %p226 = scmp.eq.s32.totalorder %s26, 5
      %p227 = por %p225, %p226
      %p228 = scmp.ne.s32.totalorder %s219, %s220
      %p229 = scmp.eq.s32.totalorder %s26, 0
      %p230 = por %p228, %p229
      %p231 = scmp.ne.s32.totalorder %s219, %s220
      %p232 = scmp.eq.s32.totalorder %s27, 5
      %p233 = por %p231, %p232
      %p235 = scmp.ne.s32.totalorder %s220, %s234
      %p236 = scmp.eq.s32.totalorder %s27, 0
      %p237 = por %p235, %p236
      %s239 = sadd.s32 %s238, 1
      %p242 = scmp.eq.s32.totalorder %s21, 5
      %p243 = scmp.ne.s32.totalorder %s238, %s240
      %p244 = scmp.eq.s32.totalorder %s21, 0
      %p245 = por %p243, %p244
      %p246 = scmp.ne.s32.totalorder %s238, %s240
      %p247 = scmp.eq.s32.totalorder %s26, 5
      %p248 = por %p246, %p247
      %p249 = scmp.ne.s32.totalorder %s240, %s241
      %p250 = scmp.eq.s32.totalorder %s26, 0
      %p251 = por %p249, %p250
      %p252 = scmp.ne.s32.totalorder %s240, %s241
      %p253 = scmp.eq.s32.totalorder %s27, 5
      %p254 = por %p252, %p253
      %p256 = scmp.ne.s32.totalorder %s241, %s255
      %p257 = scmp.eq.s32.totalorder %s27, 0
      %p258 = por %p256, %p257
      %p259 = scmp.eq.s32.totalorder %s29, 2
      %s260 = scalar_select %p259, %s30, 0
      %p261 = scmp.eq.s32.totalorder %s43, 2
      %s262 = scalar_select %p261, %s39, 0
      %s263 = ssub.s32 %s28, %s47
      %s264 = ssub.s32 %s260, %s262
      %s265 = sor.u32 %s263, %s264
      %p266 = scmp.eq.s32.totalorder %s265, 0
      %s268 = sadd.s32 %s267, 1
      %s269 = scalar_select %p266, %s267, %s268
      %p272 = pneg %p266
      %p273 = scmp.eq.s32.totalorder %s21, 5
      %p274 = por %p272, %p273
      %p275 = scmp.ne.s32.totalorder %s267, %s270
      %p276 = scmp.eq.s32.totalorder %s21, 0
      %p277 = por %p275, %p276
      %p278 = scmp.ne.s32.totalorder %s267, %s270
      %p279 = scmp.eq.s32.totalorder %s26, 5
      %p280 = por %p278, %p279
      %p281 = scmp.ne.s32.totalorder %s270, %s271
      %p282 = scmp.eq.s32.totalorder %s26, 0
      %p283 = por %p281, %p282
      %p284 = scmp.ne.s32.totalorder %s270, %s271
      %p285 = scmp.eq.s32.totalorder %s27, 5
      %p286 = por %p284, %p285
      %p288 = scmp.ne.s32.totalorder %s271, %s287
      %p289 = scmp.eq.s32.totalorder %s27, 0
      %p290 = por %p288, %p289
      %p291 = scmp.le.s32.totalorder 1, %s21
      %p292 = scmp.lt.s32.totalorder %s21, 7
      %p293 = pnand %p291, %p292
      %p294 = pneg %p293
      // Predicated region
      $region9: #{tpu_custom_call.1} parent=5 // pred_check
        _
      $region10: #{tpu_custom_call.1} parent=5 // pred_check_branch
        %296 = sbr.rel (%p293) target = $region12
      $region11: #{tpu_custom_call.1} parent=5 // pred_region
        %s297 = ssub.s32 %s21, 1
        // Predicated region
        $region13: #{tpu_custom_call.1} parent=11 // pred_check
          %p298 = pneg %p125
        $region14: #{tpu_custom_call.1} parent=11 // pred_check_branch
          %300 = sbr.rel (%p298) target = $region16
        $region15: #{tpu_custom_call.1} parent=11 // pred_region
          _
        $region16: #{tpu_custom_call.1} parent=11 // pred_fallthru
          _
        // Predicated region
        $region17: #{tpu_custom_call.1} parent=11 // pred_check
          %p301 = pneg %p146
        $region18: #{tpu_custom_call.1} parent=11 // pred_check_branch
          %303 = sbr.rel (%p301) target = $region20
        $region19: #{tpu_custom_call.1} parent=11 // pred_region
          _
        $region20: #{tpu_custom_call.1} parent=11 // pred_fallthru
          _
        // Predicated region
        $region21: #{tpu_custom_call.1} parent=11 // pred_check
          %p304 = pneg %p167
        $region22: #{tpu_custom_call.1} parent=11 // pred_check_branch
          %306 = sbr.rel (%p304) target = $region24
        $region23: #{tpu_custom_call.1} parent=11 // pred_region
          _
        $region24: #{tpu_custom_call.1} parent=11 // pred_fallthru
          _
        // Predicated region
        $region25: #{tpu_custom_call.1} parent=11 // pred_check
          %p307 = pneg %p188
        $region26: #{tpu_custom_call.1} parent=11 // pred_check_branch
          %309 = sbr.rel (%p307) target = $region28
        $region27: #{tpu_custom_call.1} parent=11 // pred_region
          _
        $region28: #{tpu_custom_call.1} parent=11 // pred_fallthru
          _
        // Predicated region
        $region29: #{tpu_custom_call.1} parent=11 // pred_check
          %p310 = pneg %p209
        $region30: #{tpu_custom_call.1} parent=11 // pred_check_branch
          %312 = sbr.rel (%p310) target = $region32
        $region31: #{tpu_custom_call.1} parent=11 // pred_region
          _
        $region32: #{tpu_custom_call.1} parent=11 // pred_fallthru
          _
        // Predicated region
        $region33: #{tpu_custom_call.1} parent=11 // pred_check
          %p313 = pneg %p230
        $region34: #{tpu_custom_call.1} parent=11 // pred_check_branch
          %315 = sbr.rel (%p313) target = $region36
        $region35: #{tpu_custom_call.1} parent=11 // pred_region
          _
        $region36: #{tpu_custom_call.1} parent=11 // pred_fallthru
          _
        // Predicated region
        $region37: #{tpu_custom_call.1} parent=11 // pred_check
          %p316 = pneg %p251
        $region38: #{tpu_custom_call.1} parent=11 // pred_check_branch
          %318 = sbr.rel (%p316) target = $region40
        $region39: #{tpu_custom_call.1} parent=11 // pred_region
          _
        $region40: #{tpu_custom_call.1} parent=11 // pred_fallthru
          _
      $region12: #{tpu_custom_call.1} parent=5 // pred_fallthru
        _
      %p319 = scmp.lt.s32.totalorder %s21, 6
      // Predicated region
      $region41: #{tpu_custom_call.1} parent=5 // pred_check
        %p320 = pneg %p319
      $region42: #{tpu_custom_call.1} parent=5 // pred_check_branch
        %322 = sbr.rel (%p320) target = $region44
      $region43: #{tpu_custom_call.1} parent=5 // pred_region
        // Predicated region
        $region45: #{tpu_custom_call.1} parent=43 // pred_check
          %p323 = pneg %p66
        $region46: #{tpu_custom_call.1} parent=43 // pred_check_branch
          %325 = sbr.rel (%p323) target = $region48
        $region47: #{tpu_custom_call.1} parent=43 // pred_region
          %p326 = scmp.eq.s32.totalorder %s29, 0
          %s327 = scalar_select %p326, %s30, 0
          %p328 = scmp.lt.s32.totalorder %s28, 1
          %s329 = scalar_select %p328, %s28, 1
          %p330 = scmp.lt.s32.totalorder %s327, 0
          %s331 = scalar_select %p330, %s327, 0
          %s332 = smul.addr %s329, 32
          %s333 = sadd.s32 %s331, %s332
          %s334 = smul.addr %s333, 8
          %s335 = scalar_lea.vmem %s0, %s334
          %p336 = scmp.eq.s32.totalorder %s29, 0
          %s337 = scalar_select %p336, %s30, 0
        $region48: #{tpu_custom_call.1} parent=43 // pred_fallthru
          _
        // Predicated region
        $region49: #{tpu_custom_call.1} parent=43 // pred_check
          %p338 = pneg %p98
        $region50: #{tpu_custom_call.1} parent=43 // pred_check_branch
          %340 = sbr.rel (%p338) target = $region52
        $region51: #{tpu_custom_call.1} parent=43 // pred_region
          %s341 = sand.u32 %s88, 1
          %s342 = scalar_lea.sflag [#allocation11], %s341
          %s343 = sand.u32 %s88, 1
          %s344 = smul.addr %s343, 256
          %s345 = scalar_lea.vmem [#allocation10], %s344
          %p346 = scmp.eq.s32.totalorder %s29, 0
          %s347 = scalar_select %p346, %s30, 0
          %s349 = ssub.s32 4096, 4096
          %350 = vsyncadd %s342, %s349
          %s351 = smul.addr %s28, 32
          %s352 = sadd.s32 %s347, %s351
          %s353 = smul.addr %s352, 128
          %s354 = scalar_lea.hbm %s1, %s353
          %s355 = sshll.u32 %s345, 4
          %s356 = int_to_ptr.vmem [resolvable:$true] %s355
          %361 = dma.hbm_to_vmem [thread:$0]  %s354, 4096, %s356, %s342, 128, 128, 8
        $region52: #{tpu_custom_call.1} parent=43 // pred_fallthru
          _
      $region44: #{tpu_custom_call.1} parent=5 // pred_fallthru
        _
      %p362 = scmp.le.s32.totalorder 1, %s21
      %p363 = scmp.lt.s32.totalorder %s21, 7
      %p364 = pnand %p362, %p363
      %p365 = pneg %p364
      // Predicated region
      $region53: #{tpu_custom_call.1} parent=5 // pred_check
        _
      $region54: #{tpu_custom_call.1} parent=5 // pred_check_branch
        %367 = sbr.rel (%p364) target = $region56
      $region55: #{tpu_custom_call.1} parent=5 // pred_region
        %s368 = ssub.s32 %s21, 1
        %s369 = sand.u32 %s91, 1
        %s370 = scalar_lea.sflag [#allocation11], %s369
        %s371 = sand.u32 %s91, 1
        %s372 = smul.addr %s371, 256
        %s373 = scalar_lea.vmem [#allocation10], %s372
        // Predicated region
        $region57: #{tpu_custom_call.1} parent=55 // pred_check
          %p374 = pneg %p104
        $region58: #{tpu_custom_call.1} parent=55 // pred_check_branch
          %376 = sbr.rel (%p374) target = $region60
        $region59: #{tpu_custom_call.1} parent=55 // pred_region
          %377 = dma.done %s370, 4096
        $region60: #{tpu_custom_call.1} parent=55 // pred_fallthru
          _
        %p378 = scmp.eq.s32.totalorder %s32, 0
        %s379 = scalar_select %p378, %s33, 0
        %p380 = scmp.lt.s32.totalorder %s31, 1
        %s381 = scalar_select %p380, %s31, 1
        %p382 = scmp.lt.s32.totalorder %s379, 0
        %s383 = scalar_select %p382, %s379, 0
        %s384 = smul.addr %s381, 32
        %s385 = sadd.s32 %s383, %s384
        %s386 = smul.addr %s385, 8
        %s387 = scalar_lea.vmem %s0, %s386
        %p388 = pneg %p72
        %p389 = pneg %p69
        %s390 = sand.u32 %s91, 1
        %s391 = scalar_lea.sflag [#allocation11], %s390
        %s392 = sand.u32 %s91, 1
        %s393 = smul.addr %s392, 256
        %s394 = scalar_lea.vmem [#allocation10], %s393
        %p395 = pneg %p104
        %p396 = pneg %p101
        %p397 = pneg %p125
        %p398 = pneg %p122
        %p399 = pneg %p146
        %p400 = pneg %p143
        %p401 = pneg %p167
        %p402 = pneg %p164
        %p403 = pneg %p188
        %p404 = pneg %p185
        %p405 = pneg %p209
        %p406 = pneg %p206
        %p407 = pneg %p230
        %p408 = pneg %p227
        %p409 = pneg %p251
        %p410 = pneg %p248
        %p411 = pneg %p283
        %p412 = pneg %p280
        %s413 = sand.u32 %s270, 1
        %s414 = scalar_lea.sflag [#allocation12], %s413
        %s415 = sand.u32 %s270, 1
        %s416 = smul.addr %s415, 256
        %s417 = scalar_lea.vmem [#allocation13], %s416
        %p418 = scmp.eq.s32.totalorder %s32, 0
        %s419 = scalar_select %p418, %s33, 0
        %p420 = scmp.lt.s32.totalorder %s31, 1
        %s421 = scalar_select %p420, %s31, 1
        %p422 = scmp.lt.s32.totalorder %s419, 0
        %s423 = scalar_select %p422, %s419, 0
        %s424 = smul.addr %s421, 32
        %s425 = sadd.s32 %s423, %s424
        %s426 = smul.addr %s425, 8
        %s427 = scalar_lea.vmem %s0, %s426
        %p428 = scmp.eq.s32.totalorder %s32, 0
        %s429 = scalar_select %p428, %s33, 0
        %p430 = scmp.eq.s32.totalorder %s32, 0
        %s431 = scalar_select %p430, %s33, 0
        %p432 = scmp.eq.s32.totalorder %s32, 2
        %s433 = scalar_select %p432, %s33, 0
        %s437 = smul.u32 %s33, 128
        %p438 = scmp.eq.s32.totalorder %s32, 0
        // Predicated region
        $region61: #{tpu_custom_call.1} parent=55 // pred_check
          %p439 = pneg %p438
        $region62: #{tpu_custom_call.1} parent=55 // pred_check_branch
          %441 = sbr.rel (%p439) target = $region64
        $region63: #{tpu_custom_call.1} parent=55 // pred_region
          %p442 = scmp.eq.s32.totalorder %s33, 0
          // Predicated region
          $region65: #{tpu_custom_call.1} parent=63 // pred_check
            %p443 = pneg %p442
          $region66: #{tpu_custom_call.1} parent=63 // pred_check_branch
            %445 = sbr.rel (%p443) target = $region68
          $region67: #{tpu_custom_call.1} parent=63 // pred_region
            %vm446 = vcmask 7168
            %447 = vst.msk [vmem:[#allocation2] sm:$0xff] %vm446, 0.0
            %448 = vst.msk [vmem:[#allocation2 + $0x8] sm:$0xff] %vm446, 0.0
            %449 = vst.msk [vmem:[#allocation2 + $0x10] sm:$0xff] %vm446, 0.0
            %450 = vst.msk [vmem:[#allocation2 + $0x18] sm:$0xff] %vm446, 0.0
            %451 = vst.msk [vmem:[#allocation2 + $0x20] sm:$0xff] %vm446, 0.0
            %452 = vst.msk [vmem:[#allocation2 + $0x28] sm:$0xff] %vm446, 0.0
            %453 = vst.msk [vmem:[#allocation2 + $0x30] sm:$0xff] %vm446, 0.0
            %454 = vst.msk [vmem:[#allocation2 + $0x38] sm:$0xff] %vm446, 0.0
            %455 = vst.msk [vmem:[#allocation2 + $0x40] sm:$0xff] %vm446, 0.0
            %456 = vst.msk [vmem:[#allocation2 + $0x48] sm:$0xff] %vm446, 0.0
            %457 = vst.msk [vmem:[#allocation2 + $0x50] sm:$0xff] %vm446, 0.0
            %458 = vst.msk [vmem:[#allocation2 + $0x58] sm:$0xff] %vm446, 0.0
            %459 = vst.msk [vmem:[#allocation2 + $0x60] sm:$0xff] %vm446, 0.0
            %460 = vst.msk [vmem:[#allocation2 + $0x68] sm:$0xff] %vm446, 0.0
            %461 = vst.msk [vmem:[#allocation2 + $0x70] sm:$0xff] %vm446, 0.0
            %462 = vst.msk [vmem:[#allocation2 + $0x78] sm:$0xff] %vm446, 0.0
            %463 = vst.msk [vmem:[#allocation2 + $0x80] sm:$0xff] %vm446, 0.0
            %464 = vst.msk [vmem:[#allocation2 + $0x88] sm:$0xff] %vm446, 0.0
            %465 = vst.msk [vmem:[#allocation2 + $0x90] sm:$0xff] %vm446, 0.0
            %466 = vst.msk [vmem:[#allocation2 + $0x98] sm:$0xff] %vm446, 0.0
            %467 = vst.msk [vmem:[#allocation2 + $0xa0] sm:$0xff] %vm446, 0.0
            %468 = vst.msk [vmem:[#allocation2 + $0xa8] sm:$0xff] %vm446, 0.0
            %469 = vst.msk [vmem:[#allocation2 + $0xb0] sm:$0xff] %vm446, 0.0
            %470 = vst.msk [vmem:[#allocation2 + $0xb8] sm:$0xff] %vm446, 0.0
            %471 = vst.msk [vmem:[#allocation2 + $0xc0] sm:$0xff] %vm446, 0.0
            %472 = vst.msk [vmem:[#allocation2 + $0xc8] sm:$0xff] %vm446, 0.0
            %473 = vst.msk [vmem:[#allocation2 + $0xd0] sm:$0xff] %vm446, 0.0
            %474 = vst.msk [vmem:[#allocation2 + $0xd8] sm:$0xff] %vm446, 0.0
            %475 = vst.msk [vmem:[#allocation2 + $0xe0] sm:$0xff] %vm446, 0.0
            %476 = vst.msk [vmem:[#allocation2 + $0xe8] sm:$0xff] %vm446, 0.0
            %477 = vst.msk [vmem:[#allocation2 + $0xf0] sm:$0xff] %vm446, 0.0
            %478 = vst.msk [vmem:[#allocation2 + $0xf8] sm:$0xff] %vm446, 0.0
            %479 = vst.msk [vmem:[#allocation3] sm:$0xff] %vm446, 0.0
            %480 = vst.msk [vmem:[#allocation3 + $0x8] sm:$0xff] %vm446, 0.0
            %481 = vst.msk [vmem:[#allocation3 + $0x10] sm:$0xff] %vm446, 0.0
            %482 = vst.msk [vmem:[#allocation3 + $0x18] sm:$0xff] %vm446, 0.0
            %483 = vst.msk [vmem:[#allocation3 + $0x20] sm:$0xff] %vm446, 0.0
            %484 = vst.msk [vmem:[#allocation3 + $0x28] sm:$0xff] %vm446, 0.0
            %485 = vst.msk [vmem:[#allocation3 + $0x30] sm:$0xff] %vm446, 0.0
            %486 = vst.msk [vmem:[#allocation3 + $0x38] sm:$0xff] %vm446, 0.0
            %487 = vst.msk [vmem:[#allocation3 + $0x40] sm:$0xff] %vm446, 0.0
            %488 = vst.msk [vmem:[#allocation3 + $0x48] sm:$0xff] %vm446, 0.0
            %489 = vst.msk [vmem:[#allocation3 + $0x50] sm:$0xff] %vm446, 0.0
            %490 = vst.msk [vmem:[#allocation3 + $0x58] sm:$0xff] %vm446, 0.0
            %491 = vst.msk [vmem:[#allocation3 + $0x60] sm:$0xff] %vm446, 0.0
            %492 = vst.msk [vmem:[#allocation3 + $0x68] sm:$0xff] %vm446, 0.0
            %493 = vst.msk [vmem:[#allocation3 + $0x70] sm:$0xff] %vm446, 0.0
            %494 = vst.msk [vmem:[#allocation3 + $0x78] sm:$0xff] %vm446, 0.0
            %495 = vst.msk [vmem:[#allocation3 + $0x80] sm:$0xff] %vm446, 0.0
            %496 = vst.msk [vmem:[#allocation3 + $0x88] sm:$0xff] %vm446, 0.0
            %497 = vst.msk [vmem:[#allocation3 + $0x90] sm:$0xff] %vm446, 0.0
            %498 = vst.msk [vmem:[#allocation3 + $0x98] sm:$0xff] %vm446, 0.0
            %499 = vst.msk [vmem:[#allocation3 + $0xa0] sm:$0xff] %vm446, 0.0
            %500 = vst.msk [vmem:[#allocation3 + $0xa8] sm:$0xff] %vm446, 0.0
            %501 = vst.msk [vmem:[#allocation3 + $0xb0] sm:$0xff] %vm446, 0.0
            %502 = vst.msk [vmem:[#allocation3 + $0xb8] sm:$0xff] %vm446, 0.0
            %503 = vst.msk [vmem:[#allocation3 + $0xc0] sm:$0xff] %vm446, 0.0
            %504 = vst.msk [vmem:[#allocation3 + $0xc8] sm:$0xff] %vm446, 0.0
            %505 = vst.msk [vmem:[#allocation3 + $0xd0] sm:$0xff] %vm446, 0.0
            %506 = vst.msk [vmem:[#allocation3 + $0xd8] sm:$0xff] %vm446, 0.0
            %507 = vst.msk [vmem:[#allocation3 + $0xe0] sm:$0xff] %vm446, 0.0
            %508 = vst.msk [vmem:[#allocation3 + $0xe8] sm:$0xff] %vm446, 0.0
            %509 = vst.msk [vmem:[#allocation3 + $0xf0] sm:$0xff] %vm446, 0.0
            %510 = vst.msk [vmem:[#allocation3 + $0xf8] sm:$0xff] %vm446, 0.0
            %511 = vst.msk [vmem:[#allocation4] sm:$0xff] %vm446, 0.0
            %512 = vst.msk [vmem:[#allocation4 + $0x8] sm:$0xff] %vm446, 0.0
            %513 = vst.msk [vmem:[#allocation4 + $0x10] sm:$0xff] %vm446, 0.0
            %514 = vst.msk [vmem:[#allocation4 + $0x18] sm:$0xff] %vm446, 0.0
            %515 = vst.msk [vmem:[#allocation4 + $0x20] sm:$0xff] %vm446, 0.0
            %516 = vst.msk [vmem:[#allocation4 + $0x28] sm:$0xff] %vm446, 0.0
            %517 = vst.msk [vmem:[#allocation4 + $0x30] sm:$0xff] %vm446, 0.0
            %518 = vst.msk [vmem:[#allocation4 + $0x38] sm:$0xff] %vm446, 0.0
            %519 = vst.msk [vmem:[#allocation4 + $0x40] sm:$0xff] %vm446, 0.0
            %520 = vst.msk [vmem:[#allocation4 + $0x48] sm:$0xff] %vm446, 0.0
            %521 = vst.msk [vmem:[#allocation4 + $0x50] sm:$0xff] %vm446, 0.0
            %522 = vst.msk [vmem:[#allocation4 + $0x58] sm:$0xff] %vm446, 0.0
            %523 = vst.msk [vmem:[#allocation4 + $0x60] sm:$0xff] %vm446, 0.0
            %524 = vst.msk [vmem:[#allocation4 + $0x68] sm:$0xff] %vm446, 0.0
            %525 = vst.msk [vmem:[#allocation4 + $0x70] sm:$0xff] %vm446, 0.0
            %526 = vst.msk [vmem:[#allocation4 + $0x78] sm:$0xff] %vm446, 0.0
            %527 = vst.msk [vmem:[#allocation4 + $0x80] sm:$0xff] %vm446, 0.0
            %528 = vst.msk [vmem:[#allocation4 + $0x88] sm:$0xff] %vm446, 0.0
            %529 = vst.msk [vmem:[#allocation4 + $0x90] sm:$0xff] %vm446, 0.0
            %530 = vst.msk [vmem:[#allocation4 + $0x98] sm:$0xff] %vm446, 0.0
            %531 = vst.msk [vmem:[#allocation4 + $0xa0] sm:$0xff] %vm446, 0.0
            %532 = vst.msk [vmem:[#allocation4 + $0xa8] sm:$0xff] %vm446, 0.0
            %533 = vst.msk [vmem:[#allocation4 + $0xb0] sm:$0xff] %vm446, 0.0
            %534 = vst.msk [vmem:[#allocation4 + $0xb8] sm:$0xff] %vm446, 0.0
            %535 = vst.msk [vmem:[#allocation4 + $0xc0] sm:$0xff] %vm446, 0.0
            %536 = vst.msk [vmem:[#allocation4 + $0xc8] sm:$0xff] %vm446, 0.0
            %537 = vst.msk [vmem:[#allocation4 + $0xd0] sm:$0xff] %vm446, 0.0
            %538 = vst.msk [vmem:[#allocation4 + $0xd8] sm:$0xff] %vm446, 0.0
            %539 = vst.msk [vmem:[#allocation4 + $0xe0] sm:$0xff] %vm446, 0.0
            %540 = vst.msk [vmem:[#allocation4 + $0xe8] sm:$0xff] %vm446, 0.0
            %541 = vst.msk [vmem:[#allocation4 + $0xf0] sm:$0xff] %vm446, 0.0
            %542 = vst.msk [vmem:[#allocation4 + $0xf8] sm:$0xff] %vm446, 0.0
          $region68: #{tpu_custom_call.1} parent=63 // pred_fallthru
            _
          %v543 = vld [vmem:[%s427] sm:$0xff]
          %v544 = vld [vmem:[%s427 + $0x8] sm:$0xff]
          %v545 = vld [vmem:[%s427 + $0x10] sm:$0xff]
          %v546 = vld [vmem:[%s427 + $0x18] sm:$0xff]
          %v547 = vld [vmem:[%s427 + $0x20] sm:$0xff]
          %v548 = vld [vmem:[%s427 + $0x28] sm:$0xff]
          %v549 = vld [vmem:[%s427 + $0x30] sm:$0xff]
          %v550 = vld [vmem:[%s427 + $0x38] sm:$0xff]
          %v551 = vld [vmem:[%s427 + $0x40] sm:$0xff]
          %v552 = vld [vmem:[%s427 + $0x48] sm:$0xff]
          %v553 = vld [vmem:[%s427 + $0x50] sm:$0xff]
          %v554 = vld [vmem:[%s427 + $0x58] sm:$0xff]
          %v555 = vld [vmem:[%s427 + $0x60] sm:$0xff]
          %v556 = vld [vmem:[%s427 + $0x68] sm:$0xff]
          %v557 = vld [vmem:[%s427 + $0x70] sm:$0xff]
          %v558 = vld [vmem:[%s427 + $0x78] sm:$0xff]
          %v559 = vld [vmem:[%s427 + $0x80] sm:$0xff]
          %v560 = vld [vmem:[%s427 + $0x88] sm:$0xff]
          %v561 = vld [vmem:[%s427 + $0x90] sm:$0xff]
          %v562 = vld [vmem:[%s427 + $0x98] sm:$0xff]
          %v563 = vld [vmem:[%s427 + $0xa0] sm:$0xff]
          %v564 = vld [vmem:[%s427 + $0xa8] sm:$0xff]
          %v565 = vld [vmem:[%s427 + $0xb0] sm:$0xff]
          %v566 = vld [vmem:[%s427 + $0xb8] sm:$0xff]
          %v567 = vld [vmem:[%s427 + $0xc0] sm:$0xff]
          %v568 = vld [vmem:[%s427 + $0xc8] sm:$0xff]
          %v569 = vld [vmem:[%s427 + $0xd0] sm:$0xff]
          %v570 = vld [vmem:[%s427 + $0xd8] sm:$0xff]
          %v571 = vld [vmem:[%s427 + $0xe0] sm:$0xff]
          %v572 = vld [vmem:[%s427 + $0xe8] sm:$0xff]
          %v573 = vld [vmem:[%s427 + $0xf0] sm:$0xff]
          %v574 = vld [vmem:[%s427 + $0xf8] sm:$0xff]
          %v575 = vld [vmem:[%s373] sm:$0xff]
          %v576 = vld [vmem:[%s373 + $0x8] sm:$0xff]
          %v577 = vld [vmem:[%s373 + $0x10] sm:$0xff]
          %v578 = vld [vmem:[%s373 + $0x18] sm:$0xff]
          %v579 = vld [vmem:[%s373 + $0x20] sm:$0xff]
          %v580 = vld [vmem:[%s373 + $0x28] sm:$0xff]
          %v581 = vld [vmem:[%s373 + $0x30] sm:$0xff]
          %v582 = vld [vmem:[%s373 + $0x38] sm:$0xff]
          %v583 = vld [vmem:[%s373 + $0x40] sm:$0xff]
          %v584 = vld [vmem:[%s373 + $0x48] sm:$0xff]
          %v585 = vld [vmem:[%s373 + $0x50] sm:$0xff]
          %v586 = vld [vmem:[%s373 + $0x58] sm:$0xff]
          %v587 = vld [vmem:[%s373 + $0x60] sm:$0xff]
          %v588 = vld [vmem:[%s373 + $0x68] sm:$0xff]
          %v589 = vld [vmem:[%s373 + $0x70] sm:$0xff]
          %v590 = vld [vmem:[%s373 + $0x78] sm:$0xff]
          %v591 = vld [vmem:[%s373 + $0x80] sm:$0xff]
          %v592 = vld [vmem:[%s373 + $0x88] sm:$0xff]
          %v593 = vld [vmem:[%s373 + $0x90] sm:$0xff]
          %v594 = vld [vmem:[%s373 + $0x98] sm:$0xff]
          %v595 = vld [vmem:[%s373 + $0xa0] sm:$0xff]
          %v596 = vld [vmem:[%s373 + $0xa8] sm:$0xff]
          %v597 = vld [vmem:[%s373 + $0xb0] sm:$0xff]
          %v598 = vld [vmem:[%s373 + $0xb8] sm:$0xff]
          %v599 = vld [vmem:[%s373 + $0xc0] sm:$0xff]
          %v600 = vld [vmem:[%s373 + $0xc8] sm:$0xff]
          %v601 = vld [vmem:[%s373 + $0xd0] sm:$0xff]
          %v602 = vld [vmem:[%s373 + $0xd8] sm:$0xff]
          %v603 = vld [vmem:[%s373 + $0xe0] sm:$0xff]
          %v604 = vld [vmem:[%s373 + $0xe8] sm:$0xff]
          %v605 = vld [vmem:[%s373 + $0xf0] sm:$0xff]
          %v606 = vld [vmem:[%s373 + $0xf8] sm:$0xff]
          %v607 = vld [vmem:[#allocation2] sm:$0xff]
          %v608 = vld [vmem:[#allocation2 + $0x8] sm:$0xff]
          %v609 = vld [vmem:[#allocation2 + $0x10] sm:$0xff]
          %v610 = vld [vmem:[#allocation2 + $0x18] sm:$0xff]
          %v611 = vld [vmem:[#allocation2 + $0x20] sm:$0xff]
          %v612 = vld [vmem:[#allocation2 + $0x28] sm:$0xff]
          %v613 = vld [vmem:[#allocation2 + $0x30] sm:$0xff]
          %v614 = vld [vmem:[#allocation2 + $0x38] sm:$0xff]
          %v615 = vld [vmem:[#allocation2 + $0x40] sm:$0xff]
          %v616 = vld [vmem:[#allocation2 + $0x48] sm:$0xff]
          %v617 = vld [vmem:[#allocation2 + $0x50] sm:$0xff]
          %v618 = vld [vmem:[#allocation2 + $0x58] sm:$0xff]
          %v619 = vld [vmem:[#allocation2 + $0x60] sm:$0xff]
          %v620 = vld [vmem:[#allocation2 + $0x68] sm:$0xff]
          %v621 = vld [vmem:[#allocation2 + $0x70] sm:$0xff]
          %v622 = vld [vmem:[#allocation2 + $0x78] sm:$0xff]
          %v623 = vld [vmem:[#allocation2 + $0x80] sm:$0xff]
          %v624 = vld [vmem:[#allocation2 + $0x88] sm:$0xff]
          %v625 = vld [vmem:[#allocation2 + $0x90] sm:$0xff]
          %v626 = vld [vmem:[#allocation2 + $0x98] sm:$0xff]
          %v627 = vld [vmem:[#allocation2 + $0xa0] sm:$0xff]
          %v628 = vld [vmem:[#allocation2 + $0xa8] sm:$0xff]
          %v629 = vld [vmem:[#allocation2 + $0xb0] sm:$0xff]
          %v630 = vld [vmem:[#allocation2 + $0xb8] sm:$0xff]
          %v631 = vld [vmem:[#allocation2 + $0xc0] sm:$0xff]
          %v632 = vld [vmem:[#allocation2 + $0xc8] sm:$0xff]
          %v633 = vld [vmem:[#allocation2 + $0xd0] sm:$0xff]
          %v634 = vld [vmem:[#allocation2 + $0xd8] sm:$0xff]
          %v635 = vld [vmem:[#allocation2 + $0xe0] sm:$0xff]
          %v636 = vld [vmem:[#allocation2 + $0xe8] sm:$0xff]
          %v637 = vld [vmem:[#allocation2 + $0xf0] sm:$0xff]
          %v638 = vld [vmem:[#allocation2 + $0xf8] sm:$0xff]
          %639 = vadd.xlane.f32.xlu0 %v543
          %v640 = vpop.xlane.xlu0 %639
          %641 = vadd.xlane.f32.xlu0 %v544
          %v642 = vpop.xlane.xlu0 %641
          %643 = vadd.xlane.f32.xlu0 %v545
          %v644 = vpop.xlane.xlu0 %643
          %645 = vadd.xlane.f32.xlu0 %v546
          %v646 = vpop.xlane.xlu0 %645
          %647 = vadd.xlane.f32.xlu0 %v547
          %v648 = vpop.xlane.xlu0 %647
          %649 = vadd.xlane.f32.xlu0 %v548
          %v650 = vpop.xlane.xlu0 %649
          %651 = vadd.xlane.f32.xlu0 %v549
          %v652 = vpop.xlane.xlu0 %651
          %653 = vadd.xlane.f32.xlu0 %v550
          %v654 = vpop.xlane.xlu0 %653
          %655 = vadd.xlane.f32.xlu0 %v551
          %v656 = vpop.xlane.xlu0 %655
          %657 = vadd.xlane.f32.xlu0 %v552
          %v658 = vpop.xlane.xlu0 %657
          %659 = vadd.xlane.f32.xlu0 %v553
          %v660 = vpop.xlane.xlu0 %659
          %661 = vadd.xlane.f32.xlu0 %v554
          %v662 = vpop.xlane.xlu0 %661
          %663 = vadd.xlane.f32.xlu0 %v555
          %v664 = vpop.xlane.xlu0 %663
          %665 = vadd.xlane.f32.xlu0 %v556
          %v666 = vpop.xlane.xlu0 %665
          %667 = vadd.xlane.f32.xlu0 %v557
          %v668 = vpop.xlane.xlu0 %667
          %669 = vadd.xlane.f32.xlu0 %v558
          %v670 = vpop.xlane.xlu0 %669
          %671 = vadd.xlane.f32.xlu0 %v559
          %v672 = vpop.xlane.xlu0 %671
          %673 = vadd.xlane.f32.xlu0 %v560
          %v674 = vpop.xlane.xlu0 %673
          %675 = vadd.xlane.f32.xlu0 %v561
          %v676 = vpop.xlane.xlu0 %675
          %677 = vadd.xlane.f32.xlu0 %v562
          %v678 = vpop.xlane.xlu0 %677
          %679 = vadd.xlane.f32.xlu0 %v563
          %v680 = vpop.xlane.xlu0 %679
          %681 = vadd.xlane.f32.xlu0 %v564
          %v682 = vpop.xlane.xlu0 %681
          %683 = vadd.xlane.f32.xlu0 %v565
          %v684 = vpop.xlane.xlu0 %683
          %685 = vadd.xlane.f32.xlu0 %v566
          %v686 = vpop.xlane.xlu0 %685
          %687 = vadd.xlane.f32.xlu0 %v567
          %v688 = vpop.xlane.xlu0 %687
          %689 = vadd.xlane.f32.xlu0 %v568
          %v690 = vpop.xlane.xlu0 %689
          %691 = vadd.xlane.f32.xlu0 %v569
          %v692 = vpop.xlane.xlu0 %691
          %693 = vadd.xlane.f32.xlu0 %v570
          %v694 = vpop.xlane.xlu0 %693
          %695 = vadd.xlane.f32.xlu0 %v571
          %v696 = vpop.xlane.xlu0 %695
          %697 = vadd.xlane.f32.xlu0 %v572
          %v698 = vpop.xlane.xlu0 %697
          %699 = vadd.xlane.f32.xlu0 %v573
          %v700 = vpop.xlane.xlu0 %699
          %701 = vadd.xlane.f32.xlu0 %v574
          %v702 = vpop.xlane.xlu0 %701
          %v703 = vadd.f32 %v607, %v640
          %v704 = vadd.f32 %v608, %v642
          %v705 = vadd.f32 %v609, %v644
          %v706 = vadd.f32 %v610, %v646
          %v707 = vadd.f32 %v611, %v648
          %v708 = vadd.f32 %v612, %v650
          %v709 = vadd.f32 %v613, %v652
          %v710 = vadd.f32 %v614, %v654
          %v711 = vadd.f32 %v615, %v656
          %v712 = vadd.f32 %v616, %v658
          %v713 = vadd.f32 %v617, %v660
          %v714 = vadd.f32 %v618, %v662
          %v715 = vadd.f32 %v619, %v664
          %v716 = vadd.f32 %v620, %v666
          %v717 = vadd.f32 %v621, %v668
          %v718 = vadd.f32 %v622, %v670
          %v719 = vadd.f32 %v623, %v672
          %v720 = vadd.f32 %v624, %v674
          %v721 = vadd.f32 %v625, %v676
          %v722 = vadd.f32 %v626, %v678
          %v723 = vadd.f32 %v627, %v680
          %v724 = vadd.f32 %v628, %v682
          %v725 = vadd.f32 %v629, %v684
          %v726 = vadd.f32 %v630, %v686
          %v727 = vadd.f32 %v631, %v688
          %v728 = vadd.f32 %v632, %v690
          %v729 = vadd.f32 %v633, %v692
          %v730 = vadd.f32 %v634, %v694
          %v731 = vadd.f32 %v635, %v696
          %v732 = vadd.f32 %v636, %v698
          %v733 = vadd.f32 %v637, %v700
          %v734 = vadd.f32 %v638, %v702
          %vm735 = vcmask 7168
          %736 = vst.msk [vmem:[#allocation2] sm:$0xff] %vm735, %v703
          %737 = vst.msk [vmem:[#allocation2 + $0x8] sm:$0xff] %vm735, %v704
          %738 = vst.msk [vmem:[#allocation2 + $0x10] sm:$0xff] %vm735, %v705
          %739 = vst.msk [vmem:[#allocation2 + $0x18] sm:$0xff] %vm735, %v706
          %740 = vst.msk [vmem:[#allocation2 + $0x20] sm:$0xff] %vm735, %v707
          %741 = vst.msk [vmem:[#allocation2 + $0x28] sm:$0xff] %vm735, %v708
          %742 = vst.msk [vmem:[#allocation2 + $0x30] sm:$0xff] %vm735, %v709
          %743 = vst.msk [vmem:[#allocation2 + $0x38] sm:$0xff] %vm735, %v710
          %744 = vst.msk [vmem:[#allocation2 + $0x40] sm:$0xff] %vm735, %v711
          %745 = vst.msk [vmem:[#allocation2 + $0x48] sm:$0xff] %vm735, %v712
          %746 = vst.msk [vmem:[#allocation2 + $0x50] sm:$0xff] %vm735, %v713
          %747 = vst.msk [vmem:[#allocation2 + $0x58] sm:$0xff] %vm735, %v714
          %748 = vst.msk [vmem:[#allocation2 + $0x60] sm:$0xff] %vm735, %v715
          %749 = vst.msk [vmem:[#allocation2 + $0x68] sm:$0xff] %vm735, %v716
          %750 = vst.msk [vmem:[#allocation2 + $0x70] sm:$0xff] %vm735, %v717
          %751 = vst.msk [vmem:[#allocation2 + $0x78] sm:$0xff] %vm735, %v718
          %752 = vst.msk [vmem:[#allocation2 + $0x80] sm:$0xff] %vm735, %v719
          %753 = vst.msk [vmem:[#allocation2 + $0x88] sm:$0xff] %vm735, %v720
          %754 = vst.msk [vmem:[#allocation2 + $0x90] sm:$0xff] %vm735, %v721
          %755 = vst.msk [vmem:[#allocation2 + $0x98] sm:$0xff] %vm735, %v722
          %756 = vst.msk [vmem:[#allocation2 + $0xa0] sm:$0xff] %vm735, %v723
          %757 = vst.msk [vmem:[#allocation2 + $0xa8] sm:$0xff] %vm735, %v724
          %758 = vst.msk [vmem:[#allocation2 + $0xb0] sm:$0xff] %vm735, %v725
          %759 = vst.msk [vmem:[#allocation2 + $0xb8] sm:$0xff] %vm735, %v726
          %760 = vst.msk [vmem:[#allocation2 + $0xc0] sm:$0xff] %vm735, %v727
          %761 = vst.msk [vmem:[#allocation2 + $0xc8] sm:$0xff] %vm735, %v728
          %762 = vst.msk [vmem:[#allocation2 + $0xd0] sm:$0xff] %vm735, %v729
          %763 = vst.msk [vmem:[#allocation2 + $0xd8] sm:$0xff] %vm735, %v730
          %764 = vst.msk [vmem:[#allocation2 + $0xe0] sm:$0xff] %vm735, %v731
          %765 = vst.msk [vmem:[#allocation2 + $0xe8] sm:$0xff] %vm735, %v732
          %766 = vst.msk [vmem:[#allocation2 + $0xf0] sm:$0xff] %vm735, %v733
          %767 = vst.msk [vmem:[#allocation2 + $0xf8] sm:$0xff] %vm735, %v734
          %v768 = vld [vmem:[#allocation3] sm:$0xff]
          %v769 = vld [vmem:[#allocation3 + $0x8] sm:$0xff]
          %v770 = vld [vmem:[#allocation3 + $0x10] sm:$0xff]
          %v771 = vld [vmem:[#allocation3 + $0x18] sm:$0xff]
          %v772 = vld [vmem:[#allocation3 + $0x20] sm:$0xff]
          %v773 = vld [vmem:[#allocation3 + $0x28] sm:$0xff]
          %v774 = vld [vmem:[#allocation3 + $0x30] sm:$0xff]
          %v775 = vld [vmem:[#allocation3 + $0x38] sm:$0xff]
          %v776 = vld [vmem:[#allocation3 + $0x40] sm:$0xff]
          %v777 = vld [vmem:[#allocation3 + $0x48] sm:$0xff]
          %v778 = vld [vmem:[#allocation3 + $0x50] sm:$0xff]
          %v779 = vld [vmem:[#allocation3 + $0x58] sm:$0xff]
          %v780 = vld [vmem:[#allocation3 + $0x60] sm:$0xff]
          %v781 = vld [vmem:[#allocation3 + $0x68] sm:$0xff]
          %v782 = vld [vmem:[#allocation3 + $0x70] sm:$0xff]
          %v783 = vld [vmem:[#allocation3 + $0x78] sm:$0xff]
          %v784 = vld [vmem:[#allocation3 + $0x80] sm:$0xff]
          %v785 = vld [vmem:[#allocation3 + $0x88] sm:$0xff]
          %v786 = vld [vmem:[#allocation3 + $0x90] sm:$0xff]
          %v787 = vld [vmem:[#allocation3 + $0x98] sm:$0xff]
          %v788 = vld [vmem:[#allocation3 + $0xa0] sm:$0xff]
          %v789 = vld [vmem:[#allocation3 + $0xa8] sm:$0xff]
          %v790 = vld [vmem:[#allocation3 + $0xb0] sm:$0xff]
          %v791 = vld [vmem:[#allocation3 + $0xb8] sm:$0xff]
          %v792 = vld [vmem:[#allocation3 + $0xc0] sm:$0xff]
          %v793 = vld [vmem:[#allocation3 + $0xc8] sm:$0xff]
          %v794 = vld [vmem:[#allocation3 + $0xd0] sm:$0xff]
          %v795 = vld [vmem:[#allocation3 + $0xd8] sm:$0xff]
          %v796 = vld [vmem:[#allocation3 + $0xe0] sm:$0xff]
          %v797 = vld [vmem:[#allocation3 + $0xe8] sm:$0xff]
          %v798 = vld [vmem:[#allocation3 + $0xf0] sm:$0xff]
          %v799 = vld [vmem:[#allocation3 + $0xf8] sm:$0xff]
          %v800 = vmul.f32 %v543, %v543
          %v801 = vmul.f32 %v544, %v544
          %v802 = vmul.f32 %v545, %v545
          %v803 = vmul.f32 %v546, %v546
          %v804 = vmul.f32 %v547, %v547
          %v805 = vmul.f32 %v548, %v548
          %v806 = vmul.f32 %v549, %v549
          %v807 = vmul.f32 %v550, %v550
          %v808 = vmul.f32 %v551, %v551
          %v809 = vmul.f32 %v552, %v552
          %v810 = vmul.f32 %v553, %v553
          %v811 = vmul.f32 %v554, %v554
          %v812 = vmul.f32 %v555, %v555
          %v813 = vmul.f32 %v556, %v556
          %v814 = vmul.f32 %v557, %v557
          %v815 = vmul.f32 %v558, %v558
          %v816 = vmul.f32 %v559, %v559
          %v817 = vmul.f32 %v560, %v560
          %v818 = vmul.f32 %v561, %v561
          %v819 = vmul.f32 %v562, %v562
          %v820 = vmul.f32 %v563, %v563
          %v821 = vmul.f32 %v564, %v564
          %v822 = vmul.f32 %v565, %v565
          %v823 = vmul.f32 %v566, %v566
          %v824 = vmul.f32 %v567, %v567
          %v825 = vmul.f32 %v568, %v568
          %v826 = vmul.f32 %v569, %v569
          %v827 = vmul.f32 %v570, %v570
          %v828 = vmul.f32 %v571, %v571
          %v829 = vmul.f32 %v572, %v572
          %v830 = vmul.f32 %v573, %v573
          %v831 = vmul.f32 %v574, %v574
          %832 = vadd.xlane.f32.xlu0 %v800
          %v833 = vpop.xlane.xlu0 %832
          %834 = vadd.xlane.f32.xlu0 %v801
          %v835 = vpop.xlane.xlu0 %834
          %836 = vadd.xlane.f32.xlu0 %v802
          %v837 = vpop.xlane.xlu0 %836
          %838 = vadd.xlane.f32.xlu0 %v803
          %v839 = vpop.xlane.xlu0 %838
          %840 = vadd.xlane.f32.xlu0 %v804
          %v841 = vpop.xlane.xlu0 %840
          %842 = vadd.xlane.f32.xlu0 %v805
          %v843 = vpop.xlane.xlu0 %842
          %844 = vadd.xlane.f32.xlu0 %v806
          %v845 = vpop.xlane.xlu0 %844
          %846 = vadd.xlane.f32.xlu0 %v807
          %v847 = vpop.xlane.xlu0 %846
          %848 = vadd.xlane.f32.xlu0 %v808
          %v849 = vpop.xlane.xlu0 %848
          %850 = vadd.xlane.f32.xlu0 %v809
          %v851 = vpop.xlane.xlu0 %850
          %852 = vadd.xlane.f32.xlu0 %v810
          %v853 = vpop.xlane.xlu0 %852
          %854 = vadd.xlane.f32.xlu0 %v811
          %v855 = vpop.xlane.xlu0 %854
          %856 = vadd.xlane.f32.xlu0 %v812
          %v857 = vpop.xlane.xlu0 %856
          %858 = vadd.xlane.f32.xlu0 %v813
          %v859 = vpop.xlane.xlu0 %858
          %860 = vadd.xlane.f32.xlu0 %v814
          %v861 = vpop.xlane.xlu0 %860
          %862 = vadd.xlane.f32.xlu0 %v815
          %v863 = vpop.xlane.xlu0 %862
          %864 = vadd.xlane.f32.xlu0 %v816
          %v865 = vpop.xlane.xlu0 %864
          %866 = vadd.xlane.f32.xlu0 %v817
          %v867 = vpop.xlane.xlu0 %866
          %868 = vadd.xlane.f32.xlu0 %v818
          %v869 = vpop.xlane.xlu0 %868
          %870 = vadd.xlane.f32.xlu0 %v819
          %v871 = vpop.xlane.xlu0 %870
          %872 = vadd.xlane.f32.xlu0 %v820
          %v873 = vpop.xlane.xlu0 %872
          %874 = vadd.xlane.f32.xlu0 %v821
          %v875 = vpop.xlane.xlu0 %874
          %876 = vadd.xlane.f32.xlu0 %v822
          %v877 = vpop.xlane.xlu0 %876
          %878 = vadd.xlane.f32.xlu0 %v823
          %v879 = vpop.xlane.xlu0 %878
          %880 = vadd.xlane.f32.xlu0 %v824
          %v881 = vpop.xlane.xlu0 %880
          %882 = vadd.xlane.f32.xlu0 %v825
          %v883 = vpop.xlane.xlu0 %882
          %884 = vadd.xlane.f32.xlu0 %v826
          %v885 = vpop.xlane.xlu0 %884
          %886 = vadd.xlane.f32.xlu0 %v827
          %v887 = vpop.xlane.xlu0 %886
          %888 = vadd.xlane.f32.xlu0 %v828
          %v889 = vpop.xlane.xlu0 %888
          %890 = vadd.xlane.f32.xlu0 %v829
          %v891 = vpop.xlane.xlu0 %890
          %892 = vadd.xlane.f32.xlu0 %v830
          %v893 = vpop.xlane.xlu0 %892
          %894 = vadd.xlane.f32.xlu0 %v831
          %v895 = vpop.xlane.xlu0 %894
          %v896 = vadd.f32 %v768, %v833
          %v897 = vadd.f32 %v769, %v835
          %v898 = vadd.f32 %v770, %v837
          %v899 = vadd.f32 %v771, %v839
          %v900 = vadd.f32 %v772, %v841
          %v901 = vadd.f32 %v773, %v843
          %v902 = vadd.f32 %v774, %v845
          %v903 = vadd.f32 %v775, %v847
          %v904 = vadd.f32 %v776, %v849
          %v905 = vadd.f32 %v777, %v851
          %v906 = vadd.f32 %v778, %v853
          %v907 = vadd.f32 %v779, %v855
          %v908 = vadd.f32 %v780, %v857
          %v909 = vadd.f32 %v781, %v859
          %v910 = vadd.f32 %v782, %v861
          %v911 = vadd.f32 %v783, %v863
          %v912 = vadd.f32 %v784, %v865
          %v913 = vadd.f32 %v785, %v867
          %v914 = vadd.f32 %v786, %v869
          %v915 = vadd.f32 %v787, %v871
          %v916 = vadd.f32 %v788, %v873
          %v917 = vadd.f32 %v789, %v875
          %v918 = vadd.f32 %v790, %v877
          %v919 = vadd.f32 %v791, %v879
          %v920 = vadd.f32 %v792, %v881
          %v921 = vadd.f32 %v793, %v883
          %v922 = vadd.f32 %v794, %v885
          %v923 = vadd.f32 %v795, %v887
          %v924 = vadd.f32 %v796, %v889
          %v925 = vadd.f32 %v797, %v891
          %v926 = vadd.f32 %v798, %v893
          %v927 = vadd.f32 %v799, %v895
          %928 = vst.msk [vmem:[#allocation3] sm:$0xff] %vm735, %v896
          %929 = vst.msk [vmem:[#allocation3 + $0x8] sm:$0xff] %vm735, %v897
          %930 = vst.msk [vmem:[#allocation3 + $0x10] sm:$0xff] %vm735, %v898
          %931 = vst.msk [vmem:[#allocation3 + $0x18] sm:$0xff] %vm735, %v899
          %932 = vst.msk [vmem:[#allocation3 + $0x20] sm:$0xff] %vm735, %v900
          %933 = vst.msk [vmem:[#allocation3 + $0x28] sm:$0xff] %vm735, %v901
          %934 = vst.msk [vmem:[#allocation3 + $0x30] sm:$0xff] %vm735, %v902
          %935 = vst.msk [vmem:[#allocation3 + $0x38] sm:$0xff] %vm735, %v903
          %936 = vst.msk [vmem:[#allocation3 + $0x40] sm:$0xff] %vm735, %v904
          %937 = vst.msk [vmem:[#allocation3 + $0x48] sm:$0xff] %vm735, %v905
          %938 = vst.msk [vmem:[#allocation3 + $0x50] sm:$0xff] %vm735, %v906
          %939 = vst.msk [vmem:[#allocation3 + $0x58] sm:$0xff] %vm735, %v907
          %940 = vst.msk [vmem:[#allocation3 + $0x60] sm:$0xff] %vm735, %v908
          %941 = vst.msk [vmem:[#allocation3 + $0x68] sm:$0xff] %vm735, %v909
          %942 = vst.msk [vmem:[#allocation3 + $0x70] sm:$0xff] %vm735, %v910
          %943 = vst.msk [vmem:[#allocation3 + $0x78] sm:$0xff] %vm735, %v911
          %944 = vst.msk [vmem:[#allocation3 + $0x80] sm:$0xff] %vm735, %v912
          %945 = vst.msk [vmem:[#allocation3 + $0x88] sm:$0xff] %vm735, %v913
          %946 = vst.msk [vmem:[#allocation3 + $0x90] sm:$0xff] %vm735, %v914
          %947 = vst.msk [vmem:[#allocation3 + $0x98] sm:$0xff] %vm735, %v915
          %948 = vst.msk [vmem:[#allocation3 + $0xa0] sm:$0xff] %vm735, %v916
          %949 = vst.msk [vmem:[#allocation3 + $0xa8] sm:$0xff] %vm735, %v917
          %950 = vst.msk [vmem:[#allocation3 + $0xb0] sm:$0xff] %vm735, %v918
          %951 = vst.msk [vmem:[#allocation3 + $0xb8] sm:$0xff] %vm735, %v919
          %952 = vst.msk [vmem:[#allocation3 + $0xc0] sm:$0xff] %vm735, %v920
          %953 = vst.msk [vmem:[#allocation3 + $0xc8] sm:$0xff] %vm735, %v921
          %954 = vst.msk [vmem:[#allocation3 + $0xd0] sm:$0xff] %vm735, %v922
          %955 = vst.msk [vmem:[#allocation3 + $0xd8] sm:$0xff] %vm735, %v923
          %956 = vst.msk [vmem:[#allocation3 + $0xe0] sm:$0xff] %vm735, %v924
          %957 = vst.msk [vmem:[#allocation3 + $0xe8] sm:$0xff] %vm735, %v925
          %958 = vst.msk [vmem:[#allocation3 + $0xf0] sm:$0xff] %vm735, %v926
          %959 = vst.msk [vmem:[#allocation3 + $0xf8] sm:$0xff] %vm735, %v927
          %v960 = vld [vmem:[#allocation4] sm:$0xff]
          %v961 = vld [vmem:[#allocation4 + $0x8] sm:$0xff]
          %v962 = vld [vmem:[#allocation4 + $0x10] sm:$0xff]
          %v963 = vld [vmem:[#allocation4 + $0x18] sm:$0xff]
          %v964 = vld [vmem:[#allocation4 + $0x20] sm:$0xff]
          %v965 = vld [vmem:[#allocation4 + $0x28] sm:$0xff]
          %v966 = vld [vmem:[#allocation4 + $0x30] sm:$0xff]
          %v967 = vld [vmem:[#allocation4 + $0x38] sm:$0xff]
          %v968 = vld [vmem:[#allocation4 + $0x40] sm:$0xff]
          %v969 = vld [vmem:[#allocation4 + $0x48] sm:$0xff]
          %v970 = vld [vmem:[#allocation4 + $0x50] sm:$0xff]
          %v971 = vld [vmem:[#allocation4 + $0x58] sm:$0xff]
          %v972 = vld [vmem:[#allocation4 + $0x60] sm:$0xff]
          %v973 = vld [vmem:[#allocation4 + $0x68] sm:$0xff]
          %v974 = vld [vmem:[#allocation4 + $0x70] sm:$0xff]
          %v975 = vld [vmem:[#allocation4 + $0x78] sm:$0xff]
          %v976 = vld [vmem:[#allocation4 + $0x80] sm:$0xff]
          %v977 = vld [vmem:[#allocation4 + $0x88] sm:$0xff]
          %v978 = vld [vmem:[#allocation4 + $0x90] sm:$0xff]
          %v979 = vld [vmem:[#allocation4 + $0x98] sm:$0xff]
          %v980 = vld [vmem:[#allocation4 + $0xa0] sm:$0xff]
          %v981 = vld [vmem:[#allocation4 + $0xa8] sm:$0xff]
          %v982 = vld [vmem:[#allocation4 + $0xb0] sm:$0xff]
          %v983 = vld [vmem:[#allocation4 + $0xb8] sm:$0xff]
          %v984 = vld [vmem:[#allocation4 + $0xc0] sm:$0xff]
          %v985 = vld [vmem:[#allocation4 + $0xc8] sm:$0xff]
          %v986 = vld [vmem:[#allocation4 + $0xd0] sm:$0xff]
          %v987 = vld [vmem:[#allocation4 + $0xd8] sm:$0xff]
          %v988 = vld [vmem:[#allocation4 + $0xe0] sm:$0xff]
          %v989 = vld [vmem:[#allocation4 + $0xe8] sm:$0xff]
          %v990 = vld [vmem:[#allocation4 + $0xf0] sm:$0xff]
          %v991 = vld [vmem:[#allocation4 + $0xf8] sm:$0xff]
          %992 = vadd.xlane.f32.xlu0 %v575
          %v993 = vpop.xlane.xlu0 %992
          %994 = vadd.xlane.f32.xlu0 %v576
          %v995 = vpop.xlane.xlu0 %994
          %996 = vadd.xlane.f32.xlu0 %v577
          %v997 = vpop.xlane.xlu0 %996
          %998 = vadd.xlane.f32.xlu0 %v578
          %v999 = vpop.xlane.xlu0 %998
          %1000 = vadd.xlane.f32.xlu0 %v579
          %v1001 = vpop.xlane.xlu0 %1000
          %1002 = vadd.xlane.f32.xlu0 %v580
          %v1003 = vpop.xlane.xlu0 %1002
          %1004 = vadd.xlane.f32.xlu0 %v581
          %v1005 = vpop.xlane.xlu0 %1004
          %1006 = vadd.xlane.f32.xlu0 %v582
          %v1007 = vpop.xlane.xlu0 %1006
          %1008 = vadd.xlane.f32.xlu0 %v583
          %v1009 = vpop.xlane.xlu0 %1008
          %1010 = vadd.xlane.f32.xlu0 %v584
          %v1011 = vpop.xlane.xlu0 %1010
          %1012 = vadd.xlane.f32.xlu0 %v585
          %v1013 = vpop.xlane.xlu0 %1012
          %1014 = vadd.xlane.f32.xlu0 %v586
          %v1015 = vpop.xlane.xlu0 %1014
          %1016 = vadd.xlane.f32.xlu0 %v587
          %v1017 = vpop.xlane.xlu0 %1016
          %1018 = vadd.xlane.f32.xlu0 %v588
          %v1019 = vpop.xlane.xlu0 %1018
          %1020 = vadd.xlane.f32.xlu0 %v589
          %v1021 = vpop.xlane.xlu0 %1020
          %1022 = vadd.xlane.f32.xlu0 %v590
          %v1023 = vpop.xlane.xlu0 %1022
          %1024 = vadd.xlane.f32.xlu0 %v591
          %v1025 = vpop.xlane.xlu0 %1024
          %1026 = vadd.xlane.f32.xlu0 %v592
          %v1027 = vpop.xlane.xlu0 %1026
          %1028 = vadd.xlane.f32.xlu0 %v593
          %v1029 = vpop.xlane.xlu0 %1028
          %1030 = vadd.xlane.f32.xlu0 %v594
          %v1031 = vpop.xlane.xlu0 %1030
          %1032 = vadd.xlane.f32.xlu0 %v595
          %v1033 = vpop.xlane.xlu0 %1032
          %1034 = vadd.xlane.f32.xlu0 %v596
          %v1035 = vpop.xlane.xlu0 %1034
          %1036 = vadd.xlane.f32.xlu0 %v597
          %v1037 = vpop.xlane.xlu0 %1036
          %1038 = vadd.xlane.f32.xlu0 %v598
          %v1039 = vpop.xlane.xlu0 %1038
          %1040 = vadd.xlane.f32.xlu0 %v599
          %v1041 = vpop.xlane.xlu0 %1040
          %1042 = vadd.xlane.f32.xlu0 %v600
          %v1043 = vpop.xlane.xlu0 %1042
          %1044 = vadd.xlane.f32.xlu0 %v601
          %v1045 = vpop.xlane.xlu0 %1044
          %1046 = vadd.xlane.f32.xlu0 %v602
          %v1047 = vpop.xlane.xlu0 %1046
          %1048 = vadd.xlane.f32.xlu0 %v603
          %v1049 = vpop.xlane.xlu0 %1048
          %1050 = vadd.xlane.f32.xlu0 %v604
          %v1051 = vpop.xlane.xlu0 %1050
          %1052 = vadd.xlane.f32.xlu0 %v605
          %v1053 = vpop.xlane.xlu0 %1052
          %1054 = vadd.xlane.f32.xlu0 %v606
          %v1055 = vpop.xlane.xlu0 %1054
          %v1056 = vadd.f32 %v960, %v993
          %v1057 = vadd.f32 %v961, %v995
          %v1058 = vadd.f32 %v962, %v997
          %v1059 = vadd.f32 %v963, %v999
          %v1060 = vadd.f32 %v964, %v1001
          %v1061 = vadd.f32 %v965, %v1003
          %v1062 = vadd.f32 %v966, %v1005
          %v1063 = vadd.f32 %v967, %v1007
          %v1064 = vadd.f32 %v968, %v1009
          %v1065 = vadd.f32 %v969, %v1011
          %v1066 = vadd.f32 %v970, %v1013
          %v1067 = vadd.f32 %v971, %v1015
          %v1068 = vadd.f32 %v972, %v1017
          %v1069 = vadd.f32 %v973, %v1019
          %v1070 = vadd.f32 %v974, %v1021
          %v1071 = vadd.f32 %v975, %v1023
          %v1072 = vadd.f32 %v976, %v1025
          %v1073 = vadd.f32 %v977, %v1027
          %v1074 = vadd.f32 %v978, %v1029
          %v1075 = vadd.f32 %v979, %v1031
          %v1076 = vadd.f32 %v980, %v1033
          %v1077 = vadd.f32 %v981, %v1035
          %v1078 = vadd.f32 %v982, %v1037
          %v1079 = vadd.f32 %v983, %v1039
          %v1080 = vadd.f32 %v984, %v1041
          %v1081 = vadd.f32 %v985, %v1043
          %v1082 = vadd.f32 %v986, %v1045
          %v1083 = vadd.f32 %v987, %v1047
          %v1084 = vadd.f32 %v988, %v1049
          %v1085 = vadd.f32 %v989, %v1051
          %v1086 = vadd.f32 %v990, %v1053
          %v1087 = vadd.f32 %v991, %v1055
          %1088 = vst.msk [vmem:[#allocation4] sm:$0xff] %vm735, %v1056
          %1089 = vst.msk [vmem:[#allocation4 + $0x8] sm:$0xff] %vm735, %v1057
          %1090 = vst.msk [vmem:[#allocation4 + $0x10] sm:$0xff] %vm735, %v1058
          %1091 = vst.msk [vmem:[#allocation4 + $0x18] sm:$0xff] %vm735, %v1059
          %1092 = vst.msk [vmem:[#allocation4 + $0x20] sm:$0xff] %vm735, %v1060
          %1093 = vst.msk [vmem:[#allocation4 + $0x28] sm:$0xff] %vm735, %v1061
          %1094 = vst.msk [vmem:[#allocation4 + $0x30] sm:$0xff] %vm735, %v1062
          %1095 = vst.msk [vmem:[#allocation4 + $0x38] sm:$0xff] %vm735, %v1063
          %1096 = vst.msk [vmem:[#allocation4 + $0x40] sm:$0xff] %vm735, %v1064
          %1097 = vst.msk [vmem:[#allocation4 + $0x48] sm:$0xff] %vm735, %v1065
          %1098 = vst.msk [vmem:[#allocation4 + $0x50] sm:$0xff] %vm735, %v1066
          %1099 = vst.msk [vmem:[#allocation4 + $0x58] sm:$0xff] %vm735, %v1067
          %1100 = vst.msk [vmem:[#allocation4 + $0x60] sm:$0xff] %vm735, %v1068
          %1101 = vst.msk [vmem:[#allocation4 + $0x68] sm:$0xff] %vm735, %v1069
          %1102 = vst.msk [vmem:[#allocation4 + $0x70] sm:$0xff] %vm735, %v1070
          %1103 = vst.msk [vmem:[#allocation4 + $0x78] sm:$0xff] %vm735, %v1071
          %1104 = vst.msk [vmem:[#allocation4 + $0x80] sm:$0xff] %vm735, %v1072
          %1105 = vst.msk [vmem:[#allocation4 + $0x88] sm:$0xff] %vm735, %v1073
          %1106 = vst.msk [vmem:[#allocation4 + $0x90] sm:$0xff] %vm735, %v1074
          %1107 = vst.msk [vmem:[#allocation4 + $0x98] sm:$0xff] %vm735, %v1075
          %1108 = vst.msk [vmem:[#allocation4 + $0xa0] sm:$0xff] %vm735, %v1076
          %1109 = vst.msk [vmem:[#allocation4 + $0xa8] sm:$0xff] %vm735, %v1077
          %1110 = vst.msk [vmem:[#allocation4 + $0xb0] sm:$0xff] %vm735, %v1078
          %1111 = vst.msk [vmem:[#allocation4 + $0xb8] sm:$0xff] %vm735, %v1079
          %1112 = vst.msk [vmem:[#allocation4 + $0xc0] sm:$0xff] %vm735, %v1080
          %1113 = vst.msk [vmem:[#allocation4 + $0xc8] sm:$0xff] %vm735, %v1081
          %1114 = vst.msk [vmem:[#allocation4 + $0xd0] sm:$0xff] %vm735, %v1082
          %1115 = vst.msk [vmem:[#allocation4 + $0xd8] sm:$0xff] %vm735, %v1083
          %1116 = vst.msk [vmem:[#allocation4 + $0xe0] sm:$0xff] %vm735, %v1084
          %1117 = vst.msk [vmem:[#allocation4 + $0xe8] sm:$0xff] %vm735, %v1085
          %1118 = vst.msk [vmem:[#allocation4 + $0xf0] sm:$0xff] %vm735, %v1086
          %1119 = vst.msk [vmem:[#allocation4 + $0xf8] sm:$0xff] %vm735, %v1087
          %s1120 = sshra.s32 %s437, 7
          %s1121 = sand.u32 %s437, 127
          %s1122 = scalar_lea.vmem [#allocation8], %s1120
          %1123 = vst [vmem:[%s1122] sm:$0xff] %v543
          %1124 = vst [vmem:[%s1122 + $0x8] sm:$0xff] %v544
          %1125 = vst [vmem:[%s1122 + $0x10] sm:$0xff] %v545
          %1126 = vst [vmem:[%s1122 + $0x18] sm:$0xff] %v546
          %1127 = vst [vmem:[%s1122 + $0x20] sm:$0xff] %v547
          %1128 = vst [vmem:[%s1122 + $0x28] sm:$0xff] %v548
          %1129 = vst [vmem:[%s1122 + $0x30] sm:$0xff] %v549
          %1130 = vst [vmem:[%s1122 + $0x38] sm:$0xff] %v550
          %1131 = vst [vmem:[%s1122 + $0x40] sm:$0xff] %v551
          %1132 = vst [vmem:[%s1122 + $0x48] sm:$0xff] %v552
          %1133 = vst [vmem:[%s1122 + $0x50] sm:$0xff] %v553
          %1134 = vst [vmem:[%s1122 + $0x58] sm:$0xff] %v554
          %1135 = vst [vmem:[%s1122 + $0x60] sm:$0xff] %v555
          %1136 = vst [vmem:[%s1122 + $0x68] sm:$0xff] %v556
          %1137 = vst [vmem:[%s1122 + $0x70] sm:$0xff] %v557
          %1138 = vst [vmem:[%s1122 + $0x78] sm:$0xff] %v558
          %1139 = vst [vmem:[%s1122 + $0x80] sm:$0xff] %v559
          %1140 = vst [vmem:[%s1122 + $0x88] sm:$0xff] %v560
          %1141 = vst [vmem:[%s1122 + $0x90] sm:$0xff] %v561
          %1142 = vst [vmem:[%s1122 + $0x98] sm:$0xff] %v562
          %1143 = vst [vmem:[%s1122 + $0xa0] sm:$0xff] %v563
          %1144 = vst [vmem:[%s1122 + $0xa8] sm:$0xff] %v564
          %1145 = vst [vmem:[%s1122 + $0xb0] sm:$0xff] %v565
          %1146 = vst [vmem:[%s1122 + $0xb8] sm:$0xff] %v566
          %1147 = vst [vmem:[%s1122 + $0xc0] sm:$0xff] %v567
          %1148 = vst [vmem:[%s1122 + $0xc8] sm:$0xff] %v568
          %1149 = vst [vmem:[%s1122 + $0xd0] sm:$0xff] %v569
          %1150 = vst [vmem:[%s1122 + $0xd8] sm:$0xff] %v570
          %1151 = vst [vmem:[%s1122 + $0xe0] sm:$0xff] %v571
          %1152 = vst [vmem:[%s1122 + $0xe8] sm:$0xff] %v572
          %1153 = vst [vmem:[%s1122 + $0xf0] sm:$0xff] %v573
          %1154 = vst [vmem:[%s1122 + $0xf8] sm:$0xff] %v574
          %v1155 = vpack.c.bf16 %v576, %v575
          %v1156 = vpack.c.bf16 %v578, %v577
          %v1157 = vpack.c.bf16 %v580, %v579
          %v1158 = vpack.c.bf16 %v582, %v581
          %v1159 = vpack.c.bf16 %v584, %v583
          %v1160 = vpack.c.bf16 %v586, %v585
          %v1161 = vpack.c.bf16 %v588, %v587
          %v1162 = vpack.c.bf16 %v590, %v589
          %v1163 = vpack.c.bf16 %v592, %v591
          %v1164 = vpack.c.bf16 %v594, %v593
          %v1165 = vpack.c.bf16 %v596, %v595
          %v1166 = vpack.c.bf16 %v598, %v597
          %v1167 = vpack.c.bf16 %v600, %v599
          %v1168 = vpack.c.bf16 %v602, %v601
          %v1169 = vpack.c.bf16 %v604, %v603
          %v1170 = vpack.c.bf16 %v606, %v605
          %s1171 = smul.addr %s1120, 8
          %s1172 = scalar_lea.vmem [#allocation9], %s1171
          %1173 = vst [vmem:[%s1172] sm:$0xff] %v1155
          %1174 = vst [vmem:[%s1172 + $0x8] sm:$0xff] %v1156
          %1175 = vst [vmem:[%s1172 + $0x10] sm:$0xff] %v1157
          %1176 = vst [vmem:[%s1172 + $0x18] sm:$0xff] %v1158
          %1177 = vst [vmem:[%s1172 + $0x20] sm:$0xff] %v1159
          %1178 = vst [vmem:[%s1172 + $0x28] sm:$0xff] %v1160
          %1179 = vst [vmem:[%s1172 + $0x30] sm:$0xff] %v1161
          %1180 = vst [vmem:[%s1172 + $0x38] sm:$0xff] %v1162
          %1181 = vst [vmem:[%s1172 + $0x40] sm:$0xff] %v1163
          %1182 = vst [vmem:[%s1172 + $0x48] sm:$0xff] %v1164
          %1183 = vst [vmem:[%s1172 + $0x50] sm:$0xff] %v1165
          %1184 = vst [vmem:[%s1172 + $0x58] sm:$0xff] %v1166
          %1185 = vst [vmem:[%s1172 + $0x60] sm:$0xff] %v1167
          %1186 = vst [vmem:[%s1172 + $0x68] sm:$0xff] %v1168
          %1187 = vst [vmem:[%s1172 + $0x70] sm:$0xff] %v1169
          %1188 = vst [vmem:[%s1172 + $0x78] sm:$0xff] %v1170
        $region64: #{tpu_custom_call.1} parent=55 // pred_fallthru
          _
        %p1189 = scmp.eq.s32.totalorder %s32, 1
        // Predicated region
        $region69: #{tpu_custom_call.1} parent=55 // pred_check
          %p1190 = pneg %p1189
        $region70: #{tpu_custom_call.1} parent=55 // pred_check_branch
          %1192 = sbr.rel (%p1190) target = $region72
        $region71: #{tpu_custom_call.1} parent=55 // pred_region
          %p1193 = scmp.eq.s32.totalorder %s33, 0
          // Predicated region
          $region73: #{tpu_custom_call.1} parent=71 // pred_check
            %p1194 = pneg %p1193
          $region74: #{tpu_custom_call.1} parent=71 // pred_check_branch
            %1196 = sbr.rel (%p1194) target = $region76
          $region75: #{tpu_custom_call.1} parent=71 // pred_region
            %v1197 = vld [vmem:[#allocation2] sm:$0xff]
            %v1198 = vld [vmem:[#allocation2 + $0x8] sm:$0xff]
            %v1199 = vld [vmem:[#allocation2 + $0x10] sm:$0xff]
            %v1200 = vld [vmem:[#allocation2 + $0x18] sm:$0xff]
            %v1201 = vld [vmem:[#allocation2 + $0x20] sm:$0xff]
            %v1202 = vld [vmem:[#allocation2 + $0x28] sm:$0xff]
            %v1203 = vld [vmem:[#allocation2 + $0x30] sm:$0xff]
            %v1204 = vld [vmem:[#allocation2 + $0x38] sm:$0xff]
            %v1205 = vld [vmem:[#allocation2 + $0x40] sm:$0xff]
            %v1206 = vld [vmem:[#allocation2 + $0x48] sm:$0xff]
            %v1207 = vld [vmem:[#allocation2 + $0x50] sm:$0xff]
            %v1208 = vld [vmem:[#allocation2 + $0x58] sm:$0xff]
            %v1209 = vld [vmem:[#allocation2 + $0x60] sm:$0xff]
            %v1210 = vld [vmem:[#allocation2 + $0x68] sm:$0xff]
            %v1211 = vld [vmem:[#allocation2 + $0x70] sm:$0xff]
            %v1212 = vld [vmem:[#allocation2 + $0x78] sm:$0xff]
            %v1213 = vld [vmem:[#allocation2 + $0x80] sm:$0xff]
            %v1214 = vld [vmem:[#allocation2 + $0x88] sm:$0xff]
            %v1215 = vld [vmem:[#allocation2 + $0x90] sm:$0xff]
            %v1216 = vld [vmem:[#allocation2 + $0x98] sm:$0xff]
            %v1217 = vld [vmem:[#allocation2 + $0xa0] sm:$0xff]
            %v1218 = vld [vmem:[#allocation2 + $0xa8] sm:$0xff]
            %v1219 = vld [vmem:[#allocation2 + $0xb0] sm:$0xff]
            %v1220 = vld [vmem:[#allocation2 + $0xb8] sm:$0xff]
            %v1221 = vld [vmem:[#allocation2 + $0xc0] sm:$0xff]
            %v1222 = vld [vmem:[#allocation2 + $0xc8] sm:$0xff]
            %v1223 = vld [vmem:[#allocation2 + $0xd0] sm:$0xff]
            %v1224 = vld [vmem:[#allocation2 + $0xd8] sm:$0xff]
            %v1225 = vld [vmem:[#allocation2 + $0xe0] sm:$0xff]
            %v1226 = vld [vmem:[#allocation2 + $0xe8] sm:$0xff]
            %v1227 = vld [vmem:[#allocation2 + $0xf0] sm:$0xff]
            %v1228 = vld [vmem:[#allocation2 + $0xf8] sm:$0xff]
            %v1229 = vmul.f32 %v1197, 0.015625
            %v1230 = vmul.f32 %v1198, 0.015625
            %v1231 = vmul.f32 %v1199, 0.015625
            %v1232 = vmul.f32 %v1200, 0.015625
            %v1233 = vmul.f32 %v1201, 0.015625
            %v1234 = vmul.f32 %v1202, 0.015625
            %v1235 = vmul.f32 %v1203, 0.015625
            %v1236 = vmul.f32 %v1204, 0.015625
            %v1237 = vmul.f32 %v1205, 0.015625
            %v1238 = vmul.f32 %v1206, 0.015625
            %v1239 = vmul.f32 %v1207, 0.015625
            %v1240 = vmul.f32 %v1208, 0.015625
            %v1241 = vmul.f32 %v1209, 0.015625
            %v1242 = vmul.f32 %v1210, 0.015625
            %v1243 = vmul.f32 %v1211, 0.015625
            %v1244 = vmul.f32 %v1212, 0.015625
            %v1245 = vmul.f32 %v1213, 0.015625
            %v1246 = vmul.f32 %v1214, 0.015625
            %v1247 = vmul.f32 %v1215, 0.015625
            %v1248 = vmul.f32 %v1216, 0.015625
            %v1249 = vmul.f32 %v1217, 0.015625
            %v1250 = vmul.f32 %v1218, 0.015625
            %v1251 = vmul.f32 %v1219, 0.015625
            %v1252 = vmul.f32 %v1220, 0.015625
            %v1253 = vmul.f32 %v1221, 0.015625
            %v1254 = vmul.f32 %v1222, 0.015625
            %v1255 = vmul.f32 %v1223, 0.015625
            %v1256 = vmul.f32 %v1224, 0.015625
            %v1257 = vmul.f32 %v1225, 0.015625
            %v1258 = vmul.f32 %v1226, 0.015625
            %v1259 = vmul.f32 %v1227, 0.015625
            %v1260 = vmul.f32 %v1228, 0.015625
            %v1261 = vld [vmem:[#allocation3] sm:$0xff]
            %v1262 = vld [vmem:[#allocation3 + $0x8] sm:$0xff]
            %v1263 = vld [vmem:[#allocation3 + $0x10] sm:$0xff]
            %v1264 = vld [vmem:[#allocation3 + $0x18] sm:$0xff]
            %v1265 = vld [vmem:[#allocation3 + $0x20] sm:$0xff]
            %v1266 = vld [vmem:[#allocation3 + $0x28] sm:$0xff]
            %v1267 = vld [vmem:[#allocation3 + $0x30] sm:$0xff]
            %v1268 = vld [vmem:[#allocation3 + $0x38] sm:$0xff]
            %v1269 = vld [vmem:[#allocation3 + $0x40] sm:$0xff]
            %v1270 = vld [vmem:[#allocation3 + $0x48] sm:$0xff]
            %v1271 = vld [vmem:[#allocation3 + $0x50] sm:$0xff]
            %v1272 = vld [vmem:[#allocation3 + $0x58] sm:$0xff]
            %v1273 = vld [vmem:[#allocation3 + $0x60] sm:$0xff]
            %v1274 = vld [vmem:[#allocation3 + $0x68] sm:$0xff]
            %v1275 = vld [vmem:[#allocation3 + $0x70] sm:$0xff]
            %v1276 = vld [vmem:[#allocation3 + $0x78] sm:$0xff]
            %v1277 = vld [vmem:[#allocation3 + $0x80] sm:$0xff]
            %v1278 = vld [vmem:[#allocation3 + $0x88] sm:$0xff]
            %v1279 = vld [vmem:[#allocation3 + $0x90] sm:$0xff]
            %v1280 = vld [vmem:[#allocation3 + $0x98] sm:$0xff]
            %v1281 = vld [vmem:[#allocation3 + $0xa0] sm:$0xff]
            %v1282 = vld [vmem:[#allocation3 + $0xa8] sm:$0xff]
            %v1283 = vld [vmem:[#allocation3 + $0xb0] sm:$0xff]
            %v1284 = vld [vmem:[#allocation3 + $0xb8] sm:$0xff]
            %v1285 = vld [vmem:[#allocation3 + $0xc0] sm:$0xff]
            %v1286 = vld [vmem:[#allocation3 + $0xc8] sm:$0xff]
            %v1287 = vld [vmem:[#allocation3 + $0xd0] sm:$0xff]
            %v1288 = vld [vmem:[#allocation3 + $0xd8] sm:$0xff]
            %v1289 = vld [vmem:[#allocation3 + $0xe0] sm:$0xff]
            %v1290 = vld [vmem:[#allocation3 + $0xe8] sm:$0xff]
            %v1291 = vld [vmem:[#allocation3 + $0xf0] sm:$0xff]
            %v1292 = vld [vmem:[#allocation3 + $0xf8] sm:$0xff]
            %v1293 = vmul.f32 %v1229, 64.0
            %v1294 = vmul.f32 %v1230, 64.0
            %v1295 = vmul.f32 %v1231, 64.0
            %v1296 = vmul.f32 %v1232, 64.0
            %v1297 = vmul.f32 %v1233, 64.0
            %v1298 = vmul.f32 %v1234, 64.0
            %v1299 = vmul.f32 %v1235, 64.0
            %v1300 = vmul.f32 %v1236, 64.0
            %v1301 = vmul.f32 %v1237, 64.0
            %v1302 = vmul.f32 %v1238, 64.0
            %v1303 = vmul.f32 %v1239, 64.0
            %v1304 = vmul.f32 %v1240, 64.0
            %v1305 = vmul.f32 %v1241, 64.0
            %v1306 = vmul.f32 %v1242, 64.0
            %v1307 = vmul.f32 %v1243, 64.0
            %v1308 = vmul.f32 %v1244, 64.0
            %v1309 = vmul.f32 %v1245, 64.0
            %v1310 = vmul.f32 %v1246, 64.0
            %v1311 = vmul.f32 %v1247, 64.0
            %v1312 = vmul.f32 %v1248, 64.0
            %v1313 = vmul.f32 %v1249, 64.0
            %v1314 = vmul.f32 %v1250, 64.0
            %v1315 = vmul.f32 %v1251, 64.0
            %v1316 = vmul.f32 %v1252, 64.0
            %v1317 = vmul.f32 %v1253, 64.0
            %v1318 = vmul.f32 %v1254, 64.0
            %v1319 = vmul.f32 %v1255, 64.0
            %v1320 = vmul.f32 %v1256, 64.0
            %v1321 = vmul.f32 %v1257, 64.0
            %v1322 = vmul.f32 %v1258, 64.0
            %v1323 = vmul.f32 %v1259, 64.0
            %v1324 = vmul.f32 %v1260, 64.0
            %v1325 = vmul.f32 %v1293, %v1229
            %v1326 = vmul.f32 %v1294, %v1230
            %v1327 = vmul.f32 %v1295, %v1231
            %v1328 = vmul.f32 %v1296, %v1232
            %v1329 = vmul.f32 %v1297, %v1233
            %v1330 = vmul.f32 %v1298, %v1234
            %v1331 = vmul.f32 %v1299, %v1235
            %v1332 = vmul.f32 %v1300, %v1236
            %v1333 = vmul.f32 %v1301, %v1237
            %v1334 = vmul.f32 %v1302, %v1238
            %v1335 = vmul.f32 %v1303, %v1239
            %v1336 = vmul.f32 %v1304, %v1240
            %v1337 = vmul.f32 %v1305, %v1241
            %v1338 = vmul.f32 %v1306, %v1242
            %v1339 = vmul.f32 %v1307, %v1243
            %v1340 = vmul.f32 %v1308, %v1244
            %v1341 = vmul.f32 %v1309, %v1245
            %v1342 = vmul.f32 %v1310, %v1246
            %v1343 = vmul.f32 %v1311, %v1247
            %v1344 = vmul.f32 %v1312, %v1248
            %v1345 = vmul.f32 %v1313, %v1249
            %v1346 = vmul.f32 %v1314, %v1250
            %v1347 = vmul.f32 %v1315, %v1251
            %v1348 = vmul.f32 %v1316, %v1252
            %v1349 = vmul.f32 %v1317, %v1253
            %v1350 = vmul.f32 %v1318, %v1254
            %v1351 = vmul.f32 %v1319, %v1255
            %v1352 = vmul.f32 %v1320, %v1256
            %v1353 = vmul.f32 %v1321, %v1257
            %v1354 = vmul.f32 %v1322, %v1258
            %v1355 = vmul.f32 %v1323, %v1259
            %v1356 = vmul.f32 %v1324, %v1260
            %v1357 = vsub.f32 %v1261, %v1325
            %v1358 = vsub.f32 %v1262, %v1326
            %v1359 = vsub.f32 %v1263, %v1327
            %v1360 = vsub.f32 %v1264, %v1328
            %v1361 = vsub.f32 %v1265, %v1329
            %v1362 = vsub.f32 %v1266, %v1330
            %v1363 = vsub.f32 %v1267, %v1331
            %v1364 = vsub.f32 %v1268, %v1332
            %v1365 = vsub.f32 %v1269, %v1333
            %v1366 = vsub.f32 %v1270, %v1334
            %v1367 = vsub.f32 %v1271, %v1335
            %v1368 = vsub.f32 %v1272, %v1336
            %v1369 = vsub.f32 %v1273, %v1337
            %v1370 = vsub.f32 %v1274, %v1338
            %v1371 = vsub.f32 %v1275, %v1339
            %v1372 = vsub.f32 %v1276, %v1340
            %v1373 = vsub.f32 %v1277, %v1341
            %v1374 = vsub.f32 %v1278, %v1342
            %v1375 = vsub.f32 %v1279, %v1343
            %v1376 = vsub.f32 %v1280, %v1344
            %v1377 = vsub.f32 %v1281, %v1345
            %v1378 = vsub.f32 %v1282, %v1346
            %v1379 = vsub.f32 %v1283, %v1347
            %v1380 = vsub.f32 %v1284, %v1348
            %v1381 = vsub.f32 %v1285, %v1349
            %v1382 = vsub.f32 %v1286, %v1350
            %v1383 = vsub.f32 %v1287, %v1351
            %v1384 = vsub.f32 %v1288, %v1352
            %v1385 = vsub.f32 %v1289, %v1353
            %v1386 = vsub.f32 %v1290, %v1354
            %v1387 = vsub.f32 %v1291, %v1355
            %v1388 = vsub.f32 %v1292, %v1356
            %v1389 = vmul.f32 %v1357, 0.015873017
            %v1390 = vmul.f32 %v1358, 0.015873017
            %v1391 = vmul.f32 %v1359, 0.015873017
            %v1392 = vmul.f32 %v1360, 0.015873017
            %v1393 = vmul.f32 %v1361, 0.015873017
            %v1394 = vmul.f32 %v1362, 0.015873017
            %v1395 = vmul.f32 %v1363, 0.015873017
            %v1396 = vmul.f32 %v1364, 0.015873017
            %v1397 = vmul.f32 %v1365, 0.015873017
            %v1398 = vmul.f32 %v1366, 0.015873017
            %v1399 = vmul.f32 %v1367, 0.015873017
            %v1400 = vmul.f32 %v1368, 0.015873017
            %v1401 = vmul.f32 %v1369, 0.015873017
            %v1402 = vmul.f32 %v1370, 0.015873017
            %v1403 = vmul.f32 %v1371, 0.015873017
            %v1404 = vmul.f32 %v1372, 0.015873017
            %v1405 = vmul.f32 %v1373, 0.015873017
            %v1406 = vmul.f32 %v1374, 0.015873017
            %v1407 = vmul.f32 %v1375, 0.015873017
            %v1408 = vmul.f32 %v1376, 0.015873017
            %v1409 = vmul.f32 %v1377, 0.015873017
            %v1410 = vmul.f32 %v1378, 0.015873017
            %v1411 = vmul.f32 %v1379, 0.015873017
            %v1412 = vmul.f32 %v1380, 0.015873017
            %v1413 = vmul.f32 %v1381, 0.015873017
            %v1414 = vmul.f32 %v1382, 0.015873017
            %v1415 = vmul.f32 %v1383, 0.015873017
            %v1416 = vmul.f32 %v1384, 0.015873017
            %v1417 = vmul.f32 %v1385, 0.015873017
            %v1418 = vmul.f32 %v1386, 0.015873017
            %v1419 = vmul.f32 %v1387, 0.015873017
            %v1420 = vmul.f32 %v1388, 0.015873017
            %vm1421 = vcmask 7168
            %1422 = vst.msk [vmem:[#allocation2] sm:$0xff] %vm1421, %v1229
            %1423 = vst.msk [vmem:[#allocation2 + $0x8] sm:$0xff] %vm1421, %v1230
            %1424 = vst.msk [vmem:[#allocation2 + $0x10] sm:$0xff] %vm1421, %v1231
            %1425 = vst.msk [vmem:[#allocation2 + $0x18] sm:$0xff] %vm1421, %v1232
            %1426 = vst.msk [vmem:[#allocation2 + $0x20] sm:$0xff] %vm1421, %v1233
            %1427 = vst.msk [vmem:[#allocation2 + $0x28] sm:$0xff] %vm1421, %v1234
            %1428 = vst.msk [vmem:[#allocation2 + $0x30] sm:$0xff] %vm1421, %v1235
            %1429 = vst.msk [vmem:[#allocation2 + $0x38] sm:$0xff] %vm1421, %v1236
            %1430 = vst.msk [vmem:[#allocation2 + $0x40] sm:$0xff] %vm1421, %v1237
            %1431 = vst.msk [vmem:[#allocation2 + $0x48] sm:$0xff] %vm1421, %v1238
            %1432 = vst.msk [vmem:[#allocation2 + $0x50] sm:$0xff] %vm1421, %v1239
            %1433 = vst.msk [vmem:[#allocation2 + $0x58] sm:$0xff] %vm1421, %v1240
            %1434 = vst.msk [vmem:[#allocation2 + $0x60] sm:$0xff] %vm1421, %v1241
            %1435 = vst.msk [vmem:[#allocation2 + $0x68] sm:$0xff] %vm1421, %v1242
            %1436 = vst.msk [vmem:[#allocation2 + $0x70] sm:$0xff] %vm1421, %v1243
            %1437 = vst.msk [vmem:[#allocation2 + $0x78] sm:$0xff] %vm1421, %v1244
            %1438 = vst.msk [vmem:[#allocation2 + $0x80] sm:$0xff] %vm1421, %v1245
            %1439 = vst.msk [vmem:[#allocation2 + $0x88] sm:$0xff] %vm1421, %v1246
            %1440 = vst.msk [vmem:[#allocation2 + $0x90] sm:$0xff] %vm1421, %v1247
            %1441 = vst.msk [vmem:[#allocation2 + $0x98] sm:$0xff] %vm1421, %v1248
            %1442 = vst.msk [vmem:[#allocation2 + $0xa0] sm:$0xff] %vm1421, %v1249
            %1443 = vst.msk [vmem:[#allocation2 + $0xa8] sm:$0xff] %vm1421, %v1250
            %1444 = vst.msk [vmem:[#allocation2 + $0xb0] sm:$0xff] %vm1421, %v1251
            %1445 = vst.msk [vmem:[#allocation2 + $0xb8] sm:$0xff] %vm1421, %v1252
            %1446 = vst.msk [vmem:[#allocation2 + $0xc0] sm:$0xff] %vm1421, %v1253
            %1447 = vst.msk [vmem:[#allocation2 + $0xc8] sm:$0xff] %vm1421, %v1254
            %1448 = vst.msk [vmem:[#allocation2 + $0xd0] sm:$0xff] %vm1421, %v1255
            %1449 = vst.msk [vmem:[#allocation2 + $0xd8] sm:$0xff] %vm1421, %v1256
            %1450 = vst.msk [vmem:[#allocation2 + $0xe0] sm:$0xff] %vm1421, %v1257
            %1451 = vst.msk [vmem:[#allocation2 + $0xe8] sm:$0xff] %vm1421, %v1258
            %1452 = vst.msk [vmem:[#allocation2 + $0xf0] sm:$0xff] %vm1421, %v1259
            %1453 = vst.msk [vmem:[#allocation2 + $0xf8] sm:$0xff] %vm1421, %v1260
            %v1454 = vadd.f32 %v1389, 1e-05
            %v1455 = vadd.f32 %v1390, 1e-05
            %v1456 = vadd.f32 %v1391, 1e-05
            %v1457 = vadd.f32 %v1392, 1e-05
            %v1458 = vadd.f32 %v1393, 1e-05
            %v1459 = vadd.f32 %v1394, 1e-05
            %v1460 = vadd.f32 %v1395, 1e-05
            %v1461 = vadd.f32 %v1396, 1e-05
            %v1462 = vadd.f32 %v1397, 1e-05
            %v1463 = vadd.f32 %v1398, 1e-05
            %v1464 = vadd.f32 %v1399, 1e-05
            %v1465 = vadd.f32 %v1400, 1e-05
            %v1466 = vadd.f32 %v1401, 1e-05
            %v1467 = vadd.f32 %v1402, 1e-05
            %v1468 = vadd.f32 %v1403, 1e-05
            %v1469 = vadd.f32 %v1404, 1e-05
            %v1470 = vadd.f32 %v1405, 1e-05
            %v1471 = vadd.f32 %v1406, 1e-05
            %v1472 = vadd.f32 %v1407, 1e-05
            %v1473 = vadd.f32 %v1408, 1e-05
            %v1474 = vadd.f32 %v1409, 1e-05
            %v1475 = vadd.f32 %v1410, 1e-05
            %v1476 = vadd.f32 %v1411, 1e-05
            %v1477 = vadd.f32 %v1412, 1e-05
            %v1478 = vadd.f32 %v1413, 1e-05
            %v1479 = vadd.f32 %v1414, 1e-05
            %v1480 = vadd.f32 %v1415, 1e-05
            %v1481 = vadd.f32 %v1416, 1e-05
            %v1482 = vadd.f32 %v1417, 1e-05
            %v1483 = vadd.f32 %v1418, 1e-05
            %v1484 = vadd.f32 %v1419, 1e-05
            %v1485 = vadd.f32 %v1420, 1e-05
            %v1486 = vrsqrt.pop %v1454
            %v1487 = vrsqrt.pop %v1455
            %v1488 = vrsqrt.pop %v1456
            %v1489 = vrsqrt.pop %v1457
            %v1490 = vrsqrt.pop %v1458
            %v1491 = vrsqrt.pop %v1459
            %v1492 = vrsqrt.pop %v1460
            %v1493 = vrsqrt.pop %v1461
            %v1494 = vrsqrt.pop %v1462
            %v1495 = vrsqrt.pop %v1463
            %v1496 = vrsqrt.pop %v1464
            %v1497 = vrsqrt.pop %v1465
            %v1498 = vrsqrt.pop %v1466
            %v1499 = vrsqrt.pop %v1467
            %v1500 = vrsqrt.pop %v1468
            %v1501 = vrsqrt.pop %v1469
            %v1502 = vrsqrt.pop %v1470
            %v1503 = vrsqrt.pop %v1471
            %v1504 = vrsqrt.pop %v1472
            %v1505 = vrsqrt.pop %v1473
            %v1506 = vrsqrt.pop %v1474
            %v1507 = vrsqrt.pop %v1475
            %v1508 = vrsqrt.pop %v1476
            %v1509 = vrsqrt.pop %v1477
            %v1510 = vrsqrt.pop %v1478
            %v1511 = vrsqrt.pop %v1479
            %v1512 = vrsqrt.pop %v1480
            %v1513 = vrsqrt.pop %v1481
            %v1514 = vrsqrt.pop %v1482
            %v1515 = vrsqrt.pop %v1483
            %v1516 = vrsqrt.pop %v1484
            %v1517 = vrsqrt.pop %v1485
            %1518 = vst.msk [vmem:[#allocation3] sm:$0xff] %vm1421, %v1486
            %1519 = vst.msk [vmem:[#allocation3 + $0x8] sm:$0xff] %vm1421, %v1487
            %1520 = vst.msk [vmem:[#allocation3 + $0x10] sm:$0xff] %vm1421, %v1488
            %1521 = vst.msk [vmem:[#allocation3 + $0x18] sm:$0xff] %vm1421, %v1489
            %1522 = vst.msk [vmem:[#allocation3 + $0x20] sm:$0xff] %vm1421, %v1490
            %1523 = vst.msk [vmem:[#allocation3 + $0x28] sm:$0xff] %vm1421, %v1491
            %1524 = vst.msk [vmem:[#allocation3 + $0x30] sm:$0xff] %vm1421, %v1492
            %1525 = vst.msk [vmem:[#allocation3 + $0x38] sm:$0xff] %vm1421, %v1493
            %1526 = vst.msk [vmem:[#allocation3 + $0x40] sm:$0xff] %vm1421, %v1494
            %1527 = vst.msk [vmem:[#allocation3 + $0x48] sm:$0xff] %vm1421, %v1495
            %1528 = vst.msk [vmem:[#allocation3 + $0x50] sm:$0xff] %vm1421, %v1496
            %1529 = vst.msk [vmem:[#allocation3 + $0x58] sm:$0xff] %vm1421, %v1497
            %1530 = vst.msk [vmem:[#allocation3 + $0x60] sm:$0xff] %vm1421, %v1498
            %1531 = vst.msk [vmem:[#allocation3 + $0x68] sm:$0xff] %vm1421, %v1499
            %1532 = vst.msk [vmem:[#allocation3 + $0x70] sm:$0xff] %vm1421, %v1500
            %1533 = vst.msk [vmem:[#allocation3 + $0x78] sm:$0xff] %vm1421, %v1501
            %1534 = vst.msk [vmem:[#allocation3 + $0x80] sm:$0xff] %vm1421, %v1502
            %1535 = vst.msk [vmem:[#allocation3 + $0x88] sm:$0xff] %vm1421, %v1503
            %1536 = vst.msk [vmem:[#allocation3 + $0x90] sm:$0xff] %vm1421, %v1504
            %1537 = vst.msk [vmem:[#allocation3 + $0x98] sm:$0xff] %vm1421, %v1505
            %1538 = vst.msk [vmem:[#allocation3 + $0xa0] sm:$0xff] %vm1421, %v1506
            %1539 = vst.msk [vmem:[#allocation3 + $0xa8] sm:$0xff] %vm1421, %v1507
            %1540 = vst.msk [vmem:[#allocation3 + $0xb0] sm:$0xff] %vm1421, %v1508
            %1541 = vst.msk [vmem:[#allocation3 + $0xb8] sm:$0xff] %vm1421, %v1509
            %1542 = vst.msk [vmem:[#allocation3 + $0xc0] sm:$0xff] %vm1421, %v1510
            %1543 = vst.msk [vmem:[#allocation3 + $0xc8] sm:$0xff] %vm1421, %v1511
            %1544 = vst.msk [vmem:[#allocation3 + $0xd0] sm:$0xff] %vm1421, %v1512
            %1545 = vst.msk [vmem:[#allocation3 + $0xd8] sm:$0xff] %vm1421, %v1513
            %1546 = vst.msk [vmem:[#allocation3 + $0xe0] sm:$0xff] %vm1421, %v1514
            %1547 = vst.msk [vmem:[#allocation3 + $0xe8] sm:$0xff] %vm1421, %v1515
            %1548 = vst.msk [vmem:[#allocation3 + $0xf0] sm:$0xff] %vm1421, %v1516
            %1549 = vst.msk [vmem:[#allocation3 + $0xf8] sm:$0xff] %vm1421, %v1517
            %v1550 = vld [vmem:[#allocation4] sm:$0xff]
            %v1551 = vld [vmem:[#allocation4 + $0x8] sm:$0xff]
            %v1552 = vld [vmem:[#allocation4 + $0x10] sm:$0xff]
            %v1553 = vld [vmem:[#allocation4 + $0x18] sm:$0xff]
            %v1554 = vld [vmem:[#allocation4 + $0x20] sm:$0xff]
            %v1555 = vld [vmem:[#allocation4 + $0x28] sm:$0xff]
            %v1556 = vld [vmem:[#allocation4 + $0x30] sm:$0xff]
            %v1557 = vld [vmem:[#allocation4 + $0x38] sm:$0xff]
            %v1558 = vld [vmem:[#allocation4 + $0x40] sm:$0xff]
            %v1559 = vld [vmem:[#allocation4 + $0x48] sm:$0xff]
            %v1560 = vld [vmem:[#allocation4 + $0x50] sm:$0xff]
            %v1561 = vld [vmem:[#allocation4 + $0x58] sm:$0xff]
            %v1562 = vld [vmem:[#allocation4 + $0x60] sm:$0xff]
            %v1563 = vld [vmem:[#allocation4 + $0x68] sm:$0xff]
            %v1564 = vld [vmem:[#allocation4 + $0x70] sm:$0xff]
            %v1565 = vld [vmem:[#allocation4 + $0x78] sm:$0xff]
            %v1566 = vld [vmem:[#allocation4 + $0x80] sm:$0xff]
            %v1567 = vld [vmem:[#allocation4 + $0x88] sm:$0xff]
            %v1568 = vld [vmem:[#allocation4 + $0x90] sm:$0xff]
            %v1569 = vld [vmem:[#allocation4 + $0x98] sm:$0xff]
            %v1570 = vld [vmem:[#allocation4 + $0xa0] sm:$0xff]
            %v1571 = vld [vmem:[#allocation4 + $0xa8] sm:$0xff]
            %v1572 = vld [vmem:[#allocation4 + $0xb0] sm:$0xff]
            %v1573 = vld [vmem:[#allocation4 + $0xb8] sm:$0xff]
            %v1574 = vld [vmem:[#allocation4 + $0xc0] sm:$0xff]
            %v1575 = vld [vmem:[#allocation4 + $0xc8] sm:$0xff]
            %v1576 = vld [vmem:[#allocation4 + $0xd0] sm:$0xff]
            %v1577 = vld [vmem:[#allocation4 + $0xd8] sm:$0xff]
            %v1578 = vld [vmem:[#allocation4 + $0xe0] sm:$0xff]
            %v1579 = vld [vmem:[#allocation4 + $0xe8] sm:$0xff]
            %v1580 = vld [vmem:[#allocation4 + $0xf0] sm:$0xff]
            %v1581 = vld [vmem:[#allocation4 + $0xf8] sm:$0xff]
            %v1582 = vmul.f32 %v1550, 0.015625
            %v1583 = vmul.f32 %v1551, 0.015625
            %v1584 = vmul.f32 %v1552, 0.015625
            %v1585 = vmul.f32 %v1553, 0.015625
            %v1586 = vmul.f32 %v1554, 0.015625
            %v1587 = vmul.f32 %v1555, 0.015625
            %v1588 = vmul.f32 %v1556, 0.015625
            %v1589 = vmul.f32 %v1557, 0.015625
            %v1590 = vmul.f32 %v1558, 0.015625
            %v1591 = vmul.f32 %v1559, 0.015625
            %v1592 = vmul.f32 %v1560, 0.015625
            %v1593 = vmul.f32 %v1561, 0.015625
            %v1594 = vmul.f32 %v1562, 0.015625
            %v1595 = vmul.f32 %v1563, 0.015625
            %v1596 = vmul.f32 %v1564, 0.015625
            %v1597 = vmul.f32 %v1565, 0.015625
            %v1598 = vmul.f32 %v1566, 0.015625
            %v1599 = vmul.f32 %v1567, 0.015625
            %v1600 = vmul.f32 %v1568, 0.015625
            %v1601 = vmul.f32 %v1569, 0.015625
            %v1602 = vmul.f32 %v1570, 0.015625
            %v1603 = vmul.f32 %v1571, 0.015625
            %v1604 = vmul.f32 %v1572, 0.015625
            %v1605 = vmul.f32 %v1573, 0.015625
            %v1606 = vmul.f32 %v1574, 0.015625
            %v1607 = vmul.f32 %v1575, 0.015625
            %v1608 = vmul.f32 %v1576, 0.015625
            %v1609 = vmul.f32 %v1577, 0.015625
            %v1610 = vmul.f32 %v1578, 0.015625
            %v1611 = vmul.f32 %v1579, 0.015625
            %v1612 = vmul.f32 %v1580, 0.015625
            %v1613 = vmul.f32 %v1581, 0.015625
            %1614 = vst.msk [vmem:[#allocation4] sm:$0xff] %vm1421, %v1582
            %1615 = vst.msk [vmem:[#allocation4 + $0x8] sm:$0xff] %vm1421, %v1583
            %1616 = vst.msk [vmem:[#allocation4 + $0x10] sm:$0xff] %vm1421, %v1584
            %1617 = vst.msk [vmem:[#allocation4 + $0x18] sm:$0xff] %vm1421, %v1585
            %1618 = vst.msk [vmem:[#allocation4 + $0x20] sm:$0xff] %vm1421, %v1586
            %1619 = vst.msk [vmem:[#allocation4 + $0x28] sm:$0xff] %vm1421, %v1587
            %1620 = vst.msk [vmem:[#allocation4 + $0x30] sm:$0xff] %vm1421, %v1588
            %1621 = vst.msk [vmem:[#allocation4 + $0x38] sm:$0xff] %vm1421, %v1589
            %1622 = vst.msk [vmem:[#allocation4 + $0x40] sm:$0xff] %vm1421, %v1590
            %1623 = vst.msk [vmem:[#allocation4 + $0x48] sm:$0xff] %vm1421, %v1591
            %1624 = vst.msk [vmem:[#allocation4 + $0x50] sm:$0xff] %vm1421, %v1592
            %1625 = vst.msk [vmem:[#allocation4 + $0x58] sm:$0xff] %vm1421, %v1593
            %1626 = vst.msk [vmem:[#allocation4 + $0x60] sm:$0xff] %vm1421, %v1594
            %1627 = vst.msk [vmem:[#allocation4 + $0x68] sm:$0xff] %vm1421, %v1595
            %1628 = vst.msk [vmem:[#allocation4 + $0x70] sm:$0xff] %vm1421, %v1596
            %1629 = vst.msk [vmem:[#allocation4 + $0x78] sm:$0xff] %vm1421, %v1597
            %1630 = vst.msk [vmem:[#allocation4 + $0x80] sm:$0xff] %vm1421, %v1598
            %1631 = vst.msk [vmem:[#allocation4 + $0x88] sm:$0xff] %vm1421, %v1599
            %1632 = vst.msk [vmem:[#allocation4 + $0x90] sm:$0xff] %vm1421, %v1600
            %1633 = vst.msk [vmem:[#allocation4 + $0x98] sm:$0xff] %vm1421, %v1601
            %1634 = vst.msk [vmem:[#allocation4 + $0xa0] sm:$0xff] %vm1421, %v1602
            %1635 = vst.msk [vmem:[#allocation4 + $0xa8] sm:$0xff] %vm1421, %v1603
            %1636 = vst.msk [vmem:[#allocation4 + $0xb0] sm:$0xff] %vm1421, %v1604
            %1637 = vst.msk [vmem:[#allocation4 + $0xb8] sm:$0xff] %vm1421, %v1605
            %1638 = vst.msk [vmem:[#allocation4 + $0xc0] sm:$0xff] %vm1421, %v1606
            %1639 = vst.msk [vmem:[#allocation4 + $0xc8] sm:$0xff] %vm1421, %v1607
            %1640 = vst.msk [vmem:[#allocation4 + $0xd0] sm:$0xff] %vm1421, %v1608
            %1641 = vst.msk [vmem:[#allocation4 + $0xd8] sm:$0xff] %vm1421, %v1609
            %1642 = vst.msk [vmem:[#allocation4 + $0xe0] sm:$0xff] %vm1421, %v1610
            %1643 = vst.msk [vmem:[#allocation4 + $0xe8] sm:$0xff] %vm1421, %v1611
            %1644 = vst.msk [vmem:[#allocation4 + $0xf0] sm:$0xff] %vm1421, %v1612
            %1645 = vst.msk [vmem:[#allocation4 + $0xf8] sm:$0xff] %vm1421, %v1613
            %vm1646 = vcmask 261120
            %1647 = vst.msk [vmem:[#allocation5] sm:$0xff] %vm1646, 0.0
            %1648 = vst.msk [vmem:[#allocation5 + $0x8] sm:$0xff] %vm1646, 0.0
            %1649 = vst.msk [vmem:[#allocation5 + $0x10] sm:$0xff] %vm1646, 0.0
            %1650 = vst.msk [vmem:[#allocation5 + $0x18] sm:$0xff] %vm1646, 0.0
          $region76: #{tpu_custom_call.1} parent=71 // pred_fallthru
            _
          %s1651 = sshra.s32 %s437, 7
          %s1652 = sand.u32 %s437, 127
          %s1653 = smul.addr %s1651, 8
          %s1654 = scalar_lea.vmem [#allocation9], %s1653
          %v1655 = vld [vmem:[%s1654] sm:$0xff]
          %v1656 = vld [vmem:[%s1654 + $0x8] sm:$0xff]
          %v1657 = vld [vmem:[%s1654 + $0x10] sm:$0xff]
          %v1658 = vld [vmem:[%s1654 + $0x18] sm:$0xff]
          %v1659 = vld [vmem:[%s1654 + $0x20] sm:$0xff]
          %v1660 = vld [vmem:[%s1654 + $0x28] sm:$0xff]
          %v1661 = vld [vmem:[%s1654 + $0x30] sm:$0xff]
          %v1662 = vld [vmem:[%s1654 + $0x38] sm:$0xff]
          %v1663 = vld [vmem:[%s1654 + $0x40] sm:$0xff]
          %v1664 = vld [vmem:[%s1654 + $0x48] sm:$0xff]
          %v1665 = vld [vmem:[%s1654 + $0x50] sm:$0xff]
          %v1666 = vld [vmem:[%s1654 + $0x58] sm:$0xff]
          %v1667 = vld [vmem:[%s1654 + $0x60] sm:$0xff]
          %v1668 = vld [vmem:[%s1654 + $0x68] sm:$0xff]
          %v1669 = vld [vmem:[%s1654 + $0x70] sm:$0xff]
          %v1670 = vld [vmem:[%s1654 + $0x78] sm:$0xff]
          %v1671 = vunpack.c.l.bf16 %v1655
          %v1672 = vunpack.c.h.bf16 %v1655
          %v1673 = vunpack.c.l.bf16 %v1656
          %v1674 = vunpack.c.h.bf16 %v1656
          %v1675 = vunpack.c.l.bf16 %v1657
          %v1676 = vunpack.c.h.bf16 %v1657
          %v1677 = vunpack.c.l.bf16 %v1658
          %v1678 = vunpack.c.h.bf16 %v1658
          %v1679 = vunpack.c.l.bf16 %v1659
          %v1680 = vunpack.c.h.bf16 %v1659
          %v1681 = vunpack.c.l.bf16 %v1660
          %v1682 = vunpack.c.h.bf16 %v1660
          %v1683 = vunpack.c.l.bf16 %v1661
          %v1684 = vunpack.c.h.bf16 %v1661
          %v1685 = vunpack.c.l.bf16 %v1662
          %v1686 = vunpack.c.h.bf16 %v1662
          %v1687 = vunpack.c.l.bf16 %v1663
          %v1688 = vunpack.c.h.bf16 %v1663
          %v1689 = vunpack.c.l.bf16 %v1664
          %v1690 = vunpack.c.h.bf16 %v1664
          %v1691 = vunpack.c.l.bf16 %v1665
          %v1692 = vunpack.c.h.bf16 %v1665
          %v1693 = vunpack.c.l.bf16 %v1666
          %v1694 = vunpack.c.h.bf16 %v1666
          %v1695 = vunpack.c.l.bf16 %v1667
          %v1696 = vunpack.c.h.bf16 %v1667
          %v1697 = vunpack.c.l.bf16 %v1668
          %v1698 = vunpack.c.h.bf16 %v1668
          %v1699 = vunpack.c.l.bf16 %v1669
          %v1700 = vunpack.c.h.bf16 %v1669
          %v1701 = vunpack.c.l.bf16 %v1670
          %v1702 = vunpack.c.h.bf16 %v1670
          %v1703 = vld [vmem:[#allocation4] sm:$0xff]
          %v1704 = vld [vmem:[#allocation4 + $0x8] sm:$0xff]
          %v1705 = vld [vmem:[#allocation4 + $0x10] sm:$0xff]
          %v1706 = vld [vmem:[#allocation4 + $0x18] sm:$0xff]
          %v1707 = vld [vmem:[#allocation4 + $0x20] sm:$0xff]
          %v1708 = vld [vmem:[#allocation4 + $0x28] sm:$0xff]
          %v1709 = vld [vmem:[#allocation4 + $0x30] sm:$0xff]
          %v1710 = vld [vmem:[#allocation4 + $0x38] sm:$0xff]
          %v1711 = vld [vmem:[#allocation4 + $0x40] sm:$0xff]
          %v1712 = vld [vmem:[#allocation4 + $0x48] sm:$0xff]
          %v1713 = vld [vmem:[#allocation4 + $0x50] sm:$0xff]
          %v1714 = vld [vmem:[#allocation4 + $0x58] sm:$0xff]
          %v1715 = vld [vmem:[#allocation4 + $0x60] sm:$0xff]
          %v1716 = vld [vmem:[#allocation4 + $0x68] sm:$0xff]
          %v1717 = vld [vmem:[#allocation4 + $0x70] sm:$0xff]
          %v1718 = vld [vmem:[#allocation4 + $0x78] sm:$0xff]
          %v1719 = vld [vmem:[#allocation4 + $0x80] sm:$0xff]
          %v1720 = vld [vmem:[#allocation4 + $0x88] sm:$0xff]
          %v1721 = vld [vmem:[#allocation4 + $0x90] sm:$0xff]
          %v1722 = vld [vmem:[#allocation4 + $0x98] sm:$0xff]
          %v1723 = vld [vmem:[#allocation4 + $0xa0] sm:$0xff]
          %v1724 = vld [vmem:[#allocation4 + $0xa8] sm:$0xff]
          %v1725 = vld [vmem:[#allocation4 + $0xb0] sm:$0xff]
          %v1726 = vld [vmem:[#allocation4 + $0xb8] sm:$0xff]
          %v1727 = vld [vmem:[#allocation4 + $0xc0] sm:$0xff]
          %v1728 = vld [vmem:[#allocation4 + $0xc8] sm:$0xff]
          %v1729 = vld [vmem:[#allocation4 + $0xd0] sm:$0xff]
          %v1730 = vld [vmem:[#allocation4 + $0xd8] sm:$0xff]
          %v1731 = vld [vmem:[#allocation4 + $0xe0] sm:$0xff]
          %v1732 = vld [vmem:[#allocation4 + $0xe8] sm:$0xff]
          %v1733 = vld [vmem:[#allocation4 + $0xf0] sm:$0xff]
          %v1734 = vld [vmem:[#allocation4 + $0xf8] sm:$0xff]
          %1736 = vset.pattern.permute.xlu0 0
          %1737 = vperm.xlu0 %1736, %v1703
          %v1738 = vpop.permute.xlu0 %1737
          %1741 = vset.pattern.permute.xlu0 0
          %1742 = vperm.xlu0 %1741, %v1704
          %v1743 = vpop.permute.xlu0 %1742
          %1746 = vset.pattern.permute.xlu0 0
          %1747 = vperm.xlu0 %1746, %v1705
          %v1748 = vpop.permute.xlu0 %1747
          %1751 = vset.pattern.permute.xlu0 0
          %1752 = vperm.xlu0 %1751, %v1706
          %v1753 = vpop.permute.xlu0 %1752
          %1756 = vset.pattern.permute.xlu0 0
          %1757 = vperm.xlu0 %1756, %v1707
          %v1758 = vpop.permute.xlu0 %1757
          %1761 = vset.pattern.permute.xlu0 0
          %1762 = vperm.xlu0 %1761, %v1708
          %v1763 = vpop.permute.xlu0 %1762
          %1766 = vset.pattern.permute.xlu0 0
          %1767 = vperm.xlu0 %1766, %v1709
          %v1768 = vpop.permute.xlu0 %1767
          %1771 = vset.pattern.permute.xlu0 0
          %1772 = vperm.xlu0 %1771, %v1710
          %v1773 = vpop.permute.xlu0 %1772
          %1776 = vset.pattern.permute.xlu0 0
          %1777 = vperm.xlu0 %1776, %v1711
          %v1778 = vpop.permute.xlu0 %1777
          %1781 = vset.pattern.permute.xlu0 0
          %1782 = vperm.xlu0 %1781, %v1712
          %v1783 = vpop.permute.xlu0 %1782
          %1786 = vset.pattern.permute.xlu0 0
          %1787 = vperm.xlu0 %1786, %v1713
          %v1788 = vpop.permute.xlu0 %1787
          %1791 = vset.pattern.permute.xlu0 0
          %1792 = vperm.xlu0 %1791, %v1714
          %v1793 = vpop.permute.xlu0 %1792
          %1796 = vset.pattern.permute.xlu0 0
          %1797 = vperm.xlu0 %1796, %v1715
          %v1798 = vpop.permute.xlu0 %1797
          %1801 = vset.pattern.permute.xlu0 0
          %1802 = vperm.xlu0 %1801, %v1716
          %v1803 = vpop.permute.xlu0 %1802
          %1806 = vset.pattern.permute.xlu0 0
          %1807 = vperm.xlu0 %1806, %v1717
          %v1808 = vpop.permute.xlu0 %1807
          %1811 = vset.pattern.permute.xlu0 0
          %1812 = vperm.xlu0 %1811, %v1718
          %v1813 = vpop.permute.xlu0 %1812
          %1816 = vset.pattern.permute.xlu0 0
          %1817 = vperm.xlu0 %1816, %v1719
          %v1818 = vpop.permute.xlu0 %1817
          %1821 = vset.pattern.permute.xlu0 0
          %1822 = vperm.xlu0 %1821, %v1720
          %v1823 = vpop.permute.xlu0 %1822
          %1826 = vset.pattern.permute.xlu0 0
          %1827 = vperm.xlu0 %1826, %v1721
          %v1828 = vpop.permute.xlu0 %1827
          %1831 = vset.pattern.permute.xlu0 0
          %1832 = vperm.xlu0 %1831, %v1722
          %v1833 = vpop.permute.xlu0 %1832
          %1836 = vset.pattern.permute.xlu0 0
          %1837 = vperm.xlu0 %1836, %v1723
          %v1838 = vpop.permute.xlu0 %1837
          %1841 = vset.pattern.permute.xlu0 0
          %1842 = vperm.xlu0 %1841, %v1724
          %v1843 = vpop.permute.xlu0 %1842
          %1846 = vset.pattern.permute.xlu0 0
          %1847 = vperm.xlu0 %1846, %v1725
          %v1848 = vpop.permute.xlu0 %1847
          %1851 = vset.pattern.permute.xlu0 0
          %1852 = vperm.xlu0 %1851, %v1726
          %v1853 = vpop.permute.xlu0 %1852
          %1856 = vset.pattern.permute.xlu0 0
          %1857 = vperm.xlu0 %1856, %v1727
          %v1858 = vpop.permute.xlu0 %1857
          %1861 = vset.pattern.permute.xlu0 0
          %1862 = vperm.xlu0 %1861, %v1728
          %v1863 = vpop.permute.xlu0 %1862
          %1866 = vset.pattern.permute.xlu0 0
          %1867 = vperm.xlu0 %1866, %v1729
          %v1868 = vpop.permute.xlu0 %1867
          %1871 = vset.pattern.permute.xlu0 0
          %1872 = vperm.xlu0 %1871, %v1730
          %v1873 = vpop.permute.xlu0 %1872
          %1876 = vset.pattern.permute.xlu0 0
          %1877 = vperm.xlu0 %1876, %v1731
          %v1878 = vpop.permute.xlu0 %1877
          %1881 = vset.pattern.permute.xlu0 0
          %1882 = vperm.xlu0 %1881, %v1732
          %v1883 = vpop.permute.xlu0 %1882
          %1886 = vset.pattern.permute.xlu0 0
          %1887 = vperm.xlu0 %1886, %v1733
          %v1888 = vpop.permute.xlu0 %1887
          %1891 = vset.pattern.permute.xlu0 0
          %1892 = vperm.xlu0 %1891, %v1734
          %v1893 = vpop.permute.xlu0 %1892
          %v1895 = vsub.f32 %v1671, %v1738
          %v1896 = vsub.f32 %v1672, %v1743
          %v1897 = vsub.f32 %v1673, %v1748
          %v1898 = vsub.f32 %v1674, %v1753
          %v1899 = vsub.f32 %v1675, %v1758
          %v1900 = vsub.f32 %v1676, %v1763
          %v1901 = vsub.f32 %v1677, %v1768
          %v1902 = vsub.f32 %v1678, %v1773
          %v1903 = vsub.f32 %v1679, %v1778
          %v1904 = vsub.f32 %v1680, %v1783
          %v1905 = vsub.f32 %v1681, %v1788
          %v1906 = vsub.f32 %v1682, %v1793
          %v1907 = vsub.f32 %v1683, %v1798
          %v1908 = vsub.f32 %v1684, %v1803
          %v1909 = vsub.f32 %v1685, %v1808
          %v1910 = vsub.f32 %v1686, %v1813
          %v1911 = vsub.f32 %v1687, %v1818
          %v1912 = vsub.f32 %v1688, %v1823
          %v1913 = vsub.f32 %v1689, %v1828
          %v1914 = vsub.f32 %v1690, %v1833
          %v1915 = vsub.f32 %v1691, %v1838
          %v1916 = vsub.f32 %v1692, %v1843
          %v1917 = vsub.f32 %v1693, %v1848
          %v1918 = vsub.f32 %v1694, %v1853
          %v1919 = vsub.f32 %v1695, %v1858
          %v1920 = vsub.f32 %v1696, %v1863
          %v1921 = vsub.f32 %v1697, %v1868
          %v1922 = vsub.f32 %v1698, %v1873
          %v1923 = vsub.f32 %v1699, %v1878
          %v1924 = vsub.f32 %v1700, %v1883
          %v1925 = vsub.f32 %v1701, %v1888
          %v1926 = vsub.f32 %v1702, %v1893
          %v1927 = vpack.c.bf16 %v1896, %v1895
          %v1928 = vpack.c.bf16 %v1898, %v1897
          %v1929 = vpack.c.bf16 %v1900, %v1899
          %v1930 = vpack.c.bf16 %v1902, %v1901
          %v1931 = vpack.c.bf16 %v1904, %v1903
          %v1932 = vpack.c.bf16 %v1906, %v1905
          %v1933 = vpack.c.bf16 %v1908, %v1907
          %v1934 = vpack.c.bf16 %v1910, %v1909
          %v1935 = vpack.c.bf16 %v1912, %v1911
          %v1936 = vpack.c.bf16 %v1914, %v1913
          %v1937 = vpack.c.bf16 %v1916, %v1915
          %v1938 = vpack.c.bf16 %v1918, %v1917
          %v1939 = vpack.c.bf16 %v1920, %v1919
          %v1940 = vpack.c.bf16 %v1922, %v1921
          %v1941 = vpack.c.bf16 %v1924, %v1923
          %v1942 = vpack.c.bf16 %v1926, %v1925
          %v1943 = vld [vmem:[%s2] sm:$0xff]
          %v1944 = vld [vmem:[%s2 + $0x8] sm:$0xff]
          %v1945 = vld [vmem:[%s2 + $0x10] sm:$0xff]
          %v1946 = vld [vmem:[%s2 + $0x18] sm:$0xff]
          %v1947 = vld [vmem:[%s2 + $0x20] sm:$0xff]
          %v1948 = vld [vmem:[%s2 + $0x28] sm:$0xff]
          %v1949 = vld [vmem:[%s2 + $0x30] sm:$0xff]
          %v1950 = vld [vmem:[%s2 + $0x38] sm:$0xff]
          %v1951 = vld [vmem:[%s2 + $0x40] sm:$0xff]
          %v1952 = vld [vmem:[%s2 + $0x48] sm:$0xff]
          %v1953 = vld [vmem:[%s2 + $0x50] sm:$0xff]
          %v1954 = vld [vmem:[%s2 + $0x58] sm:$0xff]
          %v1955 = vld [vmem:[%s2 + $0x60] sm:$0xff]
          %v1956 = vld [vmem:[%s2 + $0x68] sm:$0xff]
          %v1957 = vld [vmem:[%s2 + $0x70] sm:$0xff]
          %v1958 = vld [vmem:[%s2 + $0x78] sm:$0xff]
          %v1959 = vld [vmem:[%s3] sm:$0xff]
          %v1960 = vld [vmem:[%s3 + $0x8] sm:$0xff]
          %v1961 = vld [vmem:[%s3 + $0x10] sm:$0xff]
          %v1962 = vld [vmem:[%s3 + $0x18] sm:$0xff]
          %v1963 = vld [vmem:[%s3 + $0x20] sm:$0xff]
          %v1964 = vld [vmem:[%s3 + $0x28] sm:$0xff]
          %v1965 = vld [vmem:[%s3 + $0x30] sm:$0xff]
          %v1966 = vld [vmem:[%s3 + $0x38] sm:$0xff]
          %v1967 = vld [vmem:[%s3 + $0x40] sm:$0xff]
          %v1968 = vld [vmem:[%s3 + $0x48] sm:$0xff]
          %v1969 = vld [vmem:[%s3 + $0x50] sm:$0xff]
          %v1970 = vld [vmem:[%s3 + $0x58] sm:$0xff]
          %v1971 = vld [vmem:[%s3 + $0x60] sm:$0xff]
          %v1972 = vld [vmem:[%s3 + $0x68] sm:$0xff]
          %v1973 = vld [vmem:[%s3 + $0x70] sm:$0xff]
          %v1974 = vld [vmem:[%s3 + $0x78] sm:$0xff]
          %1976 = vset.pattern.permute.xlu0 0
          %1977 = vperm.xlu0 %1976, %v1959
          %v1978 = vpop.permute.xlu0 %1977
          %1981 = vset.pattern.permute.xlu0 0
          %1982 = vperm.xlu0 %1981, %v1960
          %v1983 = vpop.permute.xlu0 %1982
          %1986 = vset.pattern.permute.xlu0 0
          %1987 = vperm.xlu0 %1986, %v1961
          %v1988 = vpop.permute.xlu0 %1987
          %1991 = vset.pattern.permute.xlu0 0
          %1992 = vperm.xlu0 %1991, %v1962
          %v1993 = vpop.permute.xlu0 %1992
          %1996 = vset.pattern.permute.xlu0 0
          %1997 = vperm.xlu0 %1996, %v1963
          %v1998 = vpop.permute.xlu0 %1997
          %2001 = vset.pattern.permute.xlu0 0
          %2002 = vperm.xlu0 %2001, %v1964
          %v2003 = vpop.permute.xlu0 %2002
          %2006 = vset.pattern.permute.xlu0 0
          %2007 = vperm.xlu0 %2006, %v1965
          %v2008 = vpop.permute.xlu0 %2007
          %2011 = vset.pattern.permute.xlu0 0
          %2012 = vperm.xlu0 %2011, %v1966
          %v2013 = vpop.permute.xlu0 %2012
          %2016 = vset.pattern.permute.xlu0 0
          %2017 = vperm.xlu0 %2016, %v1967
          %v2018 = vpop.permute.xlu0 %2017
          %2021 = vset.pattern.permute.xlu0 0
          %2022 = vperm.xlu0 %2021, %v1968
          %v2023 = vpop.permute.xlu0 %2022
          %2026 = vset.pattern.permute.xlu0 0
          %2027 = vperm.xlu0 %2026, %v1969
          %v2028 = vpop.permute.xlu0 %2027
          %2031 = vset.pattern.permute.xlu0 0
          %2032 = vperm.xlu0 %2031, %v1970
          %v2033 = vpop.permute.xlu0 %2032
          %2036 = vset.pattern.permute.xlu0 0
          %2037 = vperm.xlu0 %2036, %v1971
          %v2038 = vpop.permute.xlu0 %2037
          %2041 = vset.pattern.permute.xlu0 0
          %2042 = vperm.xlu0 %2041, %v1972
          %v2043 = vpop.permute.xlu0 %2042
          %2046 = vset.pattern.permute.xlu0 0
          %2047 = vperm.xlu0 %2046, %v1973
          %v2048 = vpop.permute.xlu0 %2047
          %2051 = vset.pattern.permute.xlu0 0
          %2052 = vperm.xlu0 %2051, %v1974
          %v2053 = vpop.permute.xlu0 %2052
          %v2071 = vunpack.c.l.b16 %v1943
          %v2072 = vunpack.c.h.b16 %v1943
          %v2073 = vunpack.c.l.b16 %v1944
          %v2074 = vunpack.c.h.b16 %v1944
          %v2075 = vunpack.c.l.b16 %v1945
          %v2076 = vunpack.c.h.b16 %v1945
          %v2077 = vunpack.c.l.b16 %v1946
          %v2078 = vunpack.c.h.b16 %v1946
          %v2079 = vunpack.c.l.b16 %v1947
          %v2080 = vunpack.c.h.b16 %v1947
          %v2081 = vunpack.c.l.b16 %v1948
          %v2082 = vunpack.c.h.b16 %v1948
          %v2083 = vunpack.c.l.b16 %v1949
          %v2084 = vunpack.c.h.b16 %v1949
          %v2085 = vunpack.c.l.b16 %v1950
          %v2086 = vunpack.c.h.b16 %v1950
          %v2087 = vunpack.c.l.b16 %v1951
          %v2088 = vunpack.c.h.b16 %v1951
          %v2089 = vunpack.c.l.b16 %v1952
          %v2090 = vunpack.c.h.b16 %v1952
          %v2091 = vunpack.c.l.b16 %v1953
          %v2092 = vunpack.c.h.b16 %v1953
          %v2093 = vunpack.c.l.b16 %v1954
          %v2094 = vunpack.c.h.b16 %v1954
          %v2095 = vunpack.c.l.b16 %v1955
          %v2096 = vunpack.c.h.b16 %v1955
          %v2097 = vunpack.c.l.b16 %v1956
          %v2098 = vunpack.c.h.b16 %v1956
          %v2099 = vunpack.c.l.b16 %v1957
          %v2100 = vunpack.c.h.b16 %v1957
          %v2101 = vunpack.c.l.b16 %v1958
          %v2102 = vunpack.c.h.b16 %v1958
          %v2103 = vpack.c.b16 %v2073, %v2071
          %v2104 = vpack.c.b16 %v2074, %v2072
          %v2105 = vpack.c.b16 %v2077, %v2075
          %v2106 = vpack.c.b16 %v2078, %v2076
          %v2107 = vpack.c.b16 %v2081, %v2079
          %v2108 = vpack.c.b16 %v2082, %v2080
          %v2109 = vpack.c.b16 %v2085, %v2083
          %v2110 = vpack.c.b16 %v2086, %v2084
          %v2111 = vpack.c.b16 %v2089, %v2087
          %v2112 = vpack.c.b16 %v2090, %v2088
          %v2113 = vpack.c.b16 %v2093, %v2091
          %v2114 = vpack.c.b16 %v2094, %v2092
          %v2115 = vpack.c.b16 %v2097, %v2095
          %v2116 = vpack.c.b16 %v2098, %v2096
          %v2117 = vpack.c.b16 %v2101, %v2099
          %v2118 = vpack.c.b16 %v2102, %v2100
          %2135 = vmatprep.subr.bf16.mxu0 0
          %2136 = vmatpush1.bf16.msra.mxu0 %v1927
          %2137 = vmatprep.subr.bf16.mxu0 0
          %2138 = vmatpush1.bf16.msra.mxu0 %v1928
          %2139 = vmatprep.subr.bf16.mxu0 0
          %2140 = vmatpush1.bf16.msra.mxu0 %v1929
          %2141 = vmatprep.subr.bf16.mxu0 0
          %2142 = vmatpush1.bf16.msra.mxu0 %v1930
          %2143 = vmatprep.subr.bf16.mxu0 0
          %2144 = vmatpush1.bf16.msra.mxu0 %v1931
          %2145 = vmatprep.subr.bf16.mxu0 0
          %2146 = vmatpush1.bf16.msra.mxu0 %v1932
          %2147 = vmatprep.subr.bf16.mxu0 0
          %2148 = vmatpush1.bf16.msra.mxu0 %v1933
          %2149 = vmatprep.subr.bf16.mxu0 0
          %2150 = vmatpush1.bf16.msra.mxu0 %v1934
          %2151 = vmatprep.subr.bf16.mxu0 0
          %2152 = vmatpush1.bf16.msra.mxu0 %v1935
          %2153 = vmatprep.subr.bf16.mxu0 0
          %2154 = vmatpush1.bf16.msra.mxu0 %v1936
          %2155 = vmatprep.subr.bf16.mxu0 0
          %2156 = vmatpush1.bf16.msra.mxu0 %v1937
          %2157 = vmatprep.subr.bf16.mxu0 0
          %2158 = vmatpush1.bf16.msra.mxu0 %v1938
          %2159 = vmatprep.subr.bf16.mxu0 0
          %2160 = vmatpush1.bf16.msra.mxu0 %v1939
          %2161 = vmatprep.subr.bf16.mxu0 0
          %2162 = vmatpush1.bf16.msra.mxu0 %v1940
          %2163 = vmatprep.subr.bf16.mxu0 0
          %2164 = vmatpush1.bf16.msra.mxu0 %v1941
          %2165 = vmatprep.subr.bf16.mxu0 0
          %2166 = vmatpush1.bf16.msra.mxu0 %v1942
          %2167 = vmatprep.mubr.bf16.mxu0 %v2104
          %2168 = vmatmul.mubr.bf16.gmra.mrb[0].mxu0 %v2103
          %v2169 = vpop.f32.mrb[0].mxu0
          %v2170 = vadd.f32 %v1978, %v2169
          %v2171 = vpop.f32.mrb[0].mxu0
          %v2172 = vpop.f32.mrb[0].mxu0
          %v2173 = vadd.f32 %v1983, %v2172
          %v2174 = vpop.f32.mrb[0].mxu0
          %2175 = vmatprep.mubr.bf16.mxu0 %v2106
          %2176 = vmatmul.mubr.bf16.gmra.mrb[0].mxu0 %v2105
          %v2177 = vpop.f32.mrb[0].mxu0
          %v2178 = vadd.f32 %v1988, %v2177
          %v2179 = vpop.f32.mrb[0].mxu0
          %v2180 = vpop.f32.mrb[0].mxu0
          %v2181 = vadd.f32 %v1993, %v2180
          %v2182 = vpop.f32.mrb[0].mxu0
          %2183 = vmatprep.mubr.bf16.mxu0 %v2108
          %2184 = vmatmul.mubr.bf16.gmra.mrb[0].mxu0 %v2107
          %v2185 = vpop.f32.mrb[0].mxu0
          %v2186 = vadd.f32 %v1998, %v2185
          %v2187 = vpop.f32.mrb[0].mxu0
          %v2188 = vpop.f32.mrb[0].mxu0
          %v2189 = vadd.f32 %v2003, %v2188
          %v2190 = vpop.f32.mrb[0].mxu0
          %2191 = vmatprep.mubr.bf16.mxu0 %v2110
          %2192 = vmatmul.mubr.bf16.gmra.mrb[0].mxu0 %v2109
          %v2193 = vpop.f32.mrb[0].mxu0
          %v2194 = vadd.f32 %v2008, %v2193
          %v2195 = vpop.f32.mrb[0].mxu0
          %v2196 = vpop.f32.mrb[0].mxu0
          %v2197 = vadd.f32 %v2013, %v2196
          %v2198 = vpop.f32.mrb[0].mxu0
          %2199 = vmatprep.mubr.bf16.mxu0 %v2112
          %2200 = vmatmul.mubr.bf16.gmra.mrb[0].mxu0 %v2111
          %v2201 = vpop.f32.mrb[0].mxu0
          %v2202 = vadd.f32 %v2018, %v2201
          %v2203 = vpop.f32.mrb[0].mxu0
          %v2204 = vpop.f32.mrb[0].mxu0
          %v2205 = vadd.f32 %v2023, %v2204
          %v2206 = vpop.f32.mrb[0].mxu0
          %2207 = vmatprep.mubr.bf16.mxu0 %v2114
          %2208 = vmatmul.mubr.bf16.gmra.mrb[0].mxu0 %v2113
          %v2209 = vpop.f32.mrb[0].mxu0
          %v2210 = vadd.f32 %v2028, %v2209
          %v2211 = vpop.f32.mrb[0].mxu0
          %v2212 = vpop.f32.mrb[0].mxu0
          %v2213 = vadd.f32 %v2033, %v2212
          %v2214 = vpop.f32.mrb[0].mxu0
          %2215 = vmatprep.mubr.bf16.mxu0 %v2116
          %2216 = vmatmul.mubr.bf16.gmra.mrb[0].mxu0 %v2115
          %v2217 = vpop.f32.mrb[0].mxu0
          %v2218 = vadd.f32 %v2038, %v2217
          %v2219 = vpop.f32.mrb[0].mxu0
          %v2220 = vpop.f32.mrb[0].mxu0
          %v2221 = vadd.f32 %v2043, %v2220
          %v2222 = vpop.f32.mrb[0].mxu0
          %2223 = vmatprep.mubr.bf16.mxu0 %v2118
          %2224 = vmatmul.mubr.bf16.gmra.mrb[0].mxu0 %v2117
          %v2225 = vpop.f32.mrb[0].mxu0
          %v2226 = vadd.f32 %v2048, %v2225
          %v2227 = vpop.f32.mrb[0].mxu0
          %v2228 = vpop.f32.mrb[0].mxu0
          %v2229 = vadd.f32 %v2053, %v2228
          %v2230 = vpop.f32.mrb[0].mxu0
          %2231 = vdwg.mxu0
          %v2232 = vmax.f32 %v2170, 0.0
          %v2233 = vmax.f32 %v2173, 0.0
          %v2234 = vmax.f32 %v2178, 0.0
          %v2235 = vmax.f32 %v2181, 0.0
          %v2236 = vmax.f32 %v2186, 0.0
          %v2237 = vmax.f32 %v2189, 0.0
          %v2238 = vmax.f32 %v2194, 0.0
          %v2239 = vmax.f32 %v2197, 0.0
          %v2240 = vmax.f32 %v2202, 0.0
          %v2241 = vmax.f32 %v2205, 0.0
          %v2242 = vmax.f32 %v2210, 0.0
          %v2243 = vmax.f32 %v2213, 0.0
          %v2244 = vmax.f32 %v2218, 0.0
          %v2245 = vmax.f32 %v2221, 0.0
          %v2246 = vmax.f32 %v2226, 0.0
          %v2247 = vmax.f32 %v2229, 0.0
          %v2248 = vld [vmem:[%s4] sm:$0xf]
          %v2249 = vld [vmem:[%s4 + $0x4] sm:$0xf]
          %v2250 = vld [vmem:[%s4 + $0x8] sm:$0xf]
          %v2251 = vld [vmem:[%s4 + $0xc] sm:$0xf]
          %v2252 = vpack.c.bf16 %v2233, %v2232
          %v2253 = vpack.c.bf16 %v2235, %v2234
          %v2254 = vpack.c.bf16 %v2237, %v2236
          %v2255 = vpack.c.bf16 %v2239, %v2238
          %v2256 = vpack.c.bf16 %v2241, %v2240
          %v2257 = vpack.c.bf16 %v2243, %v2242
          %v2258 = vpack.c.bf16 %v2245, %v2244
          %v2259 = vpack.c.bf16 %v2247, %v2246
          %v2260 = vld [vmem:[%s5] sm:$0xff]
          %v2261 = vld [vmem:[%s5 + $0x8] sm:$0xff]
          %v2262 = vld [vmem:[%s5 + $0x10] sm:$0xff]
          %v2263 = vld [vmem:[%s5 + $0x18] sm:$0xff]
          %2265 = vset.pattern.permute.xlu0 0
          %2266 = vperm.xlu0 %2265, %v2260
          %v2267 = vpop.permute.xlu0 %2266
          %2270 = vset.pattern.permute.xlu0 0
          %2271 = vperm.xlu0 %2270, %v2261
          %v2272 = vpop.permute.xlu0 %2271
          %2275 = vset.pattern.permute.xlu0 0
          %2276 = vperm.xlu0 %2275, %v2262
          %v2277 = vpop.permute.xlu0 %2276
          %2280 = vset.pattern.permute.xlu0 0
          %2281 = vperm.xlu0 %2280, %v2263
          %v2282 = vpop.permute.xlu0 %2281
          %v2288 = vunpack.c.l.b16 %v2248
          %v2289 = vunpack.c.l.b16 %v2249
          %v2290 = vunpack.c.l.b16 %v2250
          %v2291 = vunpack.c.l.b16 %v2251
          %v2292 = vpack.c.b16 %v2289, %v2288
          %v2293 = vpack.c.b16 %v2291, %v2290
          %2296 = vmatprep.subr.bf16.mxu0 0
          %2297 = vmatpush1.bf16.msra.mxu0 %v2252
          %2298 = vmatprep.subr.bf16.mxu0 0
          %2299 = vmatpush1.bf16.msra.mxu0 %v2253
          %2300 = vmatprep.subr.bf16.mxu0 0
          %2301 = vmatpush1.bf16.msra.mxu0 %v2254
          %2302 = vmatprep.subr.bf16.mxu0 0
          %2303 = vmatpush1.bf16.msra.mxu0 %v2255
          %2304 = vmatprep.subr.bf16.mxu0 0
          %2305 = vmatpush1.bf16.msra.mxu0 %v2256
          %2306 = vmatprep.subr.bf16.mxu0 0
          %2307 = vmatpush1.bf16.msra.mxu0 %v2257
          %2308 = vmatprep.subr.bf16.mxu0 0
          %2309 = vmatpush1.bf16.msra.mxu0 %v2258
          %2310 = vmatprep.subr.bf16.mxu0 0
          %2311 = vmatpush1.bf16.msra.mxu0 %v2259
          %2312 = vmatprep.subr.bf16.mxu0 0
          %2313 = vmatpush1.bf16.msra.mxu0 0
          %2314 = vmatprep.subr.bf16.mxu0 0
          %2315 = vmatpush1.bf16.msra.mxu0 0
          %2316 = vmatprep.subr.bf16.mxu0 0
          %2317 = vmatpush1.bf16.msra.mxu0 0
          %2318 = vmatprep.subr.bf16.mxu0 0
          %2319 = vmatpush1.bf16.msra.mxu0 0
          %2320 = vmatprep.subr.bf16.mxu0 0
          %2321 = vmatpush1.bf16.msra.mxu0 0
          %2322 = vmatprep.subr.bf16.mxu0 0
          %2323 = vmatpush1.bf16.msra.mxu0 0
          %2324 = vmatprep.subr.bf16.mxu0 0
          %2325 = vmatpush1.bf16.msra.mxu0 0
          %2326 = vmatprep.subr.bf16.mxu0 0
          %2327 = vmatpush1.bf16.msra.mxu0 0
          %2328 = vmatprep.mubr.bf16.mxu0 0
          %2329 = vmatmul.mubr.bf16.gmra.mrb[0].mxu0 %v2292
          %v2330 = vpop.f32.mrb[0].mxu0
          %v2331 = vadd.f32 %v2267, %v2330
          %v2332 = vpop.f32.mrb[0].mxu0
          %v2333 = vpop.f32.mrb[0].mxu0
          %v2334 = vadd.f32 %v2272, %v2333
          %v2335 = vpop.f32.mrb[0].mxu0
          %2336 = vmatprep.mubr.bf16.mxu0 0
          %2337 = vmatmul.mubr.bf16.gmra.mrb[0].mxu0 %v2293
          %v2338 = vpop.f32.mrb[0].mxu0
          %v2339 = vadd.f32 %v2277, %v2338
          %v2340 = vpop.f32.mrb[0].mxu0
          %v2341 = vpop.f32.mrb[0].mxu0
          %v2342 = vadd.f32 %v2282, %v2341
          %v2343 = vpop.f32.mrb[0].mxu0
          %2344 = vdwg.mxu0
          %v2345 = vpack.c.bf16 %v2334, %v2331
          %v2346 = vpack.c.bf16 %v2342, %v2339
          %v2347 = vlaneseq
          %v2348 = vand.u32 %v2347, 127
          %v2349 = vstv %s437
          %v2350 = vadd.s32 %v2349, %v2348
          %vm2351 = vcmp.lt.s32.totalorder %v2350, 64
          %v2352 = vsel %vm2351, 1, 0
          %vm2353 = vcmp.eq.s32.totalorder %v2352, 1
          %vm2354 = vmpackc.low %vm2353, %vm2353
          %v2355 = vsel %vm2354, 65537, 0
          %v2356 = vlaneseq
          %v2357 = vshrl.u32 %v2356, 7
          %v2358 = vsub.s32 0, %v2357
          %v2359 = vrot.slane %v2355, %v2358
          %vm2360 = vcmp.ne.s16.totalorder %v2359, 0
          %v2361 = vsel %vm2360, %v2345, 0
          %v2362 = vsel %vm2360, %v2346, 0
          %v2363 = vld [vmem:[#allocation5] sm:$0xff]
          %v2364 = vld [vmem:[#allocation5 + $0x8] sm:$0xff]
          %v2365 = vld [vmem:[#allocation5 + $0x10] sm:$0xff]
          %v2366 = vld [vmem:[#allocation5 + $0x18] sm:$0xff]
          %2367 = vmatprep.subr.bf16.mxu0 0
          %2368 = vmatpush1.bf16.xpose.msra.mxu0 %v2361
          %2369 = vmatprep.subr.bf16.mxu0 0
          %2370 = vmatpush1.bf16.xpose.msra.mxu0 %v2362
          %2371 = vmatprep.subr.bf16.mxu0 0
          %2372 = vmatpush1.bf16.xpose.msra.mxu0 0
          %2373 = vmatprep.subr.bf16.mxu0 0
          %2374 = vmatpush1.bf16.xpose.msra.mxu0 0
          %2375 = vmatprep.subr.bf16.mxu0 0
          %2376 = vmatpush1.bf16.xpose.msra.mxu0 0
          %2377 = vmatprep.subr.bf16.mxu0 0
          %2378 = vmatpush1.bf16.xpose.msra.mxu0 0
          %2379 = vmatprep.subr.bf16.mxu0 0
          %2380 = vmatpush1.bf16.xpose.msra.mxu0 0
          %2381 = vmatprep.subr.bf16.mxu0 0
          %2382 = vmatpush1.bf16.xpose.msra.mxu0 0
          %2383 = vmatprep.subr.bf16.mxu0 0
          %2384 = vmatpush1.bf16.xpose.msra.mxu0 0
          %2385 = vmatprep.subr.bf16.mxu0 0
          %2386 = vmatpush1.bf16.xpose.msra.mxu0 0
          %2387 = vmatprep.subr.bf16.mxu0 0
          %2388 = vmatpush1.bf16.xpose.msra.mxu0 0
          %2389 = vmatprep.subr.bf16.mxu0 0
          %2390 = vmatpush1.bf16.xpose.msra.mxu0 0
          %2391 = vmatprep.subr.bf16.mxu0 0
          %2392 = vmatpush1.bf16.xpose.msra.mxu0 0
          %2393 = vmatprep.subr.bf16.mxu0 0
          %2394 = vmatpush1.bf16.xpose.msra.mxu0 0
          %2395 = vmatprep.subr.bf16.mxu0 0
          %2396 = vmatpush1.bf16.xpose.msra.mxu0 0
          %2397 = vmatprep.subr.bf16.mxu0 0
          %2398 = vmatpush1.bf16.xpose.msra.mxu0 0
          %2399 = vmatprep.mubr.bf16.mxu0 0
          %2400 = vmatmul.mubr.bf16.gmra.mrb[0].mxu0 %v2361
          %v2401 = vpop.f32.mrb[0].mxu0
          %v2402 = vadd.f32 0.0, %v2401
          %v2403 = vpop.f32.mrb[0].mxu0
          %v2404 = vpop.f32.mrb[0].mxu0
          %v2405 = vadd.f32 0.0, %v2404
          %v2406 = vpop.f32.mrb[0].mxu0
          %2407 = vmatprep.mubr.bf16.mxu0 0
          %2408 = vmatmul.mubr.bf16.gmra.mrb[0].mxu0 %v2362
          %v2409 = vpop.f32.mrb[0].mxu0
          %v2410 = vadd.f32 0.0, %v2409
          %v2411 = vpop.f32.mrb[0].mxu0
          %v2412 = vpop.f32.mrb[0].mxu0
          %v2413 = vadd.f32 0.0, %v2412
          %v2414 = vpop.f32.mrb[0].mxu0
          %2415 = vdwg.mxu0
          %v2416 = vadd.f32 %v2363, %v2402
          %v2417 = vadd.f32 %v2364, %v2405
          %v2418 = vadd.f32 %v2365, %v2410
          %v2419 = vadd.f32 %v2366, %v2413
          %vm2420 = vcmask 261120
          %2421 = vst.msk [vmem:[#allocation5] sm:$0xff] %vm2420, %v2416
          %2422 = vst.msk [vmem:[#allocation5 + $0x8] sm:$0xff] %vm2420, %v2417
          %2423 = vst.msk [vmem:[#allocation5 + $0x10] sm:$0xff] %vm2420, %v2418
          %2424 = vst.msk [vmem:[#allocation5 + $0x18] sm:$0xff] %vm2420, %v2419
        $region72: #{tpu_custom_call.1} parent=55 // pred_fallthru
          _
        %p2425 = scmp.eq.s32.totalorder %s32, 2
        // Predicated region
        $region77: #{tpu_custom_call.1} parent=55 // pred_check
          %p2426 = pneg %p2425
        $region78: #{tpu_custom_call.1} parent=55 // pred_check_branch
          %2428 = sbr.rel (%p2426) target = $region80
        $region79: #{tpu_custom_call.1} parent=55 // pred_region
          %p2429 = scmp.eq.s32.totalorder %s33, 0
          // Predicated region
          $region81: #{tpu_custom_call.1} parent=79 // pred_check
            %p2430 = pneg %p2429
          $region82: #{tpu_custom_call.1} parent=79 // pred_check_branch
            %2432 = sbr.rel (%p2430) target = $region84
          $region83: #{tpu_custom_call.1} parent=79 // pred_region
            %v2433 = vld [vmem:[#allocation5] sm:$0xff]
            %v2434 = vld [vmem:[#allocation5 + $0x8] sm:$0xff]
            %v2435 = vld [vmem:[#allocation5 + $0x10] sm:$0xff]
            %v2436 = vld [vmem:[#allocation5 + $0x18] sm:$0xff]
            %v2437 = vmul.f32 %v2433, 0.015625
            %v2438 = vmul.f32 %v2434, 0.015625
            %v2439 = vmul.f32 %v2435, 0.015625
            %v2440 = vmul.f32 %v2436, 0.015625
            %vm2441 = vcmask 261120
            %v2442 = vsel %vm2441, %v2437, -inf
            %2443 = vmax.xlane.f32.xlu0 %v2442
            %v2444 = vpop.xlane.xlu0 %2443
            %v2445 = vsel %vm2441, %v2438, -inf
            %2446 = vmax.xlane.f32.xlu0 %v2445
            %v2447 = vpop.xlane.xlu0 %2446
            %v2448 = vsel %vm2441, %v2439, -inf
            %2449 = vmax.xlane.f32.xlu0 %v2448
            %v2450 = vpop.xlane.xlu0 %2449
            %v2451 = vsel %vm2441, %v2440, -inf
            %2452 = vmax.xlane.f32.xlu0 %v2451
            %v2453 = vpop.xlane.xlu0 %2452
            %v2454 = vsub.f32 %v2437, %v2444
            %v2455 = vsub.f32 %v2438, %v2447
            %v2456 = vsub.f32 %v2439, %v2450
            %v2457 = vsub.f32 %v2440, %v2453
            %v2458 = vmul.f32 %v2454, 1.442695
            %v2459 = vpow.pop %v2458
            %v2460 = vmul.f32 %v2455, 1.442695
            %v2461 = vpow.pop %v2460
            %v2462 = vmul.f32 %v2456, 1.442695
            %v2463 = vpow.pop %v2462
            %v2464 = vmul.f32 %v2457, 1.442695
            %v2465 = vpow.pop %v2464
            %v2466 = vsel %vm2441, %v2459, 0.0
            %2467 = vadd.xlane.f32.xlu0 %v2466
            %v2468 = vpop.xlane.xlu0 %2467
            %v2469 = vsel %vm2441, %v2461, 0.0
            %2470 = vadd.xlane.f32.xlu0 %v2469
            %v2471 = vpop.xlane.xlu0 %2470
            %v2472 = vsel %vm2441, %v2463, 0.0
            %2473 = vadd.xlane.f32.xlu0 %v2472
            %v2474 = vpop.xlane.xlu0 %2473
            %v2475 = vsel %vm2441, %v2465, 0.0
            %2476 = vadd.xlane.f32.xlu0 %v2475
            %v2477 = vpop.xlane.xlu0 %2476
            %v2478 = vrcp.pop %v2468
            %v2479 = vrcp.pop %v2471
            %v2480 = vrcp.pop %v2474
            %v2481 = vrcp.pop %v2477
            %v2482 = vmul.f32 %v2459, %v2478
            %v2483 = vmul.f32 %v2461, %v2479
            %v2484 = vmul.f32 %v2463, %v2480
            %v2485 = vmul.f32 %v2465, %v2481
            %v2486 = vmul.f32 %v2482, 0.17677669
            %v2487 = vmul.f32 %v2483, 0.17677669
            %v2488 = vmul.f32 %v2484, 0.17677669
            %v2489 = vmul.f32 %v2485, 0.17677669
            %v2490 = vld [vmem:[%s7] sm:$0xff]
            %v2491 = vld [vmem:[%s7 + $0x8] sm:$0xff]
            %v2492 = vld [vmem:[%s7 + $0x10] sm:$0xff]
            %v2493 = vld [vmem:[%s7 + $0x18] sm:$0xff]
            %v2494 = vld [vmem:[%s7 + $0x20] sm:$0xff]
            %v2495 = vld [vmem:[%s7 + $0x28] sm:$0xff]
            %v2496 = vld [vmem:[%s7 + $0x30] sm:$0xff]
            %v2497 = vld [vmem:[%s7 + $0x38] sm:$0xff]
            %v2498 = vld [vmem:[%s7 + $0x40] sm:$0xff]
            %v2499 = vld [vmem:[%s7 + $0x48] sm:$0xff]
            %v2500 = vld [vmem:[%s7 + $0x50] sm:$0xff]
            %v2501 = vld [vmem:[%s7 + $0x58] sm:$0xff]
            %v2502 = vld [vmem:[%s7 + $0x60] sm:$0xff]
            %v2503 = vld [vmem:[%s7 + $0x68] sm:$0xff]
            %v2504 = vld [vmem:[%s7 + $0x70] sm:$0xff]
            %v2505 = vld [vmem:[%s7 + $0x78] sm:$0xff]
            %v2506 = vld [vmem:[%s7 + $0x80] sm:$0xff]
            %v2507 = vld [vmem:[%s7 + $0x88] sm:$0xff]
            %v2508 = vld [vmem:[%s7 + $0x90] sm:$0xff]
            %v2509 = vld [vmem:[%s7 + $0x98] sm:$0xff]
            %v2510 = vld [vmem:[%s7 + $0xa0] sm:$0xff]
            %v2511 = vld [vmem:[%s7 + $0xa8] sm:$0xff]
            %v2512 = vld [vmem:[%s7 + $0xb0] sm:$0xff]
            %v2513 = vld [vmem:[%s7 + $0xb8] sm:$0xff]
            %v2514 = vld [vmem:[%s7 + $0xc0] sm:$0xff]
            %v2515 = vld [vmem:[%s7 + $0xc8] sm:$0xff]
            %v2516 = vld [vmem:[%s7 + $0xd0] sm:$0xff]
            %v2517 = vld [vmem:[%s7 + $0xd8] sm:$0xff]
            %v2518 = vld [vmem:[%s7 + $0xe0] sm:$0xff]
            %v2519 = vld [vmem:[%s7 + $0xe8] sm:$0xff]
            %v2520 = vld [vmem:[%s7 + $0xf0] sm:$0xff]
            %v2521 = vld [vmem:[%s7 + $0xf8] sm:$0xff]
            %v2523 = vsel %vm2441, %v2490, 0
            %v2526 = vsel %vm2441, %v2491, 0
            %v2529 = vsel %vm2441, %v2492, 0
            %v2532 = vsel %vm2441, %v2493, 0
            %v2535 = vsel %vm2441, %v2494, 0
            %v2538 = vsel %vm2441, %v2495, 0
            %v2541 = vsel %vm2441, %v2496, 0
            %v2544 = vsel %vm2441, %v2497, 0
            %v2547 = vsel %vm2441, %v2498, 0
            %v2550 = vsel %vm2441, %v2499, 0
            %v2553 = vsel %vm2441, %v2500, 0
            %v2556 = vsel %vm2441, %v2501, 0
            %v2559 = vsel %vm2441, %v2502, 0
            %v2562 = vsel %vm2441, %v2503, 0
            %v2565 = vsel %vm2441, %v2504, 0
            %v2568 = vsel %vm2441, %v2505, 0
            %v2571 = vsel %vm2441, %v2506, 0
            %v2574 = vsel %vm2441, %v2507, 0
            %v2577 = vsel %vm2441, %v2508, 0
            %v2580 = vsel %vm2441, %v2509, 0
            %v2583 = vsel %vm2441, %v2510, 0
            %v2586 = vsel %vm2441, %v2511, 0
            %v2589 = vsel %vm2441, %v2512, 0
            %v2592 = vsel %vm2441, %v2513, 0
            %v2595 = vsel %vm2441, %v2514, 0
            %v2598 = vsel %vm2441, %v2515, 0
            %v2601 = vsel %vm2441, %v2516, 0
            %v2604 = vsel %vm2441, %v2517, 0
            %v2607 = vsel %vm2441, %v2518, 0
            %v2610 = vsel %vm2441, %v2519, 0
            %v2613 = vsel %vm2441, %v2520, 0
            %v2616 = vsel %vm2441, %v2521, 0
            %2618 = vmatprep.subr.mxu0 0.0
            %2619 = vmatpush1.msra.mxu0 %v2486
            %2620 = vmatprep.subr.mxu0 0.0
            %2621 = vmatpush1.msra.mxu0 %v2487
            %2622 = vmatprep.subr.mxu0 0.0
            %2623 = vmatpush1.msra.mxu0 %v2488
            %2624 = vmatprep.subr.mxu0 0.0
            %2625 = vmatpush1.msra.mxu0 %v2489
            %2626 = vmatprep.subr.mxu0 0.0
            %2627 = vmatpush1.msra.mxu0 0.0
            %2628 = vmatprep.subr.mxu0 0.0
            %2629 = vmatpush1.msra.mxu0 0.0
            %2630 = vmatprep.subr.mxu0 0.0
            %2631 = vmatpush1.msra.mxu0 0.0
            %2632 = vmatprep.subr.mxu0 0.0
            %2633 = vmatpush1.msra.mxu0 0.0
            %2634 = vmatprep.subr.mxu0 0.0
            %2635 = vmatpush1.msra.mxu0 0.0
            %2636 = vmatprep.subr.mxu0 0.0
            %2637 = vmatpush1.msra.mxu0 0.0
            %2638 = vmatprep.subr.mxu0 0.0
            %2639 = vmatpush1.msra.mxu0 0.0
            %2640 = vmatprep.subr.mxu0 0.0
            %2641 = vmatpush1.msra.mxu0 0.0
            %2642 = vmatprep.subr.mxu0 0.0
            %2643 = vmatpush1.msra.mxu0 0.0
            %2644 = vmatprep.subr.mxu0 0.0
            %2645 = vmatpush1.msra.mxu0 0.0
            %2646 = vmatprep.subr.mxu0 0.0
            %2647 = vmatpush1.msra.mxu0 0.0
            %2648 = vmatprep.subr.mxu0 0.0
            %2649 = vmatpush1.msra.mxu0 0.0
            %2650 = vmatprep.subr.mxu0 0.0
            %2651 = vmatpush1.msra.mxu0 0.0
            %2652 = vmatprep.subr.mxu0 0.0
            %2653 = vmatpush1.msra.mxu0 0.0
            %2654 = vmatprep.subr.mxu0 0.0
            %2655 = vmatpush1.msra.mxu0 0.0
            %2656 = vmatprep.subr.mxu0 0.0
            %2657 = vmatpush1.msra.mxu0 0.0
            %2658 = vmatprep.subr.mxu0 0.0
            %2659 = vmatpush1.msra.mxu0 0.0
            %2660 = vmatprep.subr.mxu0 0.0
            %2661 = vmatpush1.msra.mxu0 0.0
            %2662 = vmatprep.subr.mxu0 0.0
            %2663 = vmatpush1.msra.mxu0 0.0
            %2664 = vmatprep.subr.mxu0 0.0
            %2665 = vmatpush1.msra.mxu0 0.0
            %2666 = vmatprep.subr.mxu0 0.0
            %2667 = vmatpush1.msra.mxu0 0.0
            %2668 = vmatprep.subr.mxu0 0.0
            %2669 = vmatpush1.msra.mxu0 0.0
            %2670 = vmatprep.subr.mxu0 0.0
            %2671 = vmatpush1.msra.mxu0 0.0
            %2672 = vmatprep.subr.mxu0 0.0
            %2673 = vmatpush1.msra.mxu0 0.0
            %2674 = vmatprep.subr.mxu0 0.0
            %2675 = vmatpush1.msra.mxu0 0.0
            %2676 = vmatprep.subr.mxu0 0.0
            %2677 = vmatpush1.msra.mxu0 0.0
            %2678 = vmatprep.subr.mxu0 0.0
            %2679 = vmatpush1.msra.mxu0 0.0
            %2680 = vmatprep.subr.mxu0 0.0
            %2681 = vmatpush1.msra.mxu0 0.0
            %2682 = vmatprep.mubr.f32.mxu0 0.0
            %2683 = vmatmul.mubr.f32.gmra.mrb[0].mxu0 %v2523
            %v2684 = vpop.f32.mrb[0].mxu0
            %v2685 = vadd.f32 0.0, %v2684
            %v2686 = vpop.f32.mrb[0].mxu0
            %2687 = vmatprep.mubr.f32.mxu0 0.0
            %2688 = vmatmul.mubr.f32.gmra.mrb[0].mxu0 %v2526
            %v2689 = vpop.f32.mrb[0].mxu0
            %v2690 = vadd.f32 0.0, %v2689
            %v2691 = vpop.f32.mrb[0].mxu0
            %2692 = vmatprep.mubr.f32.mxu0 0.0
            %2693 = vmatmul.mubr.f32.gmra.mrb[0].mxu0 %v2529
            %v2694 = vpop.f32.mrb[0].mxu0
            %v2695 = vadd.f32 0.0, %v2694
            %v2696 = vpop.f32.mrb[0].mxu0
            %2697 = vmatprep.mubr.f32.mxu0 0.0
            %2698 = vmatmul.mubr.f32.gmra.mrb[0].mxu0 %v2532
            %v2699 = vpop.f32.mrb[0].mxu0
            %v2700 = vadd.f32 0.0, %v2699
            %v2701 = vpop.f32.mrb[0].mxu0
            %2702 = vmatprep.mubr.f32.mxu0 0.0
            %2703 = vmatmul.mubr.f32.gmra.mrb[0].mxu0 %v2535
            %v2704 = vpop.f32.mrb[0].mxu0
            %v2705 = vadd.f32 0.0, %v2704
            %v2706 = vpop.f32.mrb[0].mxu0
            %2707 = vmatprep.mubr.f32.mxu0 0.0
            %2708 = vmatmul.mubr.f32.gmra.mrb[0].mxu0 %v2538
            %v2709 = vpop.f32.mrb[0].mxu0
            %v2710 = vadd.f32 0.0, %v2709
            %v2711 = vpop.f32.mrb[0].mxu0
            %2712 = vmatprep.mubr.f32.mxu0 0.0
            %2713 = vmatmul.mubr.f32.gmra.mrb[0].mxu0 %v2541
            %v2714 = vpop.f32.mrb[0].mxu0
            %v2715 = vadd.f32 0.0, %v2714
            %v2716 = vpop.f32.mrb[0].mxu0
            %2717 = vmatprep.mubr.f32.mxu0 0.0
            %2718 = vmatmul.mubr.f32.gmra.mrb[0].mxu0 %v2544
            %v2719 = vpop.f32.mrb[0].mxu0
            %v2720 = vadd.f32 0.0, %v2719
            %v2721 = vpop.f32.mrb[0].mxu0
            %2722 = vmatprep.mubr.f32.mxu0 0.0
            %2723 = vmatmul.mubr.f32.gmra.mrb[0].mxu0 %v2547
            %v2724 = vpop.f32.mrb[0].mxu0
            %v2725 = vadd.f32 0.0, %v2724
            %v2726 = vpop.f32.mrb[0].mxu0
            %2727 = vmatprep.mubr.f32.mxu0 0.0
            %2728 = vmatmul.mubr.f32.gmra.mrb[0].mxu0 %v2550
            %v2729 = vpop.f32.mrb[0].mxu0
            %v2730 = vadd.f32 0.0, %v2729
            %v2731 = vpop.f32.mrb[0].mxu0
            %2732 = vmatprep.mubr.f32.mxu0 0.0
            %2733 = vmatmul.mubr.f32.gmra.mrb[0].mxu0 %v2553
            %v2734 = vpop.f32.mrb[0].mxu0
            %v2735 = vadd.f32 0.0, %v2734
            %v2736 = vpop.f32.mrb[0].mxu0
            %2737 = vmatprep.mubr.f32.mxu0 0.0
            %2738 = vmatmul.mubr.f32.gmra.mrb[0].mxu0 %v2556
            %v2739 = vpop.f32.mrb[0].mxu0
            %v2740 = vadd.f32 0.0, %v2739
            %v2741 = vpop.f32.mrb[0].mxu0
            %2742 = vmatprep.mubr.f32.mxu0 0.0
            %2743 = vmatmul.mubr.f32.gmra.mrb[0].mxu0 %v2559
            %v2744 = vpop.f32.mrb[0].mxu0
            %v2745 = vadd.f32 0.0, %v2744
            %v2746 = vpop.f32.mrb[0].mxu0
            %2747 = vmatprep.mubr.f32.mxu0 0.0
            %2748 = vmatmul.mubr.f32.gmra.mrb[0].mxu0 %v2562
            %v2749 = vpop.f32.mrb[0].mxu0
            %v2750 = vadd.f32 0.0, %v2749
            %v2751 = vpop.f32.mrb[0].mxu0
            %2752 = vmatprep.mubr.f32.mxu0 0.0
            %2753 = vmatmul.mubr.f32.gmra.mrb[0].mxu0 %v2565
            %v2754 = vpop.f32.mrb[0].mxu0
            %v2755 = vadd.f32 0.0, %v2754
            %v2756 = vpop.f32.mrb[0].mxu0
            %2757 = vmatprep.mubr.f32.mxu0 0.0
            %2758 = vmatmul.mubr.f32.gmra.mrb[0].mxu0 %v2568
            %v2759 = vpop.f32.mrb[0].mxu0
            %v2760 = vadd.f32 0.0, %v2759
            %v2761 = vpop.f32.mrb[0].mxu0
            %2762 = vmatprep.mubr.f32.mxu0 0.0
            %2763 = vmatmul.mubr.f32.gmra.mrb[0].mxu0 %v2571
            %v2764 = vpop.f32.mrb[0].mxu0
            %v2765 = vadd.f32 0.0, %v2764
            %v2766 = vpop.f32.mrb[0].mxu0
            %2767 = vmatprep.mubr.f32.mxu0 0.0
            %2768 = vmatmul.mubr.f32.gmra.mrb[0].mxu0 %v2574
            %v2769 = vpop.f32.mrb[0].mxu0
            %v2770 = vadd.f32 0.0, %v2769
            %v2771 = vpop.f32.mrb[0].mxu0
            %2772 = vmatprep.mubr.f32.mxu0 0.0
            %2773 = vmatmul.mubr.f32.gmra.mrb[0].mxu0 %v2577
            %v2774 = vpop.f32.mrb[0].mxu0
            %v2775 = vadd.f32 0.0, %v2774
            %v2776 = vpop.f32.mrb[0].mxu0
            %2777 = vmatprep.mubr.f32.mxu0 0.0
            %2778 = vmatmul.mubr.f32.gmra.mrb[0].mxu0 %v2580
            %v2779 = vpop.f32.mrb[0].mxu0
            %v2780 = vadd.f32 0.0, %v2779
            %v2781 = vpop.f32.mrb[0].mxu0
            %2782 = vmatprep.mubr.f32.mxu0 0.0
            %2783 = vmatmul.mubr.f32.gmra.mrb[0].mxu0 %v2583
            %v2784 = vpop.f32.mrb[0].mxu0
            %v2785 = vadd.f32 0.0, %v2784
            %v2786 = vpop.f32.mrb[0].mxu0
            %2787 = vmatprep.mubr.f32.mxu0 0.0
            %2788 = vmatmul.mubr.f32.gmra.mrb[0].mxu0 %v2586
            %v2789 = vpop.f32.mrb[0].mxu0
            %v2790 = vadd.f32 0.0, %v2789
            %v2791 = vpop.f32.mrb[0].mxu0
            %2792 = vmatprep.mubr.f32.mxu0 0.0
            %2793 = vmatmul.mubr.f32.gmra.mrb[0].mxu0 %v2589
            %v2794 = vpop.f32.mrb[0].mxu0
            %v2795 = vadd.f32 0.0, %v2794
            %v2796 = vpop.f32.mrb[0].mxu0
            %2797 = vmatprep.mubr.f32.mxu0 0.0
            %2798 = vmatmul.mubr.f32.gmra.mrb[0].mxu0 %v2592
            %v2799 = vpop.f32.mrb[0].mxu0
            %v2800 = vadd.f32 0.0, %v2799
            %v2801 = vpop.f32.mrb[0].mxu0
            %2802 = vmatprep.mubr.f32.mxu0 0.0
            %2803 = vmatmul.mubr.f32.gmra.mrb[0].mxu0 %v2595
            %v2804 = vpop.f32.mrb[0].mxu0
            %v2805 = vadd.f32 0.0, %v2804
            %v2806 = vpop.f32.mrb[0].mxu0
            %2807 = vmatprep.mubr.f32.mxu0 0.0
            %2808 = vmatmul.mubr.f32.gmra.mrb[0].mxu0 %v2598
            %v2809 = vpop.f32.mrb[0].mxu0
            %v2810 = vadd.f32 0.0, %v2809
            %v2811 = vpop.f32.mrb[0].mxu0
            %2812 = vmatprep.mubr.f32.mxu0 0.0
            %2813 = vmatmul.mubr.f32.gmra.mrb[0].mxu0 %v2601
            %v2814 = vpop.f32.mrb[0].mxu0
            %v2815 = vadd.f32 0.0, %v2814
            %v2816 = vpop.f32.mrb[0].mxu0
            %2817 = vmatprep.mubr.f32.mxu0 0.0
            %2818 = vmatmul.mubr.f32.gmra.mrb[0].mxu0 %v2604
            %v2819 = vpop.f32.mrb[0].mxu0
            %v2820 = vadd.f32 0.0, %v2819
            %v2821 = vpop.f32.mrb[0].mxu0
            %2822 = vmatprep.mubr.f32.mxu0 0.0
            %2823 = vmatmul.mubr.f32.gmra.mrb[0].mxu0 %v2607
            %v2824 = vpop.f32.mrb[0].mxu0
            %v2825 = vadd.f32 0.0, %v2824
            %v2826 = vpop.f32.mrb[0].mxu0
            %2827 = vmatprep.mubr.f32.mxu0 0.0
            %2828 = vmatmul.mubr.f32.gmra.mrb[0].mxu0 %v2610
            %v2829 = vpop.f32.mrb[0].mxu0
            %v2830 = vadd.f32 0.0, %v2829
            %v2831 = vpop.f32.mrb[0].mxu0
            %2832 = vmatprep.mubr.f32.mxu0 0.0
            %2833 = vmatmul.mubr.f32.gmra.mrb[0].mxu0 %v2613
            %v2834 = vpop.f32.mrb[0].mxu0
            %v2835 = vadd.f32 0.0, %v2834
            %v2836 = vpop.f32.mrb[0].mxu0
            %2837 = vmatprep.mubr.f32.mxu0 0.0
            %2838 = vmatmul.mubr.f32.gmra.mrb[0].mxu0 %v2616
            %v2839 = vpop.f32.mrb[0].mxu0
            %v2840 = vadd.f32 0.0, %v2839
            %v2841 = vpop.f32.mrb[0].mxu0
            %2842 = vdwg.mxu0
            %v2843 = vpack.c.bf16 %v2690, %v2685
            %v2844 = vpack.c.bf16 %v2700, %v2695
            %v2845 = vpack.c.bf16 %v2710, %v2705
            %v2846 = vpack.c.bf16 %v2720, %v2715
            %v2847 = vpack.c.bf16 %v2730, %v2725
            %v2848 = vpack.c.bf16 %v2740, %v2735
            %v2849 = vpack.c.bf16 %v2750, %v2745
            %v2850 = vpack.c.bf16 %v2760, %v2755
            %v2851 = vpack.c.bf16 %v2770, %v2765
            %v2852 = vpack.c.bf16 %v2780, %v2775
            %v2853 = vpack.c.bf16 %v2790, %v2785
            %v2854 = vpack.c.bf16 %v2800, %v2795
            %v2855 = vpack.c.bf16 %v2810, %v2805
            %v2856 = vpack.c.bf16 %v2820, %v2815
            %v2857 = vpack.c.bf16 %v2830, %v2825
            %v2858 = vpack.c.bf16 %v2840, %v2835
            %v2859 = vld [vmem:[%s4] sm:$0xf]
            %v2860 = vld [vmem:[%s4 + $0x4] sm:$0xf]
            %v2861 = vld [vmem:[%s4 + $0x8] sm:$0xf]
            %v2862 = vld [vmem:[%s4 + $0xc] sm:$0xf]
            %v2867 = vunpack.c.l.b16 %v2859
            %v2868 = vunpack.c.l.b16 %v2860
            %v2869 = vunpack.c.l.b16 %v2861
            %v2870 = vunpack.c.l.b16 %v2862
            %v2871 = vpack.c.b16 %v2868, %v2867
            %v2872 = vpack.c.b16 %v2870, %v2869
            %v2876 = vsel %vm2441, %v2843, 0
            %v2879 = vsel %vm2441, %v2844, 0
            %v2882 = vsel %vm2441, %v2845, 0
            %v2885 = vsel %vm2441, %v2846, 0
            %v2888 = vsel %vm2441, %v2847, 0
            %v2891 = vsel %vm2441, %v2848, 0
            %v2894 = vsel %vm2441, %v2849, 0
            %v2897 = vsel %vm2441, %v2850, 0
            %v2900 = vsel %vm2441, %v2851, 0
            %v2903 = vsel %vm2441, %v2852, 0
            %v2906 = vsel %vm2441, %v2853, 0
            %v2909 = vsel %vm2441, %v2854, 0
            %v2912 = vsel %vm2441, %v2855, 0
            %v2915 = vsel %vm2441, %v2856, 0
            %v2918 = vsel %vm2441, %v2857, 0
            %v2921 = vsel %vm2441, %v2858, 0
            %2923 = vmatprep.subr.bf16.mxu0 0
            %2924 = vmatpush1.bf16.msra.mxu0 %v2871
            %2925 = vmatprep.subr.bf16.mxu0 0
            %2926 = vmatpush1.bf16.msra.mxu0 %v2872
            %2927 = vmatprep.subr.bf16.mxu0 0
            %2928 = vmatpush1.bf16.msra.mxu0 0
            %2929 = vmatprep.subr.bf16.mxu0 0
            %2930 = vmatpush1.bf16.msra.mxu0 0
            %2931 = vmatprep.subr.bf16.mxu0 0
            %2932 = vmatpush1.bf16.msra.mxu0 0
            %2933 = vmatprep.subr.bf16.mxu0 0
            %2934 = vmatpush1.bf16.msra.mxu0 0
            %2935 = vmatprep.subr.bf16.mxu0 0
            %2936 = vmatpush1.bf16.msra.mxu0 0
            %2937 = vmatprep.subr.bf16.mxu0 0
            %2938 = vmatpush1.bf16.msra.mxu0 0
            %2939 = vmatprep.subr.bf16.mxu0 0
            %2940 = vmatpush1.bf16.msra.mxu0 0
            %2941 = vmatprep.subr.bf16.mxu0 0
            %2942 = vmatpush1.bf16.msra.mxu0 0
            %2943 = vmatprep.subr.bf16.mxu0 0
            %2944 = vmatpush1.bf16.msra.mxu0 0
            %2945 = vmatprep.subr.bf16.mxu0 0
            %2946 = vmatpush1.bf16.msra.mxu0 0
            %2947 = vmatprep.subr.bf16.mxu0 0
            %2948 = vmatpush1.bf16.msra.mxu0 0
            %2949 = vmatprep.subr.bf16.mxu0 0
            %2950 = vmatpush1.bf16.msra.mxu0 0
            %2951 = vmatprep.subr.bf16.mxu0 0
            %2952 = vmatpush1.bf16.msra.mxu0 0
            %2953 = vmatprep.subr.bf16.mxu0 0
            %2954 = vmatpush1.bf16.msra.mxu0 0
            %2955 = vmatprep.mubr.bf16.mxu0 0
            %2956 = vmatmul.mubr.bf16.gmra.mrb[0].mxu0 %v2876
            %v2957 = vpop.f32.mrb[0].mxu0
            %v2958 = vadd.f32 0.0, %v2957
            %v2959 = vpop.f32.mrb[0].mxu0
            %v2960 = vpop.f32.mrb[0].mxu0
            %v2961 = vadd.f32 0.0, %v2960
            %v2962 = vpop.f32.mrb[0].mxu0
            %2963 = vmatprep.mubr.bf16.mxu0 0
            %2964 = vmatmul.mubr.bf16.gmra.mrb[0].mxu0 %v2879
            %v2965 = vpop.f32.mrb[0].mxu0
            %v2966 = vadd.f32 0.0, %v2965
            %v2967 = vpop.f32.mrb[0].mxu0
            %v2968 = vpop.f32.mrb[0].mxu0
            %v2969 = vadd.f32 0.0, %v2968
            %v2970 = vpop.f32.mrb[0].mxu0
            %2971 = vmatprep.mubr.bf16.mxu0 0
            %2972 = vmatmul.mubr.bf16.gmra.mrb[0].mxu0 %v2882
            %v2973 = vpop.f32.mrb[0].mxu0
            %v2974 = vadd.f32 0.0, %v2973
            %v2975 = vpop.f32.mrb[0].mxu0
            %v2976 = vpop.f32.mrb[0].mxu0
            %v2977 = vadd.f32 0.0, %v2976
            %v2978 = vpop.f32.mrb[0].mxu0
            %2979 = vmatprep.mubr.bf16.mxu0 0
            %2980 = vmatmul.mubr.bf16.gmra.mrb[0].mxu0 %v2885
            %v2981 = vpop.f32.mrb[0].mxu0
            %v2982 = vadd.f32 0.0, %v2981
            %v2983 = vpop.f32.mrb[0].mxu0
            %v2984 = vpop.f32.mrb[0].mxu0
            %v2985 = vadd.f32 0.0, %v2984
            %v2986 = vpop.f32.mrb[0].mxu0
            %2987 = vmatprep.mubr.bf16.mxu0 0
            %2988 = vmatmul.mubr.bf16.gmra.mrb[0].mxu0 %v2888
            %v2989 = vpop.f32.mrb[0].mxu0
            %v2990 = vadd.f32 0.0, %v2989
            %v2991 = vpop.f32.mrb[0].mxu0
            %v2992 = vpop.f32.mrb[0].mxu0
            %v2993 = vadd.f32 0.0, %v2992
            %v2994 = vpop.f32.mrb[0].mxu0
            %2995 = vmatprep.mubr.bf16.mxu0 0
            %2996 = vmatmul.mubr.bf16.gmra.mrb[0].mxu0 %v2891
            %v2997 = vpop.f32.mrb[0].mxu0
            %v2998 = vadd.f32 0.0, %v2997
            %v2999 = vpop.f32.mrb[0].mxu0
            %v3000 = vpop.f32.mrb[0].mxu0
            %v3001 = vadd.f32 0.0, %v3000
            %v3002 = vpop.f32.mrb[0].mxu0
            %3003 = vmatprep.mubr.bf16.mxu0 0
            %3004 = vmatmul.mubr.bf16.gmra.mrb[0].mxu0 %v2894
            %v3005 = vpop.f32.mrb[0].mxu0
            %v3006 = vadd.f32 0.0, %v3005
            %v3007 = vpop.f32.mrb[0].mxu0
            %v3008 = vpop.f32.mrb[0].mxu0
            %v3009 = vadd.f32 0.0, %v3008
            %v3010 = vpop.f32.mrb[0].mxu0
            %3011 = vmatprep.mubr.bf16.mxu0 0
            %3012 = vmatmul.mubr.bf16.gmra.mrb[0].mxu0 %v2897
            %v3013 = vpop.f32.mrb[0].mxu0
            %v3014 = vadd.f32 0.0, %v3013
            %v3015 = vpop.f32.mrb[0].mxu0
            %v3016 = vpop.f32.mrb[0].mxu0
            %v3017 = vadd.f32 0.0, %v3016
            %v3018 = vpop.f32.mrb[0].mxu0
            %3019 = vmatprep.mubr.bf16.mxu0 0
            %3020 = vmatmul.mubr.bf16.gmra.mrb[0].mxu0 %v2900
            %v3021 = vpop.f32.mrb[0].mxu0
            %v3022 = vadd.f32 0.0, %v3021
            %v3023 = vpop.f32.mrb[0].mxu0
            %v3024 = vpop.f32.mrb[0].mxu0
            %v3025 = vadd.f32 0.0, %v3024
            %v3026 = vpop.f32.mrb[0].mxu0
            %3027 = vmatprep.mubr.bf16.mxu0 0
            %3028 = vmatmul.mubr.bf16.gmra.mrb[0].mxu0 %v2903
            %v3029 = vpop.f32.mrb[0].mxu0
            %v3030 = vadd.f32 0.0, %v3029
            %v3031 = vpop.f32.mrb[0].mxu0
            %v3032 = vpop.f32.mrb[0].mxu0
            %v3033 = vadd.f32 0.0, %v3032
            %v3034 = vpop.f32.mrb[0].mxu0
            %3035 = vmatprep.mubr.bf16.mxu0 0
            %3036 = vmatmul.mubr.bf16.gmra.mrb[0].mxu0 %v2906
            %v3037 = vpop.f32.mrb[0].mxu0
            %v3038 = vadd.f32 0.0, %v3037
            %v3039 = vpop.f32.mrb[0].mxu0
            %v3040 = vpop.f32.mrb[0].mxu0
            %v3041 = vadd.f32 0.0, %v3040
            %v3042 = vpop.f32.mrb[0].mxu0
            %3043 = vmatprep.mubr.bf16.mxu0 0
            %3044 = vmatmul.mubr.bf16.gmra.mrb[0].mxu0 %v2909
            %v3045 = vpop.f32.mrb[0].mxu0
            %v3046 = vadd.f32 0.0, %v3045
            %v3047 = vpop.f32.mrb[0].mxu0
            %v3048 = vpop.f32.mrb[0].mxu0
            %v3049 = vadd.f32 0.0, %v3048
            %v3050 = vpop.f32.mrb[0].mxu0
            %3051 = vmatprep.mubr.bf16.mxu0 0
            %3052 = vmatmul.mubr.bf16.gmra.mrb[0].mxu0 %v2912
            %v3053 = vpop.f32.mrb[0].mxu0
            %v3054 = vadd.f32 0.0, %v3053
            %v3055 = vpop.f32.mrb[0].mxu0
            %v3056 = vpop.f32.mrb[0].mxu0
            %v3057 = vadd.f32 0.0, %v3056
            %v3058 = vpop.f32.mrb[0].mxu0
            %3059 = vmatprep.mubr.bf16.mxu0 0
            %3060 = vmatmul.mubr.bf16.gmra.mrb[0].mxu0 %v2915
            %v3061 = vpop.f32.mrb[0].mxu0
            %v3062 = vadd.f32 0.0, %v3061
            %v3063 = vpop.f32.mrb[0].mxu0
            %v3064 = vpop.f32.mrb[0].mxu0
            %v3065 = vadd.f32 0.0, %v3064
            %v3066 = vpop.f32.mrb[0].mxu0
            %3067 = vmatprep.mubr.bf16.mxu0 0
            %3068 = vmatmul.mubr.bf16.gmra.mrb[0].mxu0 %v2918
            %v3069 = vpop.f32.mrb[0].mxu0
            %v3070 = vadd.f32 0.0, %v3069
            %v3071 = vpop.f32.mrb[0].mxu0
            %v3072 = vpop.f32.mrb[0].mxu0
            %v3073 = vadd.f32 0.0, %v3072
            %v3074 = vpop.f32.mrb[0].mxu0
            %3075 = vmatprep.mubr.bf16.mxu0 0
            %3076 = vmatmul.mubr.bf16.gmra.mrb[0].mxu0 %v2921
            %v3077 = vpop.f32.mrb[0].mxu0
            %v3078 = vadd.f32 0.0, %v3077
            %v3079 = vpop.f32.mrb[0].mxu0
            %v3080 = vpop.f32.mrb[0].mxu0
            %v3081 = vadd.f32 0.0, %v3080
            %v3082 = vpop.f32.mrb[0].mxu0
            %3083 = vdwg.mxu0
            %v3084 = vpack.c.bf16 %v2961, %v2958
            %v3085 = vpack.c.bf16 %v2969, %v2966
            %v3086 = vpack.c.bf16 %v2977, %v2974
            %v3087 = vpack.c.bf16 %v2985, %v2982
            %v3088 = vpack.c.bf16 %v2993, %v2990
            %v3089 = vpack.c.bf16 %v3001, %v2998
            %v3090 = vpack.c.bf16 %v3009, %v3006
            %v3091 = vpack.c.bf16 %v3017, %v3014
            %v3092 = vpack.c.bf16 %v3025, %v3022
            %v3093 = vpack.c.bf16 %v3033, %v3030
            %v3094 = vpack.c.bf16 %v3041, %v3038
            %v3095 = vpack.c.bf16 %v3049, %v3046
            %v3096 = vpack.c.bf16 %v3057, %v3054
            %v3097 = vpack.c.bf16 %v3065, %v3062
            %v3098 = vpack.c.bf16 %v3073, %v3070
            %v3099 = vpack.c.bf16 %v3081, %v3078
            %3100 = vst [vmem:[#allocation6] sm:$0xff] %v3084
            %3101 = vst [vmem:[#allocation6 + $0x8] sm:$0xff] %v3085
            %3102 = vst [vmem:[#allocation6 + $0x10] sm:$0xff] %v3086
            %3103 = vst [vmem:[#allocation6 + $0x18] sm:$0xff] %v3087
            %3104 = vst [vmem:[#allocation6 + $0x20] sm:$0xff] %v3088
            %3105 = vst [vmem:[#allocation6 + $0x28] sm:$0xff] %v3089
            %3106 = vst [vmem:[#allocation6 + $0x30] sm:$0xff] %v3090
            %3107 = vst [vmem:[#allocation6 + $0x38] sm:$0xff] %v3091
            %3108 = vst [vmem:[#allocation6 + $0x40] sm:$0xff] %v3092
            %3109 = vst [vmem:[#allocation6 + $0x48] sm:$0xff] %v3093
            %3110 = vst [vmem:[#allocation6 + $0x50] sm:$0xff] %v3094
            %3111 = vst [vmem:[#allocation6 + $0x58] sm:$0xff] %v3095
            %3112 = vst [vmem:[#allocation6 + $0x60] sm:$0xff] %v3096
            %3113 = vst [vmem:[#allocation6 + $0x68] sm:$0xff] %v3097
            %3114 = vst [vmem:[#allocation6 + $0x70] sm:$0xff] %v3098
            %3115 = vst [vmem:[#allocation6 + $0x78] sm:$0xff] %v3099
            %v3116 = vld [vmem:[%s6] sm:$0x1]
            %v3118 = vlaneseq
            %v3119 = vshrl.u32 %v3118, 7
            %v3120 = vsub.s32 0, %v3119
            %v3121 = vrot.slane %v3116, %v3120
            %v3123 = vmul.f32 %v2685, %v3121
            %v3124 = vmul.f32 %v2690, %v3121
            %v3125 = vmul.f32 %v2695, %v3121
            %v3126 = vmul.f32 %v2700, %v3121
            %v3127 = vmul.f32 %v2705, %v3121
            %v3128 = vmul.f32 %v2710, %v3121
            %v3129 = vmul.f32 %v2715, %v3121
            %v3130 = vmul.f32 %v2720, %v3121
            %v3131 = vmul.f32 %v2725, %v3121
            %v3132 = vmul.f32 %v2730, %v3121
            %v3133 = vmul.f32 %v2735, %v3121
            %v3134 = vmul.f32 %v2740, %v3121
            %v3135 = vmul.f32 %v2745, %v3121
            %v3136 = vmul.f32 %v2750, %v3121
            %v3137 = vmul.f32 %v2755, %v3121
            %v3138 = vmul.f32 %v2760, %v3121
            %v3139 = vmul.f32 %v2765, %v3121
            %v3140 = vmul.f32 %v2770, %v3121
            %v3141 = vmul.f32 %v2775, %v3121
            %v3142 = vmul.f32 %v2780, %v3121
            %v3143 = vmul.f32 %v2785, %v3121
            %v3144 = vmul.f32 %v2790, %v3121
            %v3145 = vmul.f32 %v2795, %v3121
            %v3146 = vmul.f32 %v2800, %v3121
            %v3147 = vmul.f32 %v2805, %v3121
            %v3148 = vmul.f32 %v2810, %v3121
            %v3149 = vmul.f32 %v2815, %v3121
            %v3150 = vmul.f32 %v2820, %v3121
            %v3151 = vmul.f32 %v2825, %v3121
            %v3152 = vmul.f32 %v2830, %v3121
            %v3153 = vmul.f32 %v2835, %v3121
            %v3154 = vmul.f32 %v2840, %v3121
            %v3155 = vsel %vm2441, %v3123, 0.0
            %3156 = vadd.xlane.f32.xlu0 %v3155
            %v3157 = vpop.xlane.xlu0 %3156
            %v3158 = vsel %vm2441, %v3124, 0.0
            %3159 = vadd.xlane.f32.xlu0 %v3158
            %v3160 = vpop.xlane.xlu0 %3159
            %v3161 = vsel %vm2441, %v3125, 0.0
            %3162 = vadd.xlane.f32.xlu0 %v3161
            %v3163 = vpop.xlane.xlu0 %3162
            %v3164 = vsel %vm2441, %v3126, 0.0
            %3165 = vadd.xlane.f32.xlu0 %v3164
            %v3166 = vpop.xlane.xlu0 %3165
            %v3167 = vsel %vm2441, %v3127, 0.0
            %3168 = vadd.xlane.f32.xlu0 %v3167
            %v3169 = vpop.xlane.xlu0 %3168
            %v3170 = vsel %vm2441, %v3128, 0.0
            %3171 = vadd.xlane.f32.xlu0 %v3170
            %v3172 = vpop.xlane.xlu0 %3171
            %v3173 = vsel %vm2441, %v3129, 0.0
            %3174 = vadd.xlane.f32.xlu0 %v3173
            %v3175 = vpop.xlane.xlu0 %3174
            %v3176 = vsel %vm2441, %v3130, 0.0
            %3177 = vadd.xlane.f32.xlu0 %v3176
            %v3178 = vpop.xlane.xlu0 %3177
            %v3179 = vsel %vm2441, %v3131, 0.0
            %3180 = vadd.xlane.f32.xlu0 %v3179
            %v3181 = vpop.xlane.xlu0 %3180
            %v3182 = vsel %vm2441, %v3132, 0.0
            %3183 = vadd.xlane.f32.xlu0 %v3182
            %v3184 = vpop.xlane.xlu0 %3183
            %v3185 = vsel %vm2441, %v3133, 0.0
            %3186 = vadd.xlane.f32.xlu0 %v3185
            %v3187 = vpop.xlane.xlu0 %3186
            %v3188 = vsel %vm2441, %v3134, 0.0
            %3189 = vadd.xlane.f32.xlu0 %v3188
            %v3190 = vpop.xlane.xlu0 %3189
            %v3191 = vsel %vm2441, %v3135, 0.0
            %3192 = vadd.xlane.f32.xlu0 %v3191
            %v3193 = vpop.xlane.xlu0 %3192
            %v3194 = vsel %vm2441, %v3136, 0.0
            %3195 = vadd.xlane.f32.xlu0 %v3194
            %v3196 = vpop.xlane.xlu0 %3195
            %v3197 = vsel %vm2441, %v3137, 0.0
            %3198 = vadd.xlane.f32.xlu0 %v3197
            %v3199 = vpop.xlane.xlu0 %3198
            %v3200 = vsel %vm2441, %v3138, 0.0
            %3201 = vadd.xlane.f32.xlu0 %v3200
            %v3202 = vpop.xlane.xlu0 %3201
            %v3203 = vsel %vm2441, %v3139, 0.0
            %3204 = vadd.xlane.f32.xlu0 %v3203
            %v3205 = vpop.xlane.xlu0 %3204
            %v3206 = vsel %vm2441, %v3140, 0.0
            %3207 = vadd.xlane.f32.xlu0 %v3206
            %v3208 = vpop.xlane.xlu0 %3207
            %v3209 = vsel %vm2441, %v3141, 0.0
            %3210 = vadd.xlane.f32.xlu0 %v3209
            %v3211 = vpop.xlane.xlu0 %3210
            %v3212 = vsel %vm2441, %v3142, 0.0
            %3213 = vadd.xlane.f32.xlu0 %v3212
            %v3214 = vpop.xlane.xlu0 %3213
            %v3215 = vsel %vm2441, %v3143, 0.0
            %3216 = vadd.xlane.f32.xlu0 %v3215
            %v3217 = vpop.xlane.xlu0 %3216
            %v3218 = vsel %vm2441, %v3144, 0.0
            %3219 = vadd.xlane.f32.xlu0 %v3218
            %v3220 = vpop.xlane.xlu0 %3219
            %v3221 = vsel %vm2441, %v3145, 0.0
            %3222 = vadd.xlane.f32.xlu0 %v3221
            %v3223 = vpop.xlane.xlu0 %3222
            %v3224 = vsel %vm2441, %v3146, 0.0
            %3225 = vadd.xlane.f32.xlu0 %v3224
            %v3226 = vpop.xlane.xlu0 %3225
            %v3227 = vsel %vm2441, %v3147, 0.0
            %3228 = vadd.xlane.f32.xlu0 %v3227
            %v3229 = vpop.xlane.xlu0 %3228
            %v3230 = vsel %vm2441, %v3148, 0.0
            %3231 = vadd.xlane.f32.xlu0 %v3230
            %v3232 = vpop.xlane.xlu0 %3231
            %v3233 = vsel %vm2441, %v3149, 0.0
            %3234 = vadd.xlane.f32.xlu0 %v3233
            %v3235 = vpop.xlane.xlu0 %3234
            %v3236 = vsel %vm2441, %v3150, 0.0
            %3237 = vadd.xlane.f32.xlu0 %v3236
            %v3238 = vpop.xlane.xlu0 %3237
            %v3239 = vsel %vm2441, %v3151, 0.0
            %3240 = vadd.xlane.f32.xlu0 %v3239
            %v3241 = vpop.xlane.xlu0 %3240
            %v3242 = vsel %vm2441, %v3152, 0.0
            %3243 = vadd.xlane.f32.xlu0 %v3242
            %v3244 = vpop.xlane.xlu0 %3243
            %v3245 = vsel %vm2441, %v3153, 0.0
            %3246 = vadd.xlane.f32.xlu0 %v3245
            %v3247 = vpop.xlane.xlu0 %3246
            %v3248 = vsel %vm2441, %v3154, 0.0
            %3249 = vadd.xlane.f32.xlu0 %v3248
            %v3250 = vpop.xlane.xlu0 %3249
            %v3251 = vld [vmem:[%s8] sm:$0xff]
            %v3252 = vld [vmem:[%s8 + $0x8] sm:$0xff]
            %v3253 = vld [vmem:[%s8 + $0x10] sm:$0xff]
            %v3254 = vld [vmem:[%s8 + $0x18] sm:$0xff]
            %v3255 = vld [vmem:[%s8 + $0x20] sm:$0xff]
            %v3256 = vld [vmem:[%s8 + $0x28] sm:$0xff]
            %v3257 = vld [vmem:[%s8 + $0x30] sm:$0xff]
            %v3258 = vld [vmem:[%s8 + $0x38] sm:$0xff]
            %v3259 = vld [vmem:[%s8 + $0x40] sm:$0xff]
            %v3260 = vld [vmem:[%s8 + $0x48] sm:$0xff]
            %v3261 = vld [vmem:[%s8 + $0x50] sm:$0xff]
            %v3262 = vld [vmem:[%s8 + $0x58] sm:$0xff]
            %v3263 = vld [vmem:[%s8 + $0x60] sm:$0xff]
            %v3264 = vld [vmem:[%s8 + $0x68] sm:$0xff]
            %v3265 = vld [vmem:[%s8 + $0x70] sm:$0xff]
            %v3266 = vld [vmem:[%s8 + $0x78] sm:$0xff]
            %v3267 = vld [vmem:[%s8 + $0x80] sm:$0xff]
            %v3268 = vld [vmem:[%s8 + $0x88] sm:$0xff]
            %v3269 = vld [vmem:[%s8 + $0x90] sm:$0xff]
            %v3270 = vld [vmem:[%s8 + $0x98] sm:$0xff]
            %v3271 = vld [vmem:[%s8 + $0xa0] sm:$0xff]
            %v3272 = vld [vmem:[%s8 + $0xa8] sm:$0xff]
            %v3273 = vld [vmem:[%s8 + $0xb0] sm:$0xff]
            %v3274 = vld [vmem:[%s8 + $0xb8] sm:$0xff]
            %v3275 = vld [vmem:[%s8 + $0xc0] sm:$0xff]
            %v3276 = vld [vmem:[%s8 + $0xc8] sm:$0xff]
            %v3277 = vld [vmem:[%s8 + $0xd0] sm:$0xff]
            %v3278 = vld [vmem:[%s8 + $0xd8] sm:$0xff]
            %v3279 = vld [vmem:[%s8 + $0xe0] sm:$0xff]
            %v3280 = vld [vmem:[%s8 + $0xe8] sm:$0xff]
            %v3281 = vld [vmem:[%s8 + $0xf0] sm:$0xff]
            %v3282 = vld [vmem:[%s8 + $0xf8] sm:$0xff]
            %v3283 = vadd.f32 %v3157, %v3251
            %v3284 = vadd.f32 %v3160, %v3252
            %v3285 = vadd.f32 %v3163, %v3253
            %v3286 = vadd.f32 %v3166, %v3254
            %v3287 = vadd.f32 %v3169, %v3255
            %v3288 = vadd.f32 %v3172, %v3256
            %v3289 = vadd.f32 %v3175, %v3257
            %v3290 = vadd.f32 %v3178, %v3258
            %v3291 = vadd.f32 %v3181, %v3259
            %v3292 = vadd.f32 %v3184, %v3260
            %v3293 = vadd.f32 %v3187, %v3261
            %v3294 = vadd.f32 %v3190, %v3262
            %v3295 = vadd.f32 %v3193, %v3263
            %v3296 = vadd.f32 %v3196, %v3264
            %v3297 = vadd.f32 %v3199, %v3265
            %v3298 = vadd.f32 %v3202, %v3266
            %v3299 = vadd.f32 %v3205, %v3267
            %v3300 = vadd.f32 %v3208, %v3268
            %v3301 = vadd.f32 %v3211, %v3269
            %v3302 = vadd.f32 %v3214, %v3270
            %v3303 = vadd.f32 %v3217, %v3271
            %v3304 = vadd.f32 %v3220, %v3272
            %v3305 = vadd.f32 %v3223, %v3273
            %v3306 = vadd.f32 %v3226, %v3274
            %v3307 = vadd.f32 %v3229, %v3275
            %v3308 = vadd.f32 %v3232, %v3276
            %v3309 = vadd.f32 %v3235, %v3277
            %v3310 = vadd.f32 %v3238, %v3278
            %v3311 = vadd.f32 %v3241, %v3279
            %v3312 = vadd.f32 %v3244, %v3280
            %v3313 = vadd.f32 %v3247, %v3281
            %v3314 = vadd.f32 %v3250, %v3282
            %v3315 = vld [vmem:[#allocation4] sm:$0xff]
            %v3316 = vld [vmem:[#allocation4 + $0x8] sm:$0xff]
            %v3317 = vld [vmem:[#allocation4 + $0x10] sm:$0xff]
            %v3318 = vld [vmem:[#allocation4 + $0x18] sm:$0xff]
            %v3319 = vld [vmem:[#allocation4 + $0x20] sm:$0xff]
            %v3320 = vld [vmem:[#allocation4 + $0x28] sm:$0xff]
            %v3321 = vld [vmem:[#allocation4 + $0x30] sm:$0xff]
            %v3322 = vld [vmem:[#allocation4 + $0x38] sm:$0xff]
            %v3323 = vld [vmem:[#allocation4 + $0x40] sm:$0xff]
            %v3324 = vld [vmem:[#allocation4 + $0x48] sm:$0xff]
            %v3325 = vld [vmem:[#allocation4 + $0x50] sm:$0xff]
            %v3326 = vld [vmem:[#allocation4 + $0x58] sm:$0xff]
            %v3327 = vld [vmem:[#allocation4 + $0x60] sm:$0xff]
            %v3328 = vld [vmem:[#allocation4 + $0x68] sm:$0xff]
            %v3329 = vld [vmem:[#allocation4 + $0x70] sm:$0xff]
            %v3330 = vld [vmem:[#allocation4 + $0x78] sm:$0xff]
            %v3331 = vld [vmem:[#allocation4 + $0x80] sm:$0xff]
            %v3332 = vld [vmem:[#allocation4 + $0x88] sm:$0xff]
            %v3333 = vld [vmem:[#allocation4 + $0x90] sm:$0xff]
            %v3334 = vld [vmem:[#allocation4 + $0x98] sm:$0xff]
            %v3335 = vld [vmem:[#allocation4 + $0xa0] sm:$0xff]
            %v3336 = vld [vmem:[#allocation4 + $0xa8] sm:$0xff]
            %v3337 = vld [vmem:[#allocation4 + $0xb0] sm:$0xff]
            %v3338 = vld [vmem:[#allocation4 + $0xb8] sm:$0xff]
            %v3339 = vld [vmem:[#allocation4 + $0xc0] sm:$0xff]
            %v3340 = vld [vmem:[#allocation4 + $0xc8] sm:$0xff]
            %v3341 = vld [vmem:[#allocation4 + $0xd0] sm:$0xff]
            %v3342 = vld [vmem:[#allocation4 + $0xd8] sm:$0xff]
            %v3343 = vld [vmem:[#allocation4 + $0xe0] sm:$0xff]
            %v3344 = vld [vmem:[#allocation4 + $0xe8] sm:$0xff]
            %v3345 = vld [vmem:[#allocation4 + $0xf0] sm:$0xff]
            %v3346 = vld [vmem:[#allocation4 + $0xf8] sm:$0xff]
            %v3347 = vadd.f32 %v3283, %v3315
            %v3348 = vadd.f32 %v3284, %v3316
            %v3349 = vadd.f32 %v3285, %v3317
            %v3350 = vadd.f32 %v3286, %v3318
            %v3351 = vadd.f32 %v3287, %v3319
            %v3352 = vadd.f32 %v3288, %v3320
            %v3353 = vadd.f32 %v3289, %v3321
            %v3354 = vadd.f32 %v3290, %v3322
            %v3355 = vadd.f32 %v3291, %v3323
            %v3356 = vadd.f32 %v3292, %v3324
            %v3357 = vadd.f32 %v3293, %v3325
            %v3358 = vadd.f32 %v3294, %v3326
            %v3359 = vadd.f32 %v3295, %v3327
            %v3360 = vadd.f32 %v3296, %v3328
            %v3361 = vadd.f32 %v3297, %v3329
            %v3362 = vadd.f32 %v3298, %v3330
            %v3363 = vadd.f32 %v3299, %v3331
            %v3364 = vadd.f32 %v3300, %v3332
            %v3365 = vadd.f32 %v3301, %v3333
            %v3366 = vadd.f32 %v3302, %v3334
            %v3367 = vadd.f32 %v3303, %v3335
            %v3368 = vadd.f32 %v3304, %v3336
            %v3369 = vadd.f32 %v3305, %v3337
            %v3370 = vadd.f32 %v3306, %v3338
            %v3371 = vadd.f32 %v3307, %v3339
            %v3372 = vadd.f32 %v3308, %v3340
            %v3373 = vadd.f32 %v3309, %v3341
            %v3374 = vadd.f32 %v3310, %v3342
            %v3375 = vadd.f32 %v3311, %v3343
            %v3376 = vadd.f32 %v3312, %v3344
            %v3377 = vadd.f32 %v3313, %v3345
            %v3378 = vadd.f32 %v3314, %v3346
            %vm3379 = vcmask 7168
            %3380 = vst.msk [vmem:[#allocation7] sm:$0xff] %vm3379, %v3347
            %3381 = vst.msk [vmem:[#allocation7 + $0x8] sm:$0xff] %vm3379, %v3348
            %3382 = vst.msk [vmem:[#allocation7 + $0x10] sm:$0xff] %vm3379, %v3349
            %3383 = vst.msk [vmem:[#allocation7 + $0x18] sm:$0xff] %vm3379, %v3350
            %3384 = vst.msk [vmem:[#allocation7 + $0x20] sm:$0xff] %vm3379, %v3351
            %3385 = vst.msk [vmem:[#allocation7 + $0x28] sm:$0xff] %vm3379, %v3352
            %3386 = vst.msk [vmem:[#allocation7 + $0x30] sm:$0xff] %vm3379, %v3353
            %3387 = vst.msk [vmem:[#allocation7 + $0x38] sm:$0xff] %vm3379, %v3354
            %3388 = vst.msk [vmem:[#allocation7 + $0x40] sm:$0xff] %vm3379, %v3355
            %3389 = vst.msk [vmem:[#allocation7 + $0x48] sm:$0xff] %vm3379, %v3356
            %3390 = vst.msk [vmem:[#allocation7 + $0x50] sm:$0xff] %vm3379, %v3357
            %3391 = vst.msk [vmem:[#allocation7 + $0x58] sm:$0xff] %vm3379, %v3358
            %3392 = vst.msk [vmem:[#allocation7 + $0x60] sm:$0xff] %vm3379, %v3359
            %3393 = vst.msk [vmem:[#allocation7 + $0x68] sm:$0xff] %vm3379, %v3360
            %3394 = vst.msk [vmem:[#allocation7 + $0x70] sm:$0xff] %vm3379, %v3361
            %3395 = vst.msk [vmem:[#allocation7 + $0x78] sm:$0xff] %vm3379, %v3362
            %3396 = vst.msk [vmem:[#allocation7 + $0x80] sm:$0xff] %vm3379, %v3363
            %3397 = vst.msk [vmem:[#allocation7 + $0x88] sm:$0xff] %vm3379, %v3364
            %3398 = vst.msk [vmem:[#allocation7 + $0x90] sm:$0xff] %vm3379, %v3365
            %3399 = vst.msk [vmem:[#allocation7 + $0x98] sm:$0xff] %vm3379, %v3366
            %3400 = vst.msk [vmem:[#allocation7 + $0xa0] sm:$0xff] %vm3379, %v3367
            %3401 = vst.msk [vmem:[#allocation7 + $0xa8] sm:$0xff] %vm3379, %v3368
            %3402 = vst.msk [vmem:[#allocation7 + $0xb0] sm:$0xff] %vm3379, %v3369
            %3403 = vst.msk [vmem:[#allocation7 + $0xb8] sm:$0xff] %vm3379, %v3370
            %3404 = vst.msk [vmem:[#allocation7 + $0xc0] sm:$0xff] %vm3379, %v3371
            %3405 = vst.msk [vmem:[#allocation7 + $0xc8] sm:$0xff] %vm3379, %v3372
            %3406 = vst.msk [vmem:[#allocation7 + $0xd0] sm:$0xff] %vm3379, %v3373
            %3407 = vst.msk [vmem:[#allocation7 + $0xd8] sm:$0xff] %vm3379, %v3374
            %3408 = vst.msk [vmem:[#allocation7 + $0xe0] sm:$0xff] %vm3379, %v3375
            %3409 = vst.msk [vmem:[#allocation7 + $0xe8] sm:$0xff] %vm3379, %v3376
            %3410 = vst.msk [vmem:[#allocation7 + $0xf0] sm:$0xff] %vm3379, %v3377
            %3411 = vst.msk [vmem:[#allocation7 + $0xf8] sm:$0xff] %vm3379, %v3378
          $region84: #{tpu_custom_call.1} parent=79 // pred_fallthru
            _
          %s3412 = sshra.s32 %s437, 7
          %s3413 = sand.u32 %s437, 127
          %s3414 = scalar_lea.vmem [#allocation8], %s3412
          %v3415 = vld [vmem:[%s3414] sm:$0xff]
          %v3416 = vld [vmem:[%s3414 + $0x8] sm:$0xff]
          %v3417 = vld [vmem:[%s3414 + $0x10] sm:$0xff]
          %v3418 = vld [vmem:[%s3414 + $0x18] sm:$0xff]
          %v3419 = vld [vmem:[%s3414 + $0x20] sm:$0xff]
          %v3420 = vld [vmem:[%s3414 + $0x28] sm:$0xff]
          %v3421 = vld [vmem:[%s3414 + $0x30] sm:$0xff]
          %v3422 = vld [vmem:[%s3414 + $0x38] sm:$0xff]
          %v3423 = vld [vmem:[%s3414 + $0x40] sm:$0xff]
          %v3424 = vld [vmem:[%s3414 + $0x48] sm:$0xff]
          %v3425 = vld [vmem:[%s3414 + $0x50] sm:$0xff]
          %v3426 = vld [vmem:[%s3414 + $0x58] sm:$0xff]
          %v3427 = vld [vmem:[%s3414 + $0x60] sm:$0xff]
          %v3428 = vld [vmem:[%s3414 + $0x68] sm:$0xff]
          %v3429 = vld [vmem:[%s3414 + $0x70] sm:$0xff]
          %v3430 = vld [vmem:[%s3414 + $0x78] sm:$0xff]
          %v3431 = vld [vmem:[%s3414 + $0x80] sm:$0xff]
          %v3432 = vld [vmem:[%s3414 + $0x88] sm:$0xff]
          %v3433 = vld [vmem:[%s3414 + $0x90] sm:$0xff]
          %v3434 = vld [vmem:[%s3414 + $0x98] sm:$0xff]
          %v3435 = vld [vmem:[%s3414 + $0xa0] sm:$0xff]
          %v3436 = vld [vmem:[%s3414 + $0xa8] sm:$0xff]
          %v3437 = vld [vmem:[%s3414 + $0xb0] sm:$0xff]
          %v3438 = vld [vmem:[%s3414 + $0xb8] sm:$0xff]
          %v3439 = vld [vmem:[%s3414 + $0xc0] sm:$0xff]
          %v3440 = vld [vmem:[%s3414 + $0xc8] sm:$0xff]
          %v3441 = vld [vmem:[%s3414 + $0xd0] sm:$0xff]
          %v3442 = vld [vmem:[%s3414 + $0xd8] sm:$0xff]
          %v3443 = vld [vmem:[%s3414 + $0xe0] sm:$0xff]
          %v3444 = vld [vmem:[%s3414 + $0xe8] sm:$0xff]
          %v3445 = vld [vmem:[%s3414 + $0xf0] sm:$0xff]
          %v3446 = vld [vmem:[%s3414 + $0xf8] sm:$0xff]
          %v3447 = vld [vmem:[#allocation2] sm:$0xff]
          %v3448 = vld [vmem:[#allocation2 + $0x8] sm:$0xff]
          %v3449 = vld [vmem:[#allocation2 + $0x10] sm:$0xff]
          %v3450 = vld [vmem:[#allocation2 + $0x18] sm:$0xff]
          %v3451 = vld [vmem:[#allocation2 + $0x20] sm:$0xff]
          %v3452 = vld [vmem:[#allocation2 + $0x28] sm:$0xff]
          %v3453 = vld [vmem:[#allocation2 + $0x30] sm:$0xff]
          %v3454 = vld [vmem:[#allocation2 + $0x38] sm:$0xff]
          %v3455 = vld [vmem:[#allocation2 + $0x40] sm:$0xff]
          %v3456 = vld [vmem:[#allocation2 + $0x48] sm:$0xff]
          %v3457 = vld [vmem:[#allocation2 + $0x50] sm:$0xff]
          %v3458 = vld [vmem:[#allocation2 + $0x58] sm:$0xff]
          %v3459 = vld [vmem:[#allocation2 + $0x60] sm:$0xff]
          %v3460 = vld [vmem:[#allocation2 + $0x68] sm:$0xff]
          %v3461 = vld [vmem:[#allocation2 + $0x70] sm:$0xff]
          %v3462 = vld [vmem:[#allocation2 + $0x78] sm:$0xff]
          %v3463 = vld [vmem:[#allocation2 + $0x80] sm:$0xff]
          %v3464 = vld [vmem:[#allocation2 + $0x88] sm:$0xff]
          %v3465 = vld [vmem:[#allocation2 + $0x90] sm:$0xff]
          %v3466 = vld [vmem:[#allocation2 + $0x98] sm:$0xff]
          %v3467 = vld [vmem:[#allocation2 + $0xa0] sm:$0xff]
          %v3468 = vld [vmem:[#allocation2 + $0xa8] sm:$0xff]
          %v3469 = vld [vmem:[#allocation2 + $0xb0] sm:$0xff]
          %v3470 = vld [vmem:[#allocation2 + $0xb8] sm:$0xff]
          %v3471 = vld [vmem:[#allocation2 + $0xc0] sm:$0xff]
          %v3472 = vld [vmem:[#allocation2 + $0xc8] sm:$0xff]
          %v3473 = vld [vmem:[#allocation2 + $0xd0] sm:$0xff]
          %v3474 = vld [vmem:[#allocation2 + $0xd8] sm:$0xff]
          %v3475 = vld [vmem:[#allocation2 + $0xe0] sm:$0xff]
          %v3476 = vld [vmem:[#allocation2 + $0xe8] sm:$0xff]
          %v3477 = vld [vmem:[#allocation2 + $0xf0] sm:$0xff]
          %v3478 = vld [vmem:[#allocation2 + $0xf8] sm:$0xff]
          %3480 = vset.pattern.permute.xlu0 0
          %3481 = vperm.xlu0 %3480, %v3447
          %v3482 = vpop.permute.xlu0 %3481
          %3485 = vset.pattern.permute.xlu0 0
          %3486 = vperm.xlu0 %3485, %v3448
          %v3487 = vpop.permute.xlu0 %3486
          %3490 = vset.pattern.permute.xlu0 0
          %3491 = vperm.xlu0 %3490, %v3449
          %v3492 = vpop.permute.xlu0 %3491
          %3495 = vset.pattern.permute.xlu0 0
          %3496 = vperm.xlu0 %3495, %v3450
          %v3497 = vpop.permute.xlu0 %3496
          %3500 = vset.pattern.permute.xlu0 0
          %3501 = vperm.xlu0 %3500, %v3451
          %v3502 = vpop.permute.xlu0 %3501
          %3505 = vset.pattern.permute.xlu0 0
          %3506 = vperm.xlu0 %3505, %v3452
          %v3507 = vpop.permute.xlu0 %3506
          %3510 = vset.pattern.permute.xlu0 0
          %3511 = vperm.xlu0 %3510, %v3453
          %v3512 = vpop.permute.xlu0 %3511
          %3515 = vset.pattern.permute.xlu0 0
          %3516 = vperm.xlu0 %3515, %v3454
          %v3517 = vpop.permute.xlu0 %3516
          %3520 = vset.pattern.permute.xlu0 0
          %3521 = vperm.xlu0 %3520, %v3455
          %v3522 = vpop.permute.xlu0 %3521
          %3525 = vset.pattern.permute.xlu0 0
          %3526 = vperm.xlu0 %3525, %v3456
          %v3527 = vpop.permute.xlu0 %3526
          %3530 = vset.pattern.permute.xlu0 0
          %3531 = vperm.xlu0 %3530, %v3457
          %v3532 = vpop.permute.xlu0 %3531
          %3535 = vset.pattern.permute.xlu0 0
          %3536 = vperm.xlu0 %3535, %v3458
          %v3537 = vpop.permute.xlu0 %3536
          %3540 = vset.pattern.permute.xlu0 0
          %3541 = vperm.xlu0 %3540, %v3459
          %v3542 = vpop.permute.xlu0 %3541
          %3545 = vset.pattern.permute.xlu0 0
          %3546 = vperm.xlu0 %3545, %v3460
          %v3547 = vpop.permute.xlu0 %3546
          %3550 = vset.pattern.permute.xlu0 0
          %3551 = vperm.xlu0 %3550, %v3461
          %v3552 = vpop.permute.xlu0 %3551
          %3555 = vset.pattern.permute.xlu0 0
          %3556 = vperm.xlu0 %3555, %v3462
          %v3557 = vpop.permute.xlu0 %3556
          %3560 = vset.pattern.permute.xlu0 0
          %3561 = vperm.xlu0 %3560, %v3463
          %v3562 = vpop.permute.xlu0 %3561
          %3565 = vset.pattern.permute.xlu0 0
          %3566 = vperm.xlu0 %3565, %v3464
          %v3567 = vpop.permute.xlu0 %3566
          %3570 = vset.pattern.permute.xlu0 0
          %3571 = vperm.xlu0 %3570, %v3465
          %v3572 = vpop.permute.xlu0 %3571
          %3575 = vset.pattern.permute.xlu0 0
          %3576 = vperm.xlu0 %3575, %v3466
          %v3577 = vpop.permute.xlu0 %3576
          %3580 = vset.pattern.permute.xlu0 0
          %3581 = vperm.xlu0 %3580, %v3467
          %v3582 = vpop.permute.xlu0 %3581
          %3585 = vset.pattern.permute.xlu0 0
          %3586 = vperm.xlu0 %3585, %v3468
          %v3587 = vpop.permute.xlu0 %3586
          %3590 = vset.pattern.permute.xlu0 0
          %3591 = vperm.xlu0 %3590, %v3469
          %v3592 = vpop.permute.xlu0 %3591
          %3595 = vset.pattern.permute.xlu0 0
          %3596 = vperm.xlu0 %3595, %v3470
          %v3597 = vpop.permute.xlu0 %3596
          %3600 = vset.pattern.permute.xlu0 0
          %3601 = vperm.xlu0 %3600, %v3471
          %v3602 = vpop.permute.xlu0 %3601
          %3605 = vset.pattern.permute.xlu0 0
          %3606 = vperm.xlu0 %3605, %v3472
          %v3607 = vpop.permute.xlu0 %3606
          %3610 = vset.pattern.permute.xlu0 0
          %3611 = vperm.xlu0 %3610, %v3473
          %v3612 = vpop.permute.xlu0 %3611
          %3615 = vset.pattern.permute.xlu0 0
          %3616 = vperm.xlu0 %3615, %v3474
          %v3617 = vpop.permute.xlu0 %3616
          %3620 = vset.pattern.permute.xlu0 0
          %3621 = vperm.xlu0 %3620, %v3475
          %v3622 = vpop.permute.xlu0 %3621
          %3625 = vset.pattern.permute.xlu0 0
          %3626 = vperm.xlu0 %3625, %v3476
          %v3627 = vpop.permute.xlu0 %3626
          %3630 = vset.pattern.permute.xlu0 0
          %3631 = vperm.xlu0 %3630, %v3477
          %v3632 = vpop.permute.xlu0 %3631
          %3635 = vset.pattern.permute.xlu0 0
          %3636 = vperm.xlu0 %3635, %v3478
          %v3637 = vpop.permute.xlu0 %3636
          %v3639 = vsub.f32 %v3415, %v3482
          %v3640 = vsub.f32 %v3416, %v3487
          %v3641 = vsub.f32 %v3417, %v3492
          %v3642 = vsub.f32 %v3418, %v3497
          %v3643 = vsub.f32 %v3419, %v3502
          %v3644 = vsub.f32 %v3420, %v3507
          %v3645 = vsub.f32 %v3421, %v3512
          %v3646 = vsub.f32 %v3422, %v3517
          %v3647 = vsub.f32 %v3423, %v3522
          %v3648 = vsub.f32 %v3424, %v3527
          %v3649 = vsub.f32 %v3425, %v3532
          %v3650 = vsub.f32 %v3426, %v3537
          %v3651 = vsub.f32 %v3427, %v3542
          %v3652 = vsub.f32 %v3428, %v3547
          %v3653 = vsub.f32 %v3429, %v3552
          %v3654 = vsub.f32 %v3430, %v3557
          %v3655 = vsub.f32 %v3431, %v3562
          %v3656 = vsub.f32 %v3432, %v3567
          %v3657 = vsub.f32 %v3433, %v3572
          %v3658 = vsub.f32 %v3434, %v3577
          %v3659 = vsub.f32 %v3435, %v3582
          %v3660 = vsub.f32 %v3436, %v3587
          %v3661 = vsub.f32 %v3437, %v3592
          %v3662 = vsub.f32 %v3438, %v3597
          %v3663 = vsub.f32 %v3439, %v3602
          %v3664 = vsub.f32 %v3440, %v3607
          %v3665 = vsub.f32 %v3441, %v3612
          %v3666 = vsub.f32 %v3442, %v3617
          %v3667 = vsub.f32 %v3443, %v3622
          %v3668 = vsub.f32 %v3444, %v3627
          %v3669 = vsub.f32 %v3445, %v3632
          %v3670 = vsub.f32 %v3446, %v3637
          %v3671 = vld [vmem:[#allocation3] sm:$0xff]
          %v3672 = vld [vmem:[#allocation3 + $0x8] sm:$0xff]
          %v3673 = vld [vmem:[#allocation3 + $0x10] sm:$0xff]
          %v3674 = vld [vmem:[#allocation3 + $0x18] sm:$0xff]
          %v3675 = vld [vmem:[#allocation3 + $0x20] sm:$0xff]
          %v3676 = vld [vmem:[#allocation3 + $0x28] sm:$0xff]
          %v3677 = vld [vmem:[#allocation3 + $0x30] sm:$0xff]
          %v3678 = vld [vmem:[#allocation3 + $0x38] sm:$0xff]
          %v3679 = vld [vmem:[#allocation3 + $0x40] sm:$0xff]
          %v3680 = vld [vmem:[#allocation3 + $0x48] sm:$0xff]
          %v3681 = vld [vmem:[#allocation3 + $0x50] sm:$0xff]
          %v3682 = vld [vmem:[#allocation3 + $0x58] sm:$0xff]
          %v3683 = vld [vmem:[#allocation3 + $0x60] sm:$0xff]
          %v3684 = vld [vmem:[#allocation3 + $0x68] sm:$0xff]
          %v3685 = vld [vmem:[#allocation3 + $0x70] sm:$0xff]
          %v3686 = vld [vmem:[#allocation3 + $0x78] sm:$0xff]
          %v3687 = vld [vmem:[#allocation3 + $0x80] sm:$0xff]
          %v3688 = vld [vmem:[#allocation3 + $0x88] sm:$0xff]
          %v3689 = vld [vmem:[#allocation3 + $0x90] sm:$0xff]
          %v3690 = vld [vmem:[#allocation3 + $0x98] sm:$0xff]
          %v3691 = vld [vmem:[#allocation3 + $0xa0] sm:$0xff]
          %v3692 = vld [vmem:[#allocation3 + $0xa8] sm:$0xff]
          %v3693 = vld [vmem:[#allocation3 + $0xb0] sm:$0xff]
          %v3694 = vld [vmem:[#allocation3 + $0xb8] sm:$0xff]
          %v3695 = vld [vmem:[#allocation3 + $0xc0] sm:$0xff]
          %v3696 = vld [vmem:[#allocation3 + $0xc8] sm:$0xff]
          %v3697 = vld [vmem:[#allocation3 + $0xd0] sm:$0xff]
          %v3698 = vld [vmem:[#allocation3 + $0xd8] sm:$0xff]
          %v3699 = vld [vmem:[#allocation3 + $0xe0] sm:$0xff]
          %v3700 = vld [vmem:[#allocation3 + $0xe8] sm:$0xff]
          %v3701 = vld [vmem:[#allocation3 + $0xf0] sm:$0xff]
          %v3702 = vld [vmem:[#allocation3 + $0xf8] sm:$0xff]
          %3704 = vset.pattern.permute.xlu0 0
          %3705 = vperm.xlu0 %3704, %v3671
          %v3706 = vpop.permute.xlu0 %3705
          %3709 = vset.pattern.permute.xlu0 0
          %3710 = vperm.xlu0 %3709, %v3672
          %v3711 = vpop.permute.xlu0 %3710
          %3714 = vset.pattern.permute.xlu0 0
          %3715 = vperm.xlu0 %3714, %v3673
          %v3716 = vpop.permute.xlu0 %3715
          %3719 = vset.pattern.permute.xlu0 0
          %3720 = vperm.xlu0 %3719, %v3674
          %v3721 = vpop.permute.xlu0 %3720
          %3724 = vset.pattern.permute.xlu0 0
          %3725 = vperm.xlu0 %3724, %v3675
          %v3726 = vpop.permute.xlu0 %3725
          %3729 = vset.pattern.permute.xlu0 0
          %3730 = vperm.xlu0 %3729, %v3676
          %v3731 = vpop.permute.xlu0 %3730
          %3734 = vset.pattern.permute.xlu0 0
          %3735 = vperm.xlu0 %3734, %v3677
          %v3736 = vpop.permute.xlu0 %3735
          %3739 = vset.pattern.permute.xlu0 0
          %3740 = vperm.xlu0 %3739, %v3678
          %v3741 = vpop.permute.xlu0 %3740
          %3744 = vset.pattern.permute.xlu0 0
          %3745 = vperm.xlu0 %3744, %v3679
          %v3746 = vpop.permute.xlu0 %3745
          %3749 = vset.pattern.permute.xlu0 0
          %3750 = vperm.xlu0 %3749, %v3680
          %v3751 = vpop.permute.xlu0 %3750
          %3754 = vset.pattern.permute.xlu0 0
          %3755 = vperm.xlu0 %3754, %v3681
          %v3756 = vpop.permute.xlu0 %3755
          %3759 = vset.pattern.permute.xlu0 0
          %3760 = vperm.xlu0 %3759, %v3682
          %v3761 = vpop.permute.xlu0 %3760
          %3764 = vset.pattern.permute.xlu0 0
          %3765 = vperm.xlu0 %3764, %v3683
          %v3766 = vpop.permute.xlu0 %3765
          %3769 = vset.pattern.permute.xlu0 0
          %3770 = vperm.xlu0 %3769, %v3684
          %v3771 = vpop.permute.xlu0 %3770
          %3774 = vset.pattern.permute.xlu0 0
          %3775 = vperm.xlu0 %3774, %v3685
          %v3776 = vpop.permute.xlu0 %3775
          %3779 = vset.pattern.permute.xlu0 0
          %3780 = vperm.xlu0 %3779, %v3686
          %v3781 = vpop.permute.xlu0 %3780
          %3784 = vset.pattern.permute.xlu0 0
          %3785 = vperm.xlu0 %3784, %v3687
          %v3786 = vpop.permute.xlu0 %3785
          %3789 = vset.pattern.permute.xlu0 0
          %3790 = vperm.xlu0 %3789, %v3688
          %v3791 = vpop.permute.xlu0 %3790
          %3794 = vset.pattern.permute.xlu0 0
          %3795 = vperm.xlu0 %3794, %v3689
          %v3796 = vpop.permute.xlu0 %3795
          %3799 = vset.pattern.permute.xlu0 0
          %3800 = vperm.xlu0 %3799, %v3690
          %v3801 = vpop.permute.xlu0 %3800
          %3804 = vset.pattern.permute.xlu0 0
          %3805 = vperm.xlu0 %3804, %v3691
          %v3806 = vpop.permute.xlu0 %3805
          %3809 = vset.pattern.permute.xlu0 0
          %3810 = vperm.xlu0 %3809, %v3692
          %v3811 = vpop.permute.xlu0 %3810
          %3814 = vset.pattern.permute.xlu0 0
          %3815 = vperm.xlu0 %3814, %v3693
          %v3816 = vpop.permute.xlu0 %3815
          %3819 = vset.pattern.permute.xlu0 0
          %3820 = vperm.xlu0 %3819, %v3694
          %v3821 = vpop.permute.xlu0 %3820
          %3824 = vset.pattern.permute.xlu0 0
          %3825 = vperm.xlu0 %3824, %v3695
          %v3826 = vpop.permute.xlu0 %3825
          %3829 = vset.pattern.permute.xlu0 0
          %3830 = vperm.xlu0 %3829, %v3696
          %v3831 = vpop.permute.xlu0 %3830
          %3834 = vset.pattern.permute.xlu0 0
          %3835 = vperm.xlu0 %3834, %v3697
          %v3836 = vpop.permute.xlu0 %3835
          %3839 = vset.pattern.permute.xlu0 0
          %3840 = vperm.xlu0 %3839, %v3698
          %v3841 = vpop.permute.xlu0 %3840
          %3844 = vset.pattern.permute.xlu0 0
          %3845 = vperm.xlu0 %3844, %v3699
          %v3846 = vpop.permute.xlu0 %3845
          %3849 = vset.pattern.permute.xlu0 0
          %3850 = vperm.xlu0 %3849, %v3700
          %v3851 = vpop.permute.xlu0 %3850
          %3854 = vset.pattern.permute.xlu0 0
          %3855 = vperm.xlu0 %3854, %v3701
          %v3856 = vpop.permute.xlu0 %3855
          %3859 = vset.pattern.permute.xlu0 0
          %3860 = vperm.xlu0 %3859, %v3702
          %v3861 = vpop.permute.xlu0 %3860
          %v3863 = vmul.f32 %v3639, %v3706
          %v3864 = vmul.f32 %v3640, %v3711
          %v3865 = vmul.f32 %v3641, %v3716
          %v3866 = vmul.f32 %v3642, %v3721
          %v3867 = vmul.f32 %v3643, %v3726
          %v3868 = vmul.f32 %v3644, %v3731
          %v3869 = vmul.f32 %v3645, %v3736
          %v3870 = vmul.f32 %v3646, %v3741
          %v3871 = vmul.f32 %v3647, %v3746
          %v3872 = vmul.f32 %v3648, %v3751
          %v3873 = vmul.f32 %v3649, %v3756
          %v3874 = vmul.f32 %v3650, %v3761
          %v3875 = vmul.f32 %v3651, %v3766
          %v3876 = vmul.f32 %v3652, %v3771
          %v3877 = vmul.f32 %v3653, %v3776
          %v3878 = vmul.f32 %v3654, %v3781
          %v3879 = vmul.f32 %v3655, %v3786
          %v3880 = vmul.f32 %v3656, %v3791
          %v3881 = vmul.f32 %v3657, %v3796
          %v3882 = vmul.f32 %v3658, %v3801
          %v3883 = vmul.f32 %v3659, %v3806
          %v3884 = vmul.f32 %v3660, %v3811
          %v3885 = vmul.f32 %v3661, %v3816
          %v3886 = vmul.f32 %v3662, %v3821
          %v3887 = vmul.f32 %v3663, %v3826
          %v3888 = vmul.f32 %v3664, %v3831
          %v3889 = vmul.f32 %v3665, %v3836
          %v3890 = vmul.f32 %v3666, %v3841
          %v3891 = vmul.f32 %v3667, %v3846
          %v3892 = vmul.f32 %v3668, %v3851
          %v3893 = vmul.f32 %v3669, %v3856
          %v3894 = vmul.f32 %v3670, %v3861
          %v3895 = vpack.c.bf16 %v3864, %v3863
          %v3896 = vpack.c.bf16 %v3866, %v3865
          %v3897 = vpack.c.bf16 %v3868, %v3867
          %v3898 = vpack.c.bf16 %v3870, %v3869
          %v3899 = vpack.c.bf16 %v3872, %v3871
          %v3900 = vpack.c.bf16 %v3874, %v3873
          %v3901 = vpack.c.bf16 %v3876, %v3875
          %v3902 = vpack.c.bf16 %v3878, %v3877
          %v3903 = vpack.c.bf16 %v3880, %v3879
          %v3904 = vpack.c.bf16 %v3882, %v3881
          %v3905 = vpack.c.bf16 %v3884, %v3883
          %v3906 = vpack.c.bf16 %v3886, %v3885
          %v3907 = vpack.c.bf16 %v3888, %v3887
          %v3908 = vpack.c.bf16 %v3890, %v3889
          %v3909 = vpack.c.bf16 %v3892, %v3891
          %v3910 = vpack.c.bf16 %v3894, %v3893
          %v3911 = vld [vmem:[%s2] sm:$0xff]
          %v3912 = vld [vmem:[%s2 + $0x8] sm:$0xff]
          %v3913 = vld [vmem:[%s2 + $0x10] sm:$0xff]
          %v3914 = vld [vmem:[%s2 + $0x18] sm:$0xff]
          %v3915 = vld [vmem:[%s2 + $0x20] sm:$0xff]
          %v3916 = vld [vmem:[%s2 + $0x28] sm:$0xff]
          %v3917 = vld [vmem:[%s2 + $0x30] sm:$0xff]
          %v3918 = vld [vmem:[%s2 + $0x38] sm:$0xff]
          %v3919 = vld [vmem:[%s2 + $0x40] sm:$0xff]
          %v3920 = vld [vmem:[%s2 + $0x48] sm:$0xff]
          %v3921 = vld [vmem:[%s2 + $0x50] sm:$0xff]
          %v3922 = vld [vmem:[%s2 + $0x58] sm:$0xff]
          %v3923 = vld [vmem:[%s2 + $0x60] sm:$0xff]
          %v3924 = vld [vmem:[%s2 + $0x68] sm:$0xff]
          %v3925 = vld [vmem:[%s2 + $0x70] sm:$0xff]
          %v3926 = vld [vmem:[%s2 + $0x78] sm:$0xff]
          %v3927 = vld [vmem:[%s3] sm:$0xff]
          %v3928 = vld [vmem:[%s3 + $0x8] sm:$0xff]
          %v3929 = vld [vmem:[%s3 + $0x10] sm:$0xff]
          %v3930 = vld [vmem:[%s3 + $0x18] sm:$0xff]
          %v3931 = vld [vmem:[%s3 + $0x20] sm:$0xff]
          %v3932 = vld [vmem:[%s3 + $0x28] sm:$0xff]
          %v3933 = vld [vmem:[%s3 + $0x30] sm:$0xff]
          %v3934 = vld [vmem:[%s3 + $0x38] sm:$0xff]
          %v3935 = vld [vmem:[%s3 + $0x40] sm:$0xff]
          %v3936 = vld [vmem:[%s3 + $0x48] sm:$0xff]
          %v3937 = vld [vmem:[%s3 + $0x50] sm:$0xff]
          %v3938 = vld [vmem:[%s3 + $0x58] sm:$0xff]
          %v3939 = vld [vmem:[%s3 + $0x60] sm:$0xff]
          %v3940 = vld [vmem:[%s3 + $0x68] sm:$0xff]
          %v3941 = vld [vmem:[%s3 + $0x70] sm:$0xff]
          %v3942 = vld [vmem:[%s3 + $0x78] sm:$0xff]
          %3944 = vset.pattern.permute.xlu0 0
          %3945 = vperm.xlu0 %3944, %v3927
          %v3946 = vpop.permute.xlu0 %3945
          %3949 = vset.pattern.permute.xlu0 0
          %3950 = vperm.xlu0 %3949, %v3928
          %v3951 = vpop.permute.xlu0 %3950
          %3954 = vset.pattern.permute.xlu0 0
          %3955 = vperm.xlu0 %3954, %v3929
          %v3956 = vpop.permute.xlu0 %3955
          %3959 = vset.pattern.permute.xlu0 0
          %3960 = vperm.xlu0 %3959, %v3930
          %v3961 = vpop.permute.xlu0 %3960
          %3964 = vset.pattern.permute.xlu0 0
          %3965 = vperm.xlu0 %3964, %v3931
          %v3966 = vpop.permute.xlu0 %3965
          %3969 = vset.pattern.permute.xlu0 0
          %3970 = vperm.xlu0 %3969, %v3932
          %v3971 = vpop.permute.xlu0 %3970
          %3974 = vset.pattern.permute.xlu0 0
          %3975 = vperm.xlu0 %3974, %v3933
          %v3976 = vpop.permute.xlu0 %3975
          %3979 = vset.pattern.permute.xlu0 0
          %3980 = vperm.xlu0 %3979, %v3934
          %v3981 = vpop.permute.xlu0 %3980
          %3984 = vset.pattern.permute.xlu0 0
          %3985 = vperm.xlu0 %3984, %v3935
          %v3986 = vpop.permute.xlu0 %3985
          %3989 = vset.pattern.permute.xlu0 0
          %3990 = vperm.xlu0 %3989, %v3936
          %v3991 = vpop.permute.xlu0 %3990
          %3994 = vset.pattern.permute.xlu0 0
          %3995 = vperm.xlu0 %3994, %v3937
          %v3996 = vpop.permute.xlu0 %3995
          %3999 = vset.pattern.permute.xlu0 0
          %4000 = vperm.xlu0 %3999, %v3938
          %v4001 = vpop.permute.xlu0 %4000
          %4004 = vset.pattern.permute.xlu0 0
          %4005 = vperm.xlu0 %4004, %v3939
          %v4006 = vpop.permute.xlu0 %4005
          %4009 = vset.pattern.permute.xlu0 0
          %4010 = vperm.xlu0 %4009, %v3940
          %v4011 = vpop.permute.xlu0 %4010
          %4014 = vset.pattern.permute.xlu0 0
          %4015 = vperm.xlu0 %4014, %v3941
          %v4016 = vpop.permute.xlu0 %4015
          %4019 = vset.pattern.permute.xlu0 0
          %4020 = vperm.xlu0 %4019, %v3942
          %v4021 = vpop.permute.xlu0 %4020
          %v4039 = vunpack.c.l.b16 %v3911
          %v4040 = vunpack.c.h.b16 %v3911
          %v4041 = vunpack.c.l.b16 %v3912
          %v4042 = vunpack.c.h.b16 %v3912
          %v4043 = vunpack.c.l.b16 %v3913
          %v4044 = vunpack.c.h.b16 %v3913
          %v4045 = vunpack.c.l.b16 %v3914
          %v4046 = vunpack.c.h.b16 %v3914
          %v4047 = vunpack.c.l.b16 %v3915
          %v4048 = vunpack.c.h.b16 %v3915
          %v4049 = vunpack.c.l.b16 %v3916
          %v4050 = vunpack.c.h.b16 %v3916
          %v4051 = vunpack.c.l.b16 %v3917
          %v4052 = vunpack.c.h.b16 %v3917
          %v4053 = vunpack.c.l.b16 %v3918
          %v4054 = vunpack.c.h.b16 %v3918
          %v4055 = vunpack.c.l.b16 %v3919
          %v4056 = vunpack.c.h.b16 %v3919
          %v4057 = vunpack.c.l.b16 %v3920
          %v4058 = vunpack.c.h.b16 %v3920
          %v4059 = vunpack.c.l.b16 %v3921
          %v4060 = vunpack.c.h.b16 %v3921
          %v4061 = vunpack.c.l.b16 %v3922
          %v4062 = vunpack.c.h.b16 %v3922
          %v4063 = vunpack.c.l.b16 %v3923
          %v4064 = vunpack.c.h.b16 %v3923
          %v4065 = vunpack.c.l.b16 %v3924
          %v4066 = vunpack.c.h.b16 %v3924
          %v4067 = vunpack.c.l.b16 %v3925
          %v4068 = vunpack.c.h.b16 %v3925
          %v4069 = vunpack.c.l.b16 %v3926
          %v4070 = vunpack.c.h.b16 %v3926
          %v4071 = vpack.c.b16 %v4041, %v4039
          %v4072 = vpack.c.b16 %v4042, %v4040
          %v4073 = vpack.c.b16 %v4045, %v4043
          %v4074 = vpack.c.b16 %v4046, %v4044
          %v4075 = vpack.c.b16 %v4049, %v4047
          %v4076 = vpack.c.b16 %v4050, %v4048
          %v4077 = vpack.c.b16 %v4053, %v4051
          %v4078 = vpack.c.b16 %v4054, %v4052
          %v4079 = vpack.c.b16 %v4057, %v4055
          %v4080 = vpack.c.b16 %v4058, %v4056
          %v4081 = vpack.c.b16 %v4061, %v4059
          %v4082 = vpack.c.b16 %v4062, %v4060
          %v4083 = vpack.c.b16 %v4065, %v4063
          %v4084 = vpack.c.b16 %v4066, %v4064
          %v4085 = vpack.c.b16 %v4069, %v4067
          %v4086 = vpack.c.b16 %v4070, %v4068
          %4103 = vmatprep.subr.bf16.mxu0 0
          %4104 = vmatpush1.bf16.msra.mxu0 %v3895
          %4105 = vmatprep.subr.bf16.mxu0 0
          %4106 = vmatpush1.bf16.msra.mxu0 %v3896
          %4107 = vmatprep.subr.bf16.mxu0 0
          %4108 = vmatpush1.bf16.msra.mxu0 %v3897
          %4109 = vmatprep.subr.bf16.mxu0 0
          %4110 = vmatpush1.bf16.msra.mxu0 %v3898
          %4111 = vmatprep.subr.bf16.mxu0 0
          %4112 = vmatpush1.bf16.msra.mxu0 %v3899
          %4113 = vmatprep.subr.bf16.mxu0 0
          %4114 = vmatpush1.bf16.msra.mxu0 %v3900
          %4115 = vmatprep.subr.bf16.mxu0 0
          %4116 = vmatpush1.bf16.msra.mxu0 %v3901
          %4117 = vmatprep.subr.bf16.mxu0 0
          %4118 = vmatpush1.bf16.msra.mxu0 %v3902
          %4119 = vmatprep.subr.bf16.mxu0 0
          %4120 = vmatpush1.bf16.msra.mxu0 %v3903
          %4121 = vmatprep.subr.bf16.mxu0 0
          %4122 = vmatpush1.bf16.msra.mxu0 %v3904
          %4123 = vmatprep.subr.bf16.mxu0 0
          %4124 = vmatpush1.bf16.msra.mxu0 %v3905
          %4125 = vmatprep.subr.bf16.mxu0 0
          %4126 = vmatpush1.bf16.msra.mxu0 %v3906
          %4127 = vmatprep.subr.bf16.mxu0 0
          %4128 = vmatpush1.bf16.msra.mxu0 %v3907
          %4129 = vmatprep.subr.bf16.mxu0 0
          %4130 = vmatpush1.bf16.msra.mxu0 %v3908
          %4131 = vmatprep.subr.bf16.mxu0 0
          %4132 = vmatpush1.bf16.msra.mxu0 %v3909
          %4133 = vmatprep.subr.bf16.mxu0 0
          %4134 = vmatpush1.bf16.msra.mxu0 %v3910
          %4135 = vmatprep.mubr.bf16.mxu0 %v4072
          %4136 = vmatmul.mubr.bf16.gmra.mrb[0].mxu0 %v4071
          %v4137 = vpop.f32.mrb[0].mxu0
          %v4138 = vadd.f32 %v3946, %v4137
          %v4139 = vpop.f32.mrb[0].mxu0
          %v4140 = vpop.f32.mrb[0].mxu0
          %v4141 = vadd.f32 %v3951, %v4140
          %v4142 = vpop.f32.mrb[0].mxu0
          %4143 = vmatprep.mubr.bf16.mxu0 %v4074
          %4144 = vmatmul.mubr.bf16.gmra.mrb[0].mxu0 %v4073
          %v4145 = vpop.f32.mrb[0].mxu0
          %v4146 = vadd.f32 %v3956, %v4145
          %v4147 = vpop.f32.mrb[0].mxu0
          %v4148 = vpop.f32.mrb[0].mxu0
          %v4149 = vadd.f32 %v3961, %v4148
          %v4150 = vpop.f32.mrb[0].mxu0
          %4151 = vmatprep.mubr.bf16.mxu0 %v4076
          %4152 = vmatmul.mubr.bf16.gmra.mrb[0].mxu0 %v4075
          %v4153 = vpop.f32.mrb[0].mxu0
          %v4154 = vadd.f32 %v3966, %v4153
          %v4155 = vpop.f32.mrb[0].mxu0
          %v4156 = vpop.f32.mrb[0].mxu0
          %v4157 = vadd.f32 %v3971, %v4156
          %v4158 = vpop.f32.mrb[0].mxu0
          %4159 = vmatprep.mubr.bf16.mxu0 %v4078
          %4160 = vmatmul.mubr.bf16.gmra.mrb[0].mxu0 %v4077
          %v4161 = vpop.f32.mrb[0].mxu0
          %v4162 = vadd.f32 %v3976, %v4161
          %v4163 = vpop.f32.mrb[0].mxu0
          %v4164 = vpop.f32.mrb[0].mxu0
          %v4165 = vadd.f32 %v3981, %v4164
          %v4166 = vpop.f32.mrb[0].mxu0
          %4167 = vmatprep.mubr.bf16.mxu0 %v4080
          %4168 = vmatmul.mubr.bf16.gmra.mrb[0].mxu0 %v4079
          %v4169 = vpop.f32.mrb[0].mxu0
          %v4170 = vadd.f32 %v3986, %v4169
          %v4171 = vpop.f32.mrb[0].mxu0
          %v4172 = vpop.f32.mrb[0].mxu0
          %v4173 = vadd.f32 %v3991, %v4172
          %v4174 = vpop.f32.mrb[0].mxu0
          %4175 = vmatprep.mubr.bf16.mxu0 %v4082
          %4176 = vmatmul.mubr.bf16.gmra.mrb[0].mxu0 %v4081
          %v4177 = vpop.f32.mrb[0].mxu0
          %v4178 = vadd.f32 %v3996, %v4177
          %v4179 = vpop.f32.mrb[0].mxu0
          %v4180 = vpop.f32.mrb[0].mxu0
          %v4181 = vadd.f32 %v4001, %v4180
          %v4182 = vpop.f32.mrb[0].mxu0
          %4183 = vmatprep.mubr.bf16.mxu0 %v4084
          %4184 = vmatmul.mubr.bf16.gmra.mrb[0].mxu0 %v4083
          %v4185 = vpop.f32.mrb[0].mxu0
          %v4186 = vadd.f32 %v4006, %v4185
          %v4187 = vpop.f32.mrb[0].mxu0
          %v4188 = vpop.f32.mrb[0].mxu0
          %v4189 = vadd.f32 %v4011, %v4188
          %v4190 = vpop.f32.mrb[0].mxu0
          %4191 = vmatprep.mubr.bf16.mxu0 %v4086
          %4192 = vmatmul.mubr.bf16.gmra.mrb[0].mxu0 %v4085
          %v4193 = vpop.f32.mrb[0].mxu0
          %v4194 = vadd.f32 %v4016, %v4193
          %v4195 = vpop.f32.mrb[0].mxu0
          %v4196 = vpop.f32.mrb[0].mxu0
          %v4197 = vadd.f32 %v4021, %v4196
          %v4198 = vpop.f32.mrb[0].mxu0
          %4199 = vdwg.mxu0
          %v4200 = vmax.f32 %v4138, 0.0
          %v4201 = vmax.f32 %v4141, 0.0
          %v4202 = vmax.f32 %v4146, 0.0
          %v4203 = vmax.f32 %v4149, 0.0
          %v4204 = vmax.f32 %v4154, 0.0
          %v4205 = vmax.f32 %v4157, 0.0
          %v4206 = vmax.f32 %v4162, 0.0
          %v4207 = vmax.f32 %v4165, 0.0
          %v4208 = vmax.f32 %v4170, 0.0
          %v4209 = vmax.f32 %v4173, 0.0
          %v4210 = vmax.f32 %v4178, 0.0
          %v4211 = vmax.f32 %v4181, 0.0
          %v4212 = vmax.f32 %v4186, 0.0
          %v4213 = vmax.f32 %v4189, 0.0
          %v4214 = vmax.f32 %v4194, 0.0
          %v4215 = vmax.f32 %v4197, 0.0
          %v4216 = vld [vmem:[#allocation6] sm:$0xff]
          %v4217 = vld [vmem:[#allocation6 + $0x8] sm:$0xff]
          %v4218 = vld [vmem:[#allocation6 + $0x10] sm:$0xff]
          %v4219 = vld [vmem:[#allocation6 + $0x18] sm:$0xff]
          %v4220 = vld [vmem:[#allocation6 + $0x20] sm:$0xff]
          %v4221 = vld [vmem:[#allocation6 + $0x28] sm:$0xff]
          %v4222 = vld [vmem:[#allocation6 + $0x30] sm:$0xff]
          %v4223 = vld [vmem:[#allocation6 + $0x38] sm:$0xff]
          %v4224 = vld [vmem:[#allocation6 + $0x40] sm:$0xff]
          %v4225 = vld [vmem:[#allocation6 + $0x48] sm:$0xff]
          %v4226 = vld [vmem:[#allocation6 + $0x50] sm:$0xff]
          %v4227 = vld [vmem:[#allocation6 + $0x58] sm:$0xff]
          %v4228 = vld [vmem:[#allocation6 + $0x60] sm:$0xff]
          %v4229 = vld [vmem:[#allocation6 + $0x68] sm:$0xff]
          %v4230 = vld [vmem:[#allocation6 + $0x70] sm:$0xff]
          %v4231 = vld [vmem:[#allocation6 + $0x78] sm:$0xff]
          %v4232 = vpack.c.bf16 %v4201, %v4200
          %v4233 = vpack.c.bf16 %v4203, %v4202
          %v4234 = vpack.c.bf16 %v4205, %v4204
          %v4235 = vpack.c.bf16 %v4207, %v4206
          %v4236 = vpack.c.bf16 %v4209, %v4208
          %v4237 = vpack.c.bf16 %v4211, %v4210
          %v4238 = vpack.c.bf16 %v4213, %v4212
          %v4239 = vpack.c.bf16 %v4215, %v4214
          %v4240 = vld [vmem:[#allocation7] sm:$0xff]
          %v4241 = vld [vmem:[#allocation7 + $0x8] sm:$0xff]
          %v4242 = vld [vmem:[#allocation7 + $0x10] sm:$0xff]
          %v4243 = vld [vmem:[#allocation7 + $0x18] sm:$0xff]
          %v4244 = vld [vmem:[#allocation7 + $0x20] sm:$0xff]
          %v4245 = vld [vmem:[#allocation7 + $0x28] sm:$0xff]
          %v4246 = vld [vmem:[#allocation7 + $0x30] sm:$0xff]
          %v4247 = vld [vmem:[#allocation7 + $0x38] sm:$0xff]
          %v4248 = vld [vmem:[#allocation7 + $0x40] sm:$0xff]
          %v4249 = vld [vmem:[#allocation7 + $0x48] sm:$0xff]
          %v4250 = vld [vmem:[#allocation7 + $0x50] sm:$0xff]
          %v4251 = vld [vmem:[#allocation7 + $0x58] sm:$0xff]
          %v4252 = vld [vmem:[#allocation7 + $0x60] sm:$0xff]
          %v4253 = vld [vmem:[#allocation7 + $0x68] sm:$0xff]
          %v4254 = vld [vmem:[#allocation7 + $0x70] sm:$0xff]
          %v4255 = vld [vmem:[#allocation7 + $0x78] sm:$0xff]
          %v4256 = vld [vmem:[#allocation7 + $0x80] sm:$0xff]
          %v4257 = vld [vmem:[#allocation7 + $0x88] sm:$0xff]
          %v4258 = vld [vmem:[#allocation7 + $0x90] sm:$0xff]
          %v4259 = vld [vmem:[#allocation7 + $0x98] sm:$0xff]
          %v4260 = vld [vmem:[#allocation7 + $0xa0] sm:$0xff]
          %v4261 = vld [vmem:[#allocation7 + $0xa8] sm:$0xff]
          %v4262 = vld [vmem:[#allocation7 + $0xb0] sm:$0xff]
          %v4263 = vld [vmem:[#allocation7 + $0xb8] sm:$0xff]
          %v4264 = vld [vmem:[#allocation7 + $0xc0] sm:$0xff]
          %v4265 = vld [vmem:[#allocation7 + $0xc8] sm:$0xff]
          %v4266 = vld [vmem:[#allocation7 + $0xd0] sm:$0xff]
          %v4267 = vld [vmem:[#allocation7 + $0xd8] sm:$0xff]
          %v4268 = vld [vmem:[#allocation7 + $0xe0] sm:$0xff]
          %v4269 = vld [vmem:[#allocation7 + $0xe8] sm:$0xff]
          %v4270 = vld [vmem:[#allocation7 + $0xf0] sm:$0xff]
          %v4271 = vld [vmem:[#allocation7 + $0xf8] sm:$0xff]
          %4273 = vset.pattern.permute.xlu0 0
          %4274 = vperm.xlu0 %4273, %v4240
          %v4275 = vpop.permute.xlu0 %4274
          %4278 = vset.pattern.permute.xlu0 0
          %4279 = vperm.xlu0 %4278, %v4241
          %v4280 = vpop.permute.xlu0 %4279
          %4283 = vset.pattern.permute.xlu0 0
          %4284 = vperm.xlu0 %4283, %v4242
          %v4285 = vpop.permute.xlu0 %4284
          %4288 = vset.pattern.permute.xlu0 0
          %4289 = vperm.xlu0 %4288, %v4243
          %v4290 = vpop.permute.xlu0 %4289
          %4293 = vset.pattern.permute.xlu0 0
          %4294 = vperm.xlu0 %4293, %v4244
          %v4295 = vpop.permute.xlu0 %4294
          %4298 = vset.pattern.permute.xlu0 0
          %4299 = vperm.xlu0 %4298, %v4245
          %v4300 = vpop.permute.xlu0 %4299
          %4303 = vset.pattern.permute.xlu0 0
          %4304 = vperm.xlu0 %4303, %v4246
          %v4305 = vpop.permute.xlu0 %4304
          %4308 = vset.pattern.permute.xlu0 0
          %4309 = vperm.xlu0 %4308, %v4247
          %v4310 = vpop.permute.xlu0 %4309
          %4313 = vset.pattern.permute.xlu0 0
          %4314 = vperm.xlu0 %4313, %v4248
          %v4315 = vpop.permute.xlu0 %4314
          %4318 = vset.pattern.permute.xlu0 0
          %4319 = vperm.xlu0 %4318, %v4249
          %v4320 = vpop.permute.xlu0 %4319
          %4323 = vset.pattern.permute.xlu0 0
          %4324 = vperm.xlu0 %4323, %v4250
          %v4325 = vpop.permute.xlu0 %4324
          %4328 = vset.pattern.permute.xlu0 0
          %4329 = vperm.xlu0 %4328, %v4251
          %v4330 = vpop.permute.xlu0 %4329
          %4333 = vset.pattern.permute.xlu0 0
          %4334 = vperm.xlu0 %4333, %v4252
          %v4335 = vpop.permute.xlu0 %4334
          %4338 = vset.pattern.permute.xlu0 0
          %4339 = vperm.xlu0 %4338, %v4253
          %v4340 = vpop.permute.xlu0 %4339
          %4343 = vset.pattern.permute.xlu0 0
          %4344 = vperm.xlu0 %4343, %v4254
          %v4345 = vpop.permute.xlu0 %4344
          %4348 = vset.pattern.permute.xlu0 0
          %4349 = vperm.xlu0 %4348, %v4255
          %v4350 = vpop.permute.xlu0 %4349
          %4353 = vset.pattern.permute.xlu0 0
          %4354 = vperm.xlu0 %4353, %v4256
          %v4355 = vpop.permute.xlu0 %4354
          %4358 = vset.pattern.permute.xlu0 0
          %4359 = vperm.xlu0 %4358, %v4257
          %v4360 = vpop.permute.xlu0 %4359
          %4363 = vset.pattern.permute.xlu0 0
          %4364 = vperm.xlu0 %4363, %v4258
          %v4365 = vpop.permute.xlu0 %4364
          %4368 = vset.pattern.permute.xlu0 0
          %4369 = vperm.xlu0 %4368, %v4259
          %v4370 = vpop.permute.xlu0 %4369
          %4373 = vset.pattern.permute.xlu0 0
          %4374 = vperm.xlu0 %4373, %v4260
          %v4375 = vpop.permute.xlu0 %4374
          %4378 = vset.pattern.permute.xlu0 0
          %4379 = vperm.xlu0 %4378, %v4261
          %v4380 = vpop.permute.xlu0 %4379
          %4383 = vset.pattern.permute.xlu0 0
          %4384 = vperm.xlu0 %4383, %v4262
          %v4385 = vpop.permute.xlu0 %4384
          %4388 = vset.pattern.permute.xlu0 0
          %4389 = vperm.xlu0 %4388, %v4263
          %v4390 = vpop.permute.xlu0 %4389
          %4393 = vset.pattern.permute.xlu0 0
          %4394 = vperm.xlu0 %4393, %v4264
          %v4395 = vpop.permute.xlu0 %4394
          %4398 = vset.pattern.permute.xlu0 0
          %4399 = vperm.xlu0 %4398, %v4265
          %v4400 = vpop.permute.xlu0 %4399
          %4403 = vset.pattern.permute.xlu0 0
          %4404 = vperm.xlu0 %4403, %v4266
          %v4405 = vpop.permute.xlu0 %4404
          %4408 = vset.pattern.permute.xlu0 0
          %4409 = vperm.xlu0 %4408, %v4267
          %v4410 = vpop.permute.xlu0 %4409
          %4413 = vset.pattern.permute.xlu0 0
          %4414 = vperm.xlu0 %4413, %v4268
          %v4415 = vpop.permute.xlu0 %4414
          %4418 = vset.pattern.permute.xlu0 0
          %4419 = vperm.xlu0 %4418, %v4269
          %v4420 = vpop.permute.xlu0 %4419
          %4423 = vset.pattern.permute.xlu0 0
          %4424 = vperm.xlu0 %4423, %v4270
          %v4425 = vpop.permute.xlu0 %4424
          %4428 = vset.pattern.permute.xlu0 0
          %4429 = vperm.xlu0 %4428, %v4271
          %v4430 = vpop.permute.xlu0 %4429
          %4432 = vmatprep.subr.bf16.mxu0 0
          %4433 = vmatpush1.bf16.msra.mxu0 %v4232
          %4434 = vmatprep.subr.bf16.mxu0 0
          %4435 = vmatpush1.bf16.msra.mxu0 %v4233
          %4436 = vmatprep.subr.bf16.mxu0 0
          %4437 = vmatpush1.bf16.msra.mxu0 %v4234
          %4438 = vmatprep.subr.bf16.mxu0 0
          %4439 = vmatpush1.bf16.msra.mxu0 %v4235
          %4440 = vmatprep.subr.bf16.mxu0 0
          %4441 = vmatpush1.bf16.msra.mxu0 %v4236
          %4442 = vmatprep.subr.bf16.mxu0 0
          %4443 = vmatpush1.bf16.msra.mxu0 %v4237
          %4444 = vmatprep.subr.bf16.mxu0 0
          %4445 = vmatpush1.bf16.msra.mxu0 %v4238
          %4446 = vmatprep.subr.bf16.mxu0 0
          %4447 = vmatpush1.bf16.msra.mxu0 %v4239
          %4448 = vmatprep.subr.bf16.mxu0 0
          %4449 = vmatpush1.bf16.msra.mxu0 0
          %4450 = vmatprep.subr.bf16.mxu0 0
          %4451 = vmatpush1.bf16.msra.mxu0 0
          %4452 = vmatprep.subr.bf16.mxu0 0
          %4453 = vmatpush1.bf16.msra.mxu0 0
          %4454 = vmatprep.subr.bf16.mxu0 0
          %4455 = vmatpush1.bf16.msra.mxu0 0
          %4456 = vmatprep.subr.bf16.mxu0 0
          %4457 = vmatpush1.bf16.msra.mxu0 0
          %4458 = vmatprep.subr.bf16.mxu0 0
          %4459 = vmatpush1.bf16.msra.mxu0 0
          %4460 = vmatprep.subr.bf16.mxu0 0
          %4461 = vmatpush1.bf16.msra.mxu0 0
          %4462 = vmatprep.subr.bf16.mxu0 0
          %4463 = vmatpush1.bf16.msra.mxu0 0
          %4464 = vmatprep.mubr.bf16.mxu0 0
          %4465 = vmatmul.mubr.bf16.gmra.mrb[0].mxu0 %v4216
          %v4466 = vpop.f32.mrb[0].mxu0
          %v4467 = vadd.f32 %v4275, %v4466
          %v4468 = vpop.f32.mrb[0].mxu0
          %v4469 = vpop.f32.mrb[0].mxu0
          %v4470 = vadd.f32 %v4280, %v4469
          %v4471 = vpop.f32.mrb[0].mxu0
          %4472 = vmatprep.mubr.bf16.mxu0 0
          %4473 = vmatmul.mubr.bf16.gmra.mrb[0].mxu0 %v4217
          %v4474 = vpop.f32.mrb[0].mxu0
          %v4475 = vadd.f32 %v4285, %v4474
          %v4476 = vpop.f32.mrb[0].mxu0
          %v4477 = vpop.f32.mrb[0].mxu0
          %v4478 = vadd.f32 %v4290, %v4477
          %v4479 = vpop.f32.mrb[0].mxu0
          %4480 = vmatprep.mubr.bf16.mxu0 0
          %4481 = vmatmul.mubr.bf16.gmra.mrb[0].mxu0 %v4218
          %v4482 = vpop.f32.mrb[0].mxu0
          %v4483 = vadd.f32 %v4295, %v4482
          %v4484 = vpop.f32.mrb[0].mxu0
          %v4485 = vpop.f32.mrb[0].mxu0
          %v4486 = vadd.f32 %v4300, %v4485
          %v4487 = vpop.f32.mrb[0].mxu0
          %4488 = vmatprep.mubr.bf16.mxu0 0
          %4489 = vmatmul.mubr.bf16.gmra.mrb[0].mxu0 %v4219
          %v4490 = vpop.f32.mrb[0].mxu0
          %v4491 = vadd.f32 %v4305, %v4490
          %v4492 = vpop.f32.mrb[0].mxu0
          %v4493 = vpop.f32.mrb[0].mxu0
          %v4494 = vadd.f32 %v4310, %v4493
          %v4495 = vpop.f32.mrb[0].mxu0
          %4496 = vmatprep.mubr.bf16.mxu0 0
          %4497 = vmatmul.mubr.bf16.gmra.mrb[0].mxu0 %v4220
          %v4498 = vpop.f32.mrb[0].mxu0
          %v4499 = vadd.f32 %v4315, %v4498
          %v4500 = vpop.f32.mrb[0].mxu0
          %v4501 = vpop.f32.mrb[0].mxu0
          %v4502 = vadd.f32 %v4320, %v4501
          %v4503 = vpop.f32.mrb[0].mxu0
          %4504 = vmatprep.mubr.bf16.mxu0 0
          %4505 = vmatmul.mubr.bf16.gmra.mrb[0].mxu0 %v4221
          %v4506 = vpop.f32.mrb[0].mxu0
          %v4507 = vadd.f32 %v4325, %v4506
          %v4508 = vpop.f32.mrb[0].mxu0
          %v4509 = vpop.f32.mrb[0].mxu0
          %v4510 = vadd.f32 %v4330, %v4509
          %v4511 = vpop.f32.mrb[0].mxu0
          %4512 = vmatprep.mubr.bf16.mxu0 0
          %4513 = vmatmul.mubr.bf16.gmra.mrb[0].mxu0 %v4222
          %v4514 = vpop.f32.mrb[0].mxu0
          %v4515 = vadd.f32 %v4335, %v4514
          %v4516 = vpop.f32.mrb[0].mxu0
          %v4517 = vpop.f32.mrb[0].mxu0
          %v4518 = vadd.f32 %v4340, %v4517
          %v4519 = vpop.f32.mrb[0].mxu0
          %4520 = vmatprep.mubr.bf16.mxu0 0
          %4521 = vmatmul.mubr.bf16.gmra.mrb[0].mxu0 %v4223
          %v4522 = vpop.f32.mrb[0].mxu0
          %v4523 = vadd.f32 %v4345, %v4522
          %v4524 = vpop.f32.mrb[0].mxu0
          %v4525 = vpop.f32.mrb[0].mxu0
          %v4526 = vadd.f32 %v4350, %v4525
          %v4527 = vpop.f32.mrb[0].mxu0
          %4528 = vmatprep.mubr.bf16.mxu0 0
          %4529 = vmatmul.mubr.bf16.gmra.mrb[0].mxu0 %v4224
          %v4530 = vpop.f32.mrb[0].mxu0
          %v4531 = vadd.f32 %v4355, %v4530
          %v4532 = vpop.f32.mrb[0].mxu0
          %v4533 = vpop.f32.mrb[0].mxu0
          %v4534 = vadd.f32 %v4360, %v4533
          %v4535 = vpop.f32.mrb[0].mxu0
          %4536 = vmatprep.mubr.bf16.mxu0 0
          %4537 = vmatmul.mubr.bf16.gmra.mrb[0].mxu0 %v4225
          %v4538 = vpop.f32.mrb[0].mxu0
          %v4539 = vadd.f32 %v4365, %v4538
          %v4540 = vpop.f32.mrb[0].mxu0
          %v4541 = vpop.f32.mrb[0].mxu0
          %v4542 = vadd.f32 %v4370, %v4541
          %v4543 = vpop.f32.mrb[0].mxu0
          %4544 = vmatprep.mubr.bf16.mxu0 0
          %4545 = vmatmul.mubr.bf16.gmra.mrb[0].mxu0 %v4226
          %v4546 = vpop.f32.mrb[0].mxu0
          %v4547 = vadd.f32 %v4375, %v4546
          %v4548 = vpop.f32.mrb[0].mxu0
          %v4549 = vpop.f32.mrb[0].mxu0
          %v4550 = vadd.f32 %v4380, %v4549
          %v4551 = vpop.f32.mrb[0].mxu0
          %4552 = vmatprep.mubr.bf16.mxu0 0
          %4553 = vmatmul.mubr.bf16.gmra.mrb[0].mxu0 %v4227
          %v4554 = vpop.f32.mrb[0].mxu0
          %v4555 = vadd.f32 %v4385, %v4554
          %v4556 = vpop.f32.mrb[0].mxu0
          %v4557 = vpop.f32.mrb[0].mxu0
          %v4558 = vadd.f32 %v4390, %v4557
          %v4559 = vpop.f32.mrb[0].mxu0
          %4560 = vmatprep.mubr.bf16.mxu0 0
          %4561 = vmatmul.mubr.bf16.gmra.mrb[0].mxu0 %v4228
          %v4562 = vpop.f32.mrb[0].mxu0
          %v4563 = vadd.f32 %v4395, %v4562
          %v4564 = vpop.f32.mrb[0].mxu0
          %v4565 = vpop.f32.mrb[0].mxu0
          %v4566 = vadd.f32 %v4400, %v4565
          %v4567 = vpop.f32.mrb[0].mxu0
          %4568 = vmatprep.mubr.bf16.mxu0 0
          %4569 = vmatmul.mubr.bf16.gmra.mrb[0].mxu0 %v4229
          %v4570 = vpop.f32.mrb[0].mxu0
          %v4571 = vadd.f32 %v4405, %v4570
          %v4572 = vpop.f32.mrb[0].mxu0
          %v4573 = vpop.f32.mrb[0].mxu0
          %v4574 = vadd.f32 %v4410, %v4573
          %v4575 = vpop.f32.mrb[0].mxu0
          %4576 = vmatprep.mubr.bf16.mxu0 0
          %4577 = vmatmul.mubr.bf16.gmra.mrb[0].mxu0 %v4230
          %v4578 = vpop.f32.mrb[0].mxu0
          %v4579 = vadd.f32 %v4415, %v4578
          %v4580 = vpop.f32.mrb[0].mxu0
          %v4581 = vpop.f32.mrb[0].mxu0
          %v4582 = vadd.f32 %v4420, %v4581
          %v4583 = vpop.f32.mrb[0].mxu0
          %4584 = vmatprep.mubr.bf16.mxu0 0
          %4585 = vmatmul.mubr.bf16.gmra.mrb[0].mxu0 %v4231
          %v4586 = vpop.f32.mrb[0].mxu0
          %v4587 = vadd.f32 %v4425, %v4586
          %v4588 = vpop.f32.mrb[0].mxu0
          %v4589 = vpop.f32.mrb[0].mxu0
          %v4590 = vadd.f32 %v4430, %v4589
          %v4591 = vpop.f32.mrb[0].mxu0
          %4592 = vdwg.mxu0
          %v4593 = vadd.f32 %v4467, %v3415
          %v4594 = vadd.f32 %v4470, %v3416
          %v4595 = vadd.f32 %v4475, %v3417
          %v4596 = vadd.f32 %v4478, %v3418
          %v4597 = vadd.f32 %v4483, %v3419
          %v4598 = vadd.f32 %v4486, %v3420
          %v4599 = vadd.f32 %v4491, %v3421
          %v4600 = vadd.f32 %v4494, %v3422
          %v4601 = vadd.f32 %v4499, %v3423
          %v4602 = vadd.f32 %v4502, %v3424
          %v4603 = vadd.f32 %v4507, %v3425
          %v4604 = vadd.f32 %v4510, %v3426
          %v4605 = vadd.f32 %v4515, %v3427
          %v4606 = vadd.f32 %v4518, %v3428
          %v4607 = vadd.f32 %v4523, %v3429
          %v4608 = vadd.f32 %v4526, %v3430
          %v4609 = vadd.f32 %v4531, %v3431
          %v4610 = vadd.f32 %v4534, %v3432
          %v4611 = vadd.f32 %v4539, %v3433
          %v4612 = vadd.f32 %v4542, %v3434
          %v4613 = vadd.f32 %v4547, %v3435
          %v4614 = vadd.f32 %v4550, %v3436
          %v4615 = vadd.f32 %v4555, %v3437
          %v4616 = vadd.f32 %v4558, %v3438
          %v4617 = vadd.f32 %v4563, %v3439
          %v4618 = vadd.f32 %v4566, %v3440
          %v4619 = vadd.f32 %v4571, %v3441
          %v4620 = vadd.f32 %v4574, %v3442
          %v4621 = vadd.f32 %v4579, %v3443
          %v4622 = vadd.f32 %v4582, %v3444
          %v4623 = vadd.f32 %v4587, %v3445
          %v4624 = vadd.f32 %v4590, %v3446
          %4625 = vst [vmem:[%s417] sm:$0xff] %v4593
          %4626 = vst [vmem:[%s417 + $0x8] sm:$0xff] %v4594
          %4627 = vst [vmem:[%s417 + $0x10] sm:$0xff] %v4595
          %4628 = vst [vmem:[%s417 + $0x18] sm:$0xff] %v4596
          %4629 = vst [vmem:[%s417 + $0x20] sm:$0xff] %v4597
          %4630 = vst [vmem:[%s417 + $0x28] sm:$0xff] %v4598
          %4631 = vst [vmem:[%s417 + $0x30] sm:$0xff] %v4599
          %4632 = vst [vmem:[%s417 + $0x38] sm:$0xff] %v4600
          %4633 = vst [vmem:[%s417 + $0x40] sm:$0xff] %v4601
          %4634 = vst [vmem:[%s417 + $0x48] sm:$0xff] %v4602
          %4635 = vst [vmem:[%s417 + $0x50] sm:$0xff] %v4603
          %4636 = vst [vmem:[%s417 + $0x58] sm:$0xff] %v4604
          %4637 = vst [vmem:[%s417 + $0x60] sm:$0xff] %v4605
          %4638 = vst [vmem:[%s417 + $0x68] sm:$0xff] %v4606
          %4639 = vst [vmem:[%s417 + $0x70] sm:$0xff] %v4607
          %4640 = vst [vmem:[%s417 + $0x78] sm:$0xff] %v4608
          %4641 = vst [vmem:[%s417 + $0x80] sm:$0xff] %v4609
          %4642 = vst [vmem:[%s417 + $0x88] sm:$0xff] %v4610
          %4643 = vst [vmem:[%s417 + $0x90] sm:$0xff] %v4611
          %4644 = vst [vmem:[%s417 + $0x98] sm:$0xff] %v4612
          %4645 = vst [vmem:[%s417 + $0xa0] sm:$0xff] %v4613
          %4646 = vst [vmem:[%s417 + $0xa8] sm:$0xff] %v4614
          %4647 = vst [vmem:[%s417 + $0xb0] sm:$0xff] %v4615
          %4648 = vst [vmem:[%s417 + $0xb8] sm:$0xff] %v4616
          %4649 = vst [vmem:[%s417 + $0xc0] sm:$0xff] %v4617
          %4650 = vst [vmem:[%s417 + $0xc8] sm:$0xff] %v4618
          %4651 = vst [vmem:[%s417 + $0xd0] sm:$0xff] %v4619
          %4652 = vst [vmem:[%s417 + $0xd8] sm:$0xff] %v4620
          %4653 = vst [vmem:[%s417 + $0xe0] sm:$0xff] %v4621
          %4654 = vst [vmem:[%s417 + $0xe8] sm:$0xff] %v4622
          %4655 = vst [vmem:[%s417 + $0xf0] sm:$0xff] %v4623
          %4656 = vst [vmem:[%s417 + $0xf8] sm:$0xff] %v4624
        $region80: #{tpu_custom_call.1} parent=55 // pred_fallthru
          _
        %s4657 = sand.u32 %s270, 1
        %s4658 = scalar_lea.sflag [#allocation12], %s4657
        %s4659 = sand.u32 %s270, 1
        %s4660 = smul.addr %s4659, 256
        %s4661 = scalar_lea.vmem [#allocation13], %s4660
        // Predicated region
        $region85: #{tpu_custom_call.1} parent=55 // pred_check
          %p4662 = pneg %p280
        $region86: #{tpu_custom_call.1} parent=55 // pred_check_branch
          %4664 = sbr.rel (%p4662) target = $region88
        $region87: #{tpu_custom_call.1} parent=55 // pred_region
          %p4665 = scmp.eq.s32.totalorder %s32, 2
          %s4666 = scalar_select %p4665, %s33, 0
          %s4668 = ssub.s32 4096, 4096
          %4669 = vsyncadd %s4658, %s4668
          %s4670 = smul.addr %s31, 32
          %s4671 = sadd.s32 %s4666, %s4670
          %s4672 = smul.addr %s4671, 128
          %s4673 = scalar_lea.hbm %s9, %s4672
          %s4674 = sshll.u32 %s4661, 4
          %s4675 = int_to_ptr.vmem [resolvable:$true] %s4674
          %4680 = dma.vmem_to_hbm [thread:$0]  %s4675, 4096, %s4673, %s4658, 128, 128, 8
        $region88: #{tpu_custom_call.1} parent=55 // pred_fallthru
          _
      $region56: #{tpu_custom_call.1} parent=5 // pred_fallthru
        _
      %p4681 = scmp.le.s32.totalorder 2, %s21
      // Predicated region
      $region89: #{tpu_custom_call.1} parent=5 // pred_check
        %p4682 = pneg %p4681
      $region90: #{tpu_custom_call.1} parent=5 // pred_check_branch
        %4684 = sbr.rel (%p4682) target = $region92
      $region91: #{tpu_custom_call.1} parent=5 // pred_region
        %s4685 = ssub.s32 %s21, 2
        // Predicated region
        $region93: #{tpu_custom_call.1} parent=91 // pred_check
          %p4686 = pneg %p286
        $region94: #{tpu_custom_call.1} parent=91 // pred_check_branch
          %4688 = sbr.rel (%p4686) target = $region96
        $region95: #{tpu_custom_call.1} parent=91 // pred_region
          %s4689 = sand.u32 %s271, 1
          %s4690 = scalar_lea.sflag [#allocation12], %s4689
          %s4691 = sand.u32 %s271, 1
          %s4692 = smul.addr %s4691, 256
          %s4693 = scalar_lea.vmem [#allocation13], %s4692
          %4694 = dma.done %s4690, 4096
        $region96: #{tpu_custom_call.1} parent=91 // pred_fallthru
          _
      $region92: #{tpu_custom_call.1} parent=5 // pred_fallthru
        _
    $region6: #{tpu_custom_call.1} parent=1 // loop_footer
      %s25 = sadd.s32 1, %s21
    $region7: #{tpu_custom_call.1} parent=1 // loop_footer_branch
      %20 = sbr.rel target = $region3
    $region8: #{tpu_custom_call.1} parent=1 // loop_exit
      _
    %4695 = vsyncpa [#allocation11], 1
    %s4696 = scalar_lea.sflag [#allocation11], 1
    %4697 = vsyncpa %s4696, 1
    %4698 = vsyncpa [#allocation12], 1
    %s4699 = scalar_lea.sflag [#allocation12], 1
    %4700 = vsyncpa %s4699, 1

</llo_original>
